<compile_context>
chip_gen: v5e
topology: v5e:2x2
jax: 0.10.0
libtpu: 0.0.40
codegen_flags: <defaults>
</compile_context>

<pallas_src>
import functools

import numpy as np

import jax
import jax.numpy as jnp
from jax.experimental import pallas as pl
from jax.experimental.pallas import tpu as pltpu

_LAYER_CFG = [  # (kernel, stride, padding) as in MapEncoder.__init__
    (8, 2, 3),
    (5, 2, 1),
    (3, 1, 1),
]
_HIDDEN = (64, 128)     # Cout of layers 1 and 2 (layer 3 Cout = output_channel)
_BN_EPS = 1e-5
_LANE = 128


def _round_up(x, m):
    return (x + m - 1) // m * m


def conv_output_dim(d, pad, k, stride):
    return (d + 2 * pad - (k - 1) - 1) // stride + 1


# --------------------------- static geometry plan ----------------------------

def _make_plan(batch, map_size, input_channel, output_channel):
    """All static geometry for the fused kernel (Python ints only)."""
    (k1, s1, p1), (k2, s2, p2), (k3, s3, p3) = _LAYER_CFG
    c0, c1, c2, c3 = input_channel, _HIDDEN[0], _HIDDEN[1], output_channel
    OH1 = conv_output_dim(map_size, p1, k1, s1)
    OH2 = conv_output_dim(OH1, p2, k2, s2)
    OH3 = conv_output_dim(OH2, p3, k3, s3)
    OW1, OW2, OW3 = OH1, OH2, OH3

    # Layer 1: one dense im2col GEMM (patches built in the wrapper).
    M1 = batch * OH1 * OW1
    K1 = k1 * k1 * c0

    # Layers 2/3: zero-padded 2-D activation slabs, row(n,h,w)=n*Hp*Wp+h*Wp+w.
    Hp2, Wp2 = OH1 + 2 * p2, OW1 + 2 * p2
    Hp3, Wp3 = OH2 + 2 * p3, OW2 + 2 * p3
    span2, span3 = Hp2 * Wp2, Hp3 * Wp3
    assert Hp2 % s2 == 0 and span2 % s2 == 0, "slab-row trick needs stride | Hp"
    assert Hp3 % s3 == 0 and span3 % s3 == 0

    # Accumulator row j <-> output pixel (n,oh,ow): j = n*span/s + oh*Wp + ow.
    acc2_rows = _round_up((batch - 1) * (span2 // s2) + (OH2 - 1) * Wp2 + OW2, 8)
    out_rows = _round_up(batch * (span3 // s3), 8)   # covers full n*span3 range
    slab1_rows = _round_up((k2 - 1) * (Wp2 + 1) + s2 * (acc2_rows - 1) + 1, 8)
    slab2_rows = _round_up((k3 - 1) * (Wp3 + 1) + s3 * (out_rows - 1) + 1, 8)

    return dict(
        batch=batch, c0=c0, c1=c1, c2=c2, c3=c3,
        c1p=_round_up(c1, _LANE), c2p=_round_up(c2, _LANE),
        c3p=_round_up(c3, _LANE),
        k=(k1, k2, k3), s=(s1, s2, s3), p=(p1, p2, p3),
        OH=(OH1, OH2, OH3), OW=(OW1, OW2, OW3),
        M1=M1, K1=K1,
        Hp2=Hp2, Wp2=Wp2, Hp3=Hp3, Wp3=Wp3, span2=span2, span3=span3,
        acc2_rows=acc2_rows, out_rows=out_rows,
        slab1_rows=slab1_rows, slab2_rows=slab2_rows,
    )


def _valid_mask(rows, batch, span_s, Wp, Hp_s, OH, OW):
    """f32 (rows, 1) mask: 1.0 where accumulator row j is a real output pixel."""
    j = np.arange(rows)
    ok = (j < batch * span_s) & (j % Wp < OW) & ((j // Wp) % Hp_s < OH)
    return jnp.asarray(ok, jnp.float32).reshape(rows, 1)


# ------------------------- parameter packing (one-time) ----------------------

def prepare_params(params, plan):
    """Pack PyTorch-layout parameters into kernel layout (hoisted, one-time)."""
    (w1, _b1, g1, be1), (w2, _b2, g2, be2), (w3, _b3, g3, be3) = params
    k1, k2, k3 = plan["k"]
    c0, c1, c2, c3 = plan["c0"], plan["c1"], plan["c2"], plan["c3"]
    c1p, c2p, c3p = plan["c1p"], plan["c2p"], plan["c3p"]

    def pad_gb(g, b, cp):
        g = jnp.pad(g.astype(jnp.float32), (0, cp - g.shape[0]), constant_values=1.0)
        b = jnp.pad(b.astype(jnp.float32), (0, cp - b.shape[0]))
        return g.reshape(1, cp), b.reshape(1, cp)

    # Layer 1: (Cout,Cin,KH,KW) -> (KH*KW*Cin, Cout), Cout lane-padded to 128.
    w1m = jnp.transpose(w1, (2, 3, 1, 0)).reshape(k1 * k1 * c0, c1)
    w1m = jnp.pad(w1m, ((0, 0), (0, c1p - c1))).astype(jnp.bfloat16)
    g1r, b1r = pad_gb(g1, be1, c1p)

    # Layer 2: per-tap (tap, Cin_pad, Cout); padded Cin rows are zero.
    w2t = jnp.transpose(w2, (2, 3, 1, 0)).reshape(k2 * k2, c1, c2)
    w2t = jnp.pad(w2t, ((0, 0), (0, c1p - c1), (0, c2p - c2))).astype(jnp.bfloat16)
    g2r, b2r = pad_gb(g2, be2, c2p)

    # Layer 3: per-tap (tap, Cin, Cout_pad); padded Cout columns are zero.
    w3t = jnp.transpose(w3, (2, 3, 1, 0)).reshape(k3 * k3, c2, c3)
    w3t = jnp.pad(w3t, ((0, 0), (0, c2p - c2), (0, c3p - c3))).astype(jnp.bfloat16)
    g3r, b3r = pad_gb(g3, be3, c3p)

    s2, s3 = plan["s"][1], plan["s"][2]
    mask2 = _valid_mask(plan["acc2_rows"], plan["batch"], plan["span2"] // s2,
                        plan["Wp2"], plan["Hp2"] // s2, plan["OH"][1], plan["OW"][1])
    mask3 = _valid_mask(plan["out_rows"], plan["batch"], plan["span3"] // s3,
                        plan["Wp3"], plan["Hp3"] // s3, plan["OH"][2], plan["OW"][2])
    return dict(w1=w1m, g1=g1r, b1=b1r, w2=w2t, g2=g2r, b2=b2r,
                w3=w3t, g3=g3r, b3=b3r, mask2=mask2, mask3=mask3)


# ------------------------------- Pallas kernel --------------------------------

def _row_slice(ref, off, rows, stride):
    """(rows, C) slice of consecutive / strided slab rows (static offsets)."""
    if stride == 1:
        return ref[off:off + rows, :]
    return ref[pl.ds(off, rows, stride), :]


def _make_kernel(plan):
    batch = plan["batch"]
    k1, k2, k3 = plan["k"]
    s1, s2, s3 = plan["s"]
    p1_, p2_, p3_ = plan["p"]
    OH1, OH2, OH3 = plan["OH"]
    OW1, OW2, OW3 = plan["OW"]
    Wp2, Wp3 = plan["Wp2"], plan["Wp3"]
    span2, span3 = plan["span2"], plan["span3"]
    acc2_rows, out_rows = plan["acc2_rows"], plan["out_rows"]
    c1p, c2p = plan["c1p"], plan["c2p"]
    inv_m1 = 1.0 / float(plan["M1"])
    inv_m2 = 1.0 / float(batch * OH2 * OW2)
    inv_m3 = 1.0 / float(batch * OH3 * OW3)

    def bn_relu(x, gamma, beta, inv_m, mask=None):
        """Train-mode BatchNorm2d (+ReLU) over rows of x. All math in f32.

        `mask` marks which rows are real output pixels; `inv_m` is 1/true_count.
        Two-pass (mean-shifted) variance to avoid catastrophic cancellation.
        """
        xm = x if mask is None else x * mask
        mean = jnp.sum(xm, axis=0, keepdims=True) * inv_m
        d = x - mean
        dm = d if mask is None else d * mask
        var = jnp.sum(dm * dm, axis=0, keepdims=True) * inv_m
        scale = jax.lax.rsqrt(var + _BN_EPS) * gamma
        shift = beta - mean * scale
        return jnp.maximum(x * scale + shift, 0.0)

    def kernel(p1_ref, w1_ref, g1_ref, b1_ref,
               w2_ref, g2_ref, b2_ref,
               w3_ref, g3_ref, b3_ref,
               mask2_ref, mask3_ref,
               o_ref, a1p_ref, a2p_ref):
        # ---------------- layer 1: dense im2col GEMM + BN + ReLU -------------
        x1 = jnp.dot(p1_ref[...], w1_ref[...], preferred_element_type=jnp.float32)
        a1 = bn_relu(x1, g1_ref[...], b1_ref[...], inv_m1)          # (M1, c1p) f32

        # Scatter into the zero-padded layer-2 slab: row = n*Hp2*Wp2 + h'*Wp2 + w'.
        a1p_ref[...] = jnp.zeros(a1p_ref.shape, a1p_ref.dtype)
        for n in range(batch):
            for oh in range(OH1):
                dst = n * span2 + (oh + p2_) * Wp2 + p2_
                src = (n * OH1 + oh) * OW1
                a1p_ref[dst:dst + OW1, :] = a1[src:src + OW1, :]

        # ---------------- layer 2: in-kernel im2col via per-tap GEMMs --------
        # acc[j] accumulates the conv2 pre-BN output for pixel
        #   j = n*(span2/s2) + oh*Wp2 + ow   (other rows are ignored garbage).
        acc = jnp.zeros((acc2_rows, c2p), jnp.float32)
        for kh in range(k2):
            for kw in range(k2):
                off = kh * Wp2 + kw
                lhs = _row_slice(a1p_ref, off, acc2_rows, s2).astype(jnp.bfloat16)
                acc = acc + jnp.dot(lhs, w2_ref[kh * k2 + kw],
                                    preferred_element_type=jnp.float32)
        a2 = bn_relu(acc, g2_ref[...], b2_ref[...], inv_m2, mask=mask2_ref[...])

        # Scatter the valid layer-2 rows into the zero-padded layer-3 slab.
        a2p_ref[...] = jnp.zeros(a2p_ref.shape, a2p_ref.dtype)
        for n in range(batch):
            for oh in range(OH2):
                dst = n * span3 + (oh + p3_) * Wp3 + p3_
                src = n * (span2 // s2) + oh * Wp2
                a2p_ref[dst:dst + OW2, :] = a2[src:src + OW2, :]

        # ---------------- layer 3: in-kernel im2col via per-tap GEMMs --------
        acc3 = jnp.zeros((out_rows, plan["c3p"]), jnp.float32)
        for kh in range(k3):
            for kw in range(k3):
                off = kh * Wp3 + kw
                lhs = _row_slice(a2p_ref, off, out_rows, s3).astype(jnp.bfloat16)
                acc3 = acc3 + jnp.dot(lhs, w3_ref[kh * k3 + kw],
                                      preferred_element_type=jnp.float32)
        # Lane-dense (out_rows, 128) f32 store; wrapper slices/reshapes/transposes.
        o_ref[...] = bn_relu(acc3, g3_ref[...], b3_ref[...], inv_m3,
                             mask=mask3_ref[...]).astype(o_ref.dtype)

    return kernel


def _fused_call(plan, packed, patches1):
    c1p, c2p, c3p = plan["c1p"], plan["c2p"], plan["c3p"]
    kernel = _make_kernel(plan)

    def full(a):
        return pl.BlockSpec(a.shape, lambda: (0,) * a.ndim)

    args = (patches1, packed["w1"], packed["g1"], packed["b1"],
            packed["w2"], packed["g2"], packed["b2"],
            packed["w3"], packed["g3"], packed["b3"],
            packed["mask2"], packed["mask3"])

    k2, k3 = plan["k"][1], plan["k"][2]
    flops = (2 * plan["M1"] * plan["K1"] * c1p
             + 2 * k2 * k2 * plan["acc2_rows"] * c1p * c2p
             + 2 * k3 * k3 * plan["out_rows"] * c2p * c3p)
    bytes_accessed = sum(int(np.prod(a.shape)) * a.dtype.itemsize for a in args)
    bytes_accessed += plan["out_rows"] * c3p * 4

    return pl.pallas_call(
        kernel,
        out_shape=jax.ShapeDtypeStruct((plan["out_rows"], c3p), jnp.float32),
        in_specs=[full(a) for a in args],
        out_specs=pl.BlockSpec((plan["out_rows"], c3p), lambda: (0, 0)),
        scratch_shapes=[
            pltpu.VMEM((plan["slab1_rows"], c1p), jnp.float32),  # padded act. 1
            pltpu.VMEM((plan["slab2_rows"], c2p), jnp.float32),  # padded act. 2
        ],
        compiler_params=pltpu.CompilerParams(vmem_limit_bytes=32 * 1024 * 1024),
        cost_estimate=pl.CostEstimate(flops=int(flops),
                                      transcendentals=3 * _LANE,
                                      bytes_accessed=int(bytes_accessed)),
    )(*args)


# --------------------------------- JAX glue -----------------------------------

def _im2col(x_nhwc, k, stride, pad):
    """k x k patches, rows ordered (n, oh, ow), K ordered (kh, kw, C)."""
    N, H, W, C = x_nhwc.shape
    xp = jnp.pad(x_nhwc, ((0, 0), (pad, pad), (pad, pad), (0, 0)))
    OH = (H + 2 * pad - k) // stride + 1
    OW = (W + 2 * pad - k) // stride + 1
    cols = []
    for i in range(k):
        for j in range(k):
            cols.append(xp[:, i:i + stride * OH:stride, j:j + stride * OW:stride, :])
    p = jnp.stack(cols, axis=3)                 # (N, OH, OW, k*k, C)
    return p.reshape(N * OH * OW, k * k * C)


def map_encoder_forward(x_nchw, plan, packed):
    """Forward pass of MapEncoder.  Input/output NCHW (PyTorch convention)."""
    k1, s1, p1_ = _LAYER_CFG[0]
    x = jnp.transpose(x_nchw, (0, 2, 3, 1)).astype(jnp.bfloat16)    # NCHW -> NHWC
    patches1 = _im2col(x, k1, s1, p1_)                              # (M1, K1) bf16
    out2d = _fused_call(plan, packed, patches1)                     # (rows, c3p) f32

    batch, c3, c3p = plan["batch"], plan["c3"], plan["c3p"]
    s3 = plan["s"][2]
    Hp3s, Wp3 = plan["Hp3"] // s3, plan["Wp3"]
    OH3, OW3 = plan["OH"][2], plan["OW"][2]
    y = out2d[:batch * Hp3s * Wp3].reshape(batch, Hp3s, Wp3, c3p)
    y = y[:, :OH3, :OW3, :c3]                       # drop pad rows / pad lanes
    return jnp.transpose(y, (0, 3, 1, 2))           # NHWC -> NCHW


def init_params(key, input_channel, output_channel):
    """Deterministic synthetic parameters matching the module's shapes."""
    specs = [
        (64, input_channel, 8),
        (128, 64, 5),
        (output_channel, 128, 3),
    ]
    params = []
    for (co, ci, k) in specs:
        key, k1, k2, k3, k4 = jax.random.split(key, 5)
        w = 0.05 * jax.random.normal(k1, (co, ci, k, k), jnp.float32)
        b = 0.01 * jax.random.normal(k2, (co,), jnp.float32)  # cancelled by BN
        gamma = 1.0 + 0.1 * jax.random.normal(k3, (co,), jnp.float32)
        beta = 0.1 * jax.random.normal(k4, (co,), jnp.float32)
        params.append((w, b, gamma, beta))
    return params


if __name__ == "__main__":
    map_size, input_channel, output_channel = 16, 4, 32
    batch = 2

    key = jax.random.PRNGKey(0)
    pkey, xkey = jax.random.split(key)
    params = init_params(pkey, input_channel, output_channel)
    plan = _make_plan(batch, map_size, input_channel, output_channel)
    packed = prepare_params(params, plan)           # one-time packing (hoisted)
    x = jax.random.normal(
        xkey, (batch, input_channel, map_size, map_size), jnp.float32
    )

    # Expected spatial output (matches MapEncoder._conv_output_dim chain).
    d = map_size
    for (k, s, p) in _LAYER_CFG:
        d = conv_output_dim(d, p, k, s)

    fwd = jax.jit(functools.partial(map_encoder_forward, plan=plan, packed=packed))
    out = fwd(x)
    jax.block_until_ready(out)

    assert out.shape == (batch, output_channel, d, d), out.shape
    assert bool(jnp.all(out >= 0.0))  # ReLU output
    print("KERNEL_OK")
</pallas_src>

<mosaic_0001>
module attributes {stable_mosaic.version = 11 : i64} {
  func.func @kernel(%arg0: memref<128x256xbf16, #tpu.memory_space<vmem>>, %arg1: memref<256x128xbf16, #tpu.memory_space<vmem>>, %arg2: memref<1x128xf32, #tpu.memory_space<vmem>>, %arg3: memref<1x128xf32, #tpu.memory_space<vmem>>, %arg4: memref<25x128x128xbf16, #tpu.memory_space<vmem>>, %arg5: memref<1x128xf32, #tpu.memory_space<vmem>>, %arg6: memref<1x128xf32, #tpu.memory_space<vmem>>, %arg7: memref<9x128x128xbf16, #tpu.memory_space<vmem>>, %arg8: memref<1x128xf32, #tpu.memory_space<vmem>>, %arg9: memref<1x128xf32, #tpu.memory_space<vmem>>, %arg10: memref<80x1xf32, #tpu.memory_space<vmem>>, %arg11: memref<56x1xf32, #tpu.memory_space<vmem>>, %arg12: memref<56x128xf32, #tpu.memory_space<vmem>>, %arg13: memref<208x128xf32, #tpu.memory_space<vmem>>, %arg14: memref<72x128xf32, #tpu.memory_space<vmem>>) attributes {dimension_semantics = [], scalar_prefetch = 0 : i64, scratch_operands = 2 : i64, tpu.core_type = #tpu.core_type<tc>} {
    %c0 = arith.constant 0 : index
    %c0_0 = arith.constant 0 : index
    %0 = vector.load %arg0[%c0, %c0_0] : memref<128x256xbf16, #tpu.memory_space<vmem>>, vector<128x256xbf16>
    %c0_1 = arith.constant 0 : index
    %c0_2 = arith.constant 0 : index
    %1 = vector.load %arg1[%c0_1, %c0_2] : memref<256x128xbf16, #tpu.memory_space<vmem>>, vector<256x128xbf16>
    %cst = arith.constant dense<0.000000e+00> : vector<128x128xf32>
    %2 = tpu.matmul %0, %1, %cst {dimension_numbers = #tpu.dot_dimension_numbers<[1], [0], [0], [1], [0, 0, 1, 1], [], []>} : vector<128x256xbf16>, vector<256x128xbf16>, vector<128x128xf32> -> vector<128x128xf32>
    %c0_3 = arith.constant 0 : index
    %c0_4 = arith.constant 0 : index
    %3 = vector.load %arg2[%c0_3, %c0_4] : memref<1x128xf32, #tpu.memory_space<vmem>>, vector<1x128xf32>
    %c0_5 = arith.constant 0 : index
    %c0_6 = arith.constant 0 : index
    %4 = vector.load %arg3[%c0_5, %c0_6] : memref<1x128xf32, #tpu.memory_space<vmem>>, vector<1x128xf32>
    %cst_7 = arith.constant dense<0.000000e+00> : vector<128xf32>
    %5 = vector.multi_reduction <add>, %2, %cst_7 [0] : vector<128x128xf32> to vector<128xf32>
    %6 = vector.shape_cast %5 : vector<128xf32> to vector<1x128xf32>
    %cst_8 = arith.constant 7.812500e-03 : f32
    %7 = vector.broadcast %cst_8 : f32 to vector<1x128xf32>
    %8 = arith.mulf %6, %7 : vector<1x128xf32>
    %9 = vector.broadcast %8 : vector<1x128xf32> to vector<128x128xf32>
    %10 = arith.subf %2, %9 : vector<128x128xf32>
    %11 = arith.mulf %10, %10 : vector<128x128xf32>
    %cst_9 = arith.constant dense<0.000000e+00> : vector<128xf32>
    %12 = vector.multi_reduction <add>, %11, %cst_9 [0] : vector<128x128xf32> to vector<128xf32>
    %13 = vector.shape_cast %12 : vector<128xf32> to vector<1x128xf32>
    %cst_10 = arith.constant 7.812500e-03 : f32
    %14 = vector.broadcast %cst_10 : f32 to vector<1x128xf32>
    %15 = arith.mulf %13, %14 : vector<1x128xf32>
    %cst_11 = arith.constant 9.99999974E-6 : f32
    %16 = vector.broadcast %cst_11 : f32 to vector<1x128xf32>
    %17 = arith.addf %15, %16 : vector<1x128xf32>
    %18 = math.rsqrt %17 : vector<1x128xf32>
    %19 = arith.mulf %18, %3 : vector<1x128xf32>
    %20 = arith.mulf %8, %19 : vector<1x128xf32>
    %21 = arith.subf %4, %20 : vector<1x128xf32>
    %22 = vector.broadcast %19 : vector<1x128xf32> to vector<128x128xf32>
    %23 = arith.mulf %2, %22 : vector<128x128xf32>
    %24 = vector.broadcast %21 : vector<1x128xf32> to vector<128x128xf32>
    %25 = arith.addf %23, %24 : vector<128x128xf32>
    %cst_12 = arith.constant 0.000000e+00 : f32
    %26 = vector.broadcast %cst_12 : f32 to vector<128x128xf32>
    %27 = arith.maximumf %25, %26 : vector<128x128xf32>
    %cst_13 = arith.constant 0.000000e+00 : f32
    %28 = vector.broadcast %cst_13 : f32 to vector<208x128xf32>
    %c0_14 = arith.constant 0 : index
    %c0_15 = arith.constant 0 : index
    %29 = vector.load %arg13[%c0_14, %c0_15] : memref<208x128xf32, #tpu.memory_space<vmem>>, vector<208x128xf32>
    tpu.vector_store %arg13[%c0_14, %c0_15], %28 {strides = array<i32>} : memref<208x128xf32, #tpu.memory_space<vmem>>, vector<208x128xf32>,
    %30 = vector.extract_strided_slice %27 {offsets = [0, 0], sizes = [8, 128], strides = [1, 1]} : vector<128x128xf32> to vector<8x128xf32>
    %c11 = arith.constant 11 : index
    %c0_16 = arith.constant 0 : index
    %31 = vector.load %arg13[%c11, %c0_16] : memref<208x128xf32, #tpu.memory_space<vmem>>, vector<8x128xf32>
    tpu.vector_store %arg13[%c11, %c0_16], %30 {strides = array<i32>} : memref<208x128xf32, #tpu.memory_space<vmem>>, vector<8x128xf32>,
    %32 = vector.extract_strided_slice %27 {offsets = [8, 0], sizes = [8, 128], strides = [1, 1]} : vector<128x128xf32> to vector<8x128xf32>
    %c21 = arith.constant 21 : index
    %c0_17 = arith.constant 0 : index
    %33 = vector.load %arg13[%c21, %c0_17] : memref<208x128xf32, #tpu.memory_space<vmem>>, vector<8x128xf32>
    tpu.vector_store %arg13[%c21, %c0_17], %32 {strides = array<i32>} : memref<208x128xf32, #tpu.memory_space<vmem>>, vector<8x128xf32>,
    %34 = vector.extract_strided_slice %27 {offsets = [16, 0], sizes = [8, 128], strides = [1, 1]} : vector<128x128xf32> to vector<8x128xf32>
    %c31 = arith.constant 31 : index
    %c0_18 = arith.constant 0 : index
    %35 = vector.load %arg13[%c31, %c0_18] : memref<208x128xf32, #tpu.memory_space<vmem>>, vector<8x128xf32>
    tpu.vector_store %arg13[%c31, %c0_18], %34 {strides = array<i32>} : memref<208x128xf32, #tpu.memory_space<vmem>>, vector<8x128xf32>,
    %36 = vector.extract_strided_slice %27 {offsets = [24, 0], sizes = [8, 128], strides = [1, 1]} : vector<128x128xf32> to vector<8x128xf32>
    %c41 = arith.constant 41 : index
    %c0_19 = arith.constant 0 : index
    %37 = vector.load %arg13[%c41, %c0_19] : memref<208x128xf32, #tpu.memory_space<vmem>>, vector<8x128xf32>
    tpu.vector_store %arg13[%c41, %c0_19], %36 {strides = array<i32>} : memref<208x128xf32, #tpu.memory_space<vmem>>, vector<8x128xf32>,
    %38 = vector.extract_strided_slice %27 {offsets = [32, 0], sizes = [8, 128], strides = [1, 1]} : vector<128x128xf32> to vector<8x128xf32>
    %c51 = arith.constant 51 : index
    %c0_20 = arith.constant 0 : index
    %39 = vector.load %arg13[%c51, %c0_20] : memref<208x128xf32, #tpu.memory_space<vmem>>, vector<8x128xf32>
    tpu.vector_store %arg13[%c51, %c0_20], %38 {strides = array<i32>} : memref<208x128xf32, #tpu.memory_space<vmem>>, vector<8x128xf32>,
    %40 = vector.extract_strided_slice %27 {offsets = [40, 0], sizes = [8, 128], strides = [1, 1]} : vector<128x128xf32> to vector<8x128xf32>
    %c61 = arith.constant 61 : index
    %c0_21 = arith.constant 0 : index
    %41 = vector.load %arg13[%c61, %c0_21] : memref<208x128xf32, #tpu.memory_space<vmem>>, vector<8x128xf32>
    tpu.vector_store %arg13[%c61, %c0_21], %40 {strides = array<i32>} : memref<208x128xf32, #tpu.memory_space<vmem>>, vector<8x128xf32>,
    %42 = vector.extract_strided_slice %27 {offsets = [48, 0], sizes = [8, 128], strides = [1, 1]} : vector<128x128xf32> to vector<8x128xf32>
    %c71 = arith.constant 71 : index
    %c0_22 = arith.constant 0 : index
    %43 = vector.load %arg13[%c71, %c0_22] : memref<208x128xf32, #tpu.memory_space<vmem>>, vector<8x128xf32>
    tpu.vector_store %arg13[%c71, %c0_22], %42 {strides = array<i32>} : memref<208x128xf32, #tpu.memory_space<vmem>>, vector<8x128xf32>,
    %44 = vector.extract_strided_slice %27 {offsets = [56, 0], sizes = [8, 128], strides = [1, 1]} : vector<128x128xf32> to vector<8x128xf32>
    %c81 = arith.constant 81 : index
    %c0_23 = arith.constant 0 : index
    %45 = vector.load %arg13[%c81, %c0_23] : memref<208x128xf32, #tpu.memory_space<vmem>>, vector<8x128xf32>
    tpu.vector_store %arg13[%c81, %c0_23], %44 {strides = array<i32>} : memref<208x128xf32, #tpu.memory_space<vmem>>, vector<8x128xf32>,
    %46 = vector.extract_strided_slice %27 {offsets = [64, 0], sizes = [8, 128], strides = [1, 1]} : vector<128x128xf32> to vector<8x128xf32>
    %c111 = arith.constant 111 : index
    %c0_24 = arith.constant 0 : index
    %47 = vector.load %arg13[%c111, %c0_24] : memref<208x128xf32, #tpu.memory_space<vmem>>, vector<8x128xf32>
    tpu.vector_store %arg13[%c111, %c0_24], %46 {strides = array<i32>} : memref<208x128xf32, #tpu.memory_space<vmem>>, vector<8x128xf32>,
    %48 = vector.extract_strided_slice %27 {offsets = [72, 0], sizes = [8, 128], strides = [1, 1]} : vector<128x128xf32> to vector<8x128xf32>
    %c121 = arith.constant 121 : index
    %c0_25 = arith.constant 0 : index
    %49 = vector.load %arg13[%c121, %c0_25] : memref<208x128xf32, #tpu.memory_space<vmem>>, vector<8x128xf32>
    tpu.vector_store %arg13[%c121, %c0_25], %48 {strides = array<i32>} : memref<208x128xf32, #tpu.memory_space<vmem>>, vector<8x128xf32>,
    %50 = vector.extract_strided_slice %27 {offsets = [80, 0], sizes = [8, 128], strides = [1, 1]} : vector<128x128xf32> to vector<8x128xf32>
    %c131 = arith.constant 131 : index
    %c0_26 = arith.constant 0 : index
    %51 = vector.load %arg13[%c131, %c0_26] : memref<208x128xf32, #tpu.memory_space<vmem>>, vector<8x128xf32>
    tpu.vector_store %arg13[%c131, %c0_26], %50 {strides = array<i32>} : memref<208x128xf32, #tpu.memory_space<vmem>>, vector<8x128xf32>,
    %52 = vector.extract_strided_slice %27 {offsets = [88, 0], sizes = [8, 128], strides = [1, 1]} : vector<128x128xf32> to vector<8x128xf32>
    %c141 = arith.constant 141 : index
    %c0_27 = arith.constant 0 : index
    %53 = vector.load %arg13[%c141, %c0_27] : memref<208x128xf32, #tpu.memory_space<vmem>>, vector<8x128xf32>
    tpu.vector_store %arg13[%c141, %c0_27], %52 {strides = array<i32>} : memref<208x128xf32, #tpu.memory_space<vmem>>, vector<8x128xf32>,
    %54 = vector.extract_strided_slice %27 {offsets = [96, 0], sizes = [8, 128], strides = [1, 1]} : vector<128x128xf32> to vector<8x128xf32>
    %c151 = arith.constant 151 : index
    %c0_28 = arith.constant 0 : index
    %55 = vector.load %arg13[%c151, %c0_28] : memref<208x128xf32, #tpu.memory_space<vmem>>, vector<8x128xf32>
    tpu.vector_store %arg13[%c151, %c0_28], %54 {strides = array<i32>} : memref<208x128xf32, #tpu.memory_space<vmem>>, vector<8x128xf32>,
    %56 = vector.extract_strided_slice %27 {offsets = [104, 0], sizes = [8, 128], strides = [1, 1]} : vector<128x128xf32> to vector<8x128xf32>
    %c161 = arith.constant 161 : index
    %c0_29 = arith.constant 0 : index
    %57 = vector.load %arg13[%c161, %c0_29] : memref<208x128xf32, #tpu.memory_space<vmem>>, vector<8x128xf32>
    tpu.vector_store %arg13[%c161, %c0_29], %56 {strides = array<i32>} : memref<208x128xf32, #tpu.memory_space<vmem>>, vector<8x128xf32>,
    %58 = vector.extract_strided_slice %27 {offsets = [112, 0], sizes = [8, 128], strides = [1, 1]} : vector<128x128xf32> to vector<8x128xf32>
    %c171 = arith.constant 171 : index
    %c0_30 = arith.constant 0 : index
    %59 = vector.load %arg13[%c171, %c0_30] : memref<208x128xf32, #tpu.memory_space<vmem>>, vector<8x128xf32>
    tpu.vector_store %arg13[%c171, %c0_30], %58 {strides = array<i32>} : memref<208x128xf32, #tpu.memory_space<vmem>>, vector<8x128xf32>,
    %60 = vector.extract_strided_slice %27 {offsets = [120, 0], sizes = [8, 128], strides = [1, 1]} : vector<128x128xf32> to vector<8x128xf32>
    %c181 = arith.constant 181 : index
    %c0_31 = arith.constant 0 : index
    %61 = vector.load %arg13[%c181, %c0_31] : memref<208x128xf32, #tpu.memory_space<vmem>>, vector<8x128xf32>
    tpu.vector_store %arg13[%c181, %c0_31], %60 {strides = array<i32>} : memref<208x128xf32, #tpu.memory_space<vmem>>, vector<8x128xf32>,
    %cst_32 = arith.constant 0.000000e+00 : f32
    %62 = vector.broadcast %cst_32 : f32 to vector<80x128xf32>
    %c0_33 = arith.constant 0 : index
    %c0_34 = arith.constant 0 : index
    %63 = tpu.strided_load %arg13[%c0_33, %c0_34] {strides = array<i32: 2, 1>} : memref<208x128xf32, #tpu.memory_space<vmem>>, vector<80x128xf32>
    %64 = arith.truncf %63 : vector<80x128xf32> to vector<80x128xbf16>
    %c0_35 = arith.constant 0 : index
    %c0_36 = arith.constant 0 : index
    %c0_37 = arith.constant 0 : index
    %65 = vector.load %arg4[%c0_35, %c0_36, %c0_37] : memref<25x128x128xbf16, #tpu.memory_space<vmem>>, vector<1x128x128xbf16>
    %66 = vector.shape_cast %65 : vector<1x128x128xbf16> to vector<128x128xbf16>
    %cst_38 = arith.constant dense<0.000000e+00> : vector<80x128xf32>
    %67 = tpu.matmul %64, %66, %cst_38 {dimension_numbers = #tpu.dot_dimension_numbers<[1], [0], [0], [1], [0, 0, 1, 1], [], []>} : vector<80x128xbf16>, vector<128x128xbf16>, vector<80x128xf32> -> vector<80x128xf32>
    %68 = arith.addf %62, %67 : vector<80x128xf32>
    %c1 = arith.constant 1 : index
    %c0_39 = arith.constant 0 : index
    %69 = tpu.strided_load %arg13[%c1, %c0_39] {strides = array<i32: 2, 1>} : memref<208x128xf32, #tpu.memory_space<vmem>>, vector<80x128xf32>
    %70 = arith.truncf %69 : vector<80x128xf32> to vector<80x128xbf16>
    %c1_40 = arith.constant 1 : index
    %c0_41 = arith.constant 0 : index
    %c0_42 = arith.constant 0 : index
    %71 = vector.load %arg4[%c1_40, %c0_41, %c0_42] : memref<25x128x128xbf16, #tpu.memory_space<vmem>>, vector<1x128x128xbf16>
    %72 = vector.shape_cast %71 : vector<1x128x128xbf16> to vector<128x128xbf16>
    %cst_43 = arith.constant dense<0.000000e+00> : vector<80x128xf32>
    %73 = tpu.matmul %70, %72, %cst_43 {dimension_numbers = #tpu.dot_dimension_numbers<[1], [0], [0], [1], [0, 0, 1, 1], [], []>} : vector<80x128xbf16>, vector<128x128xbf16>, vector<80x128xf32> -> vector<80x128xf32>
    %74 = arith.addf %68, %73 : vector<80x128xf32>
    %c2 = arith.constant 2 : index
    %c0_44 = arith.constant 0 : index
    %75 = tpu.strided_load %arg13[%c2, %c0_44] {strides = array<i32: 2, 1>} : memref<208x128xf32, #tpu.memory_space<vmem>>, vector<80x128xf32>
    %76 = arith.truncf %75 : vector<80x128xf32> to vector<80x128xbf16>
    %c2_45 = arith.constant 2 : index
    %c0_46 = arith.constant 0 : index
    %c0_47 = arith.constant 0 : index
    %77 = vector.load %arg4[%c2_45, %c0_46, %c0_47] : memref<25x128x128xbf16, #tpu.memory_space<vmem>>, vector<1x128x128xbf16>
    %78 = vector.shape_cast %77 : vector<1x128x128xbf16> to vector<128x128xbf16>
    %cst_48 = arith.constant dense<0.000000e+00> : vector<80x128xf32>
    %79 = tpu.matmul %76, %78, %cst_48 {dimension_numbers = #tpu.dot_dimension_numbers<[1], [0], [0], [1], [0, 0, 1, 1], [], []>} : vector<80x128xbf16>, vector<128x128xbf16>, vector<80x128xf32> -> vector<80x128xf32>
    %80 = arith.addf %74, %79 : vector<80x128xf32>
    %c3 = arith.constant 3 : index
    %c0_49 = arith.constant 0 : index
    %81 = tpu.strided_load %arg13[%c3, %c0_49] {strides = array<i32: 2, 1>} : memref<208x128xf32, #tpu.memory_space<vmem>>, vector<80x128xf32>
    %82 = arith.truncf %81 : vector<80x128xf32> to vector<80x128xbf16>
    %c3_50 = arith.constant 3 : index
    %c0_51 = arith.constant 0 : index
    %c0_52 = arith.constant 0 : index
    %83 = vector.load %arg4[%c3_50, %c0_51, %c0_52] : memref<25x128x128xbf16, #tpu.memory_space<vmem>>, vector<1x128x128xbf16>
    %84 = vector.shape_cast %83 : vector<1x128x128xbf16> to vector<128x128xbf16>
    %cst_53 = arith.constant dense<0.000000e+00> : vector<80x128xf32>
    %85 = tpu.matmul %82, %84, %cst_53 {dimension_numbers = #tpu.dot_dimension_numbers<[1], [0], [0], [1], [0, 0, 1, 1], [], []>} : vector<80x128xbf16>, vector<128x128xbf16>, vector<80x128xf32> -> vector<80x128xf32>
    %86 = arith.addf %80, %85 : vector<80x128xf32>
    %c4 = arith.constant 4 : index
    %c0_54 = arith.constant 0 : index
    %87 = tpu.strided_load %arg13[%c4, %c0_54] {strides = array<i32: 2, 1>} : memref<208x128xf32, #tpu.memory_space<vmem>>, vector<80x128xf32>
    %88 = arith.truncf %87 : vector<80x128xf32> to vector<80x128xbf16>
    %c4_55 = arith.constant 4 : index
    %c0_56 = arith.constant 0 : index
    %c0_57 = arith.constant 0 : index
    %89 = vector.load %arg4[%c4_55, %c0_56, %c0_57] : memref<25x128x128xbf16, #tpu.memory_space<vmem>>, vector<1x128x128xbf16>
    %90 = vector.shape_cast %89 : vector<1x128x128xbf16> to vector<128x128xbf16>
    %cst_58 = arith.constant dense<0.000000e+00> : vector<80x128xf32>
    %91 = tpu.matmul %88, %90, %cst_58 {dimension_numbers = #tpu.dot_dimension_numbers<[1], [0], [0], [1], [0, 0, 1, 1], [], []>} : vector<80x128xbf16>, vector<128x128xbf16>, vector<80x128xf32> -> vector<80x128xf32>
    %92 = arith.addf %86, %91 : vector<80x128xf32>
    %c10 = arith.constant 10 : index
    %c0_59 = arith.constant 0 : index
    %93 = tpu.strided_load %arg13[%c10, %c0_59] {strides = array<i32: 2, 1>} : memref<208x128xf32, #tpu.memory_space<vmem>>, vector<80x128xf32>
    %94 = arith.truncf %93 : vector<80x128xf32> to vector<80x128xbf16>
    %c5 = arith.constant 5 : index
    %c0_60 = arith.constant 0 : index
    %c0_61 = arith.constant 0 : index
    %95 = vector.load %arg4[%c5, %c0_60, %c0_61] : memref<25x128x128xbf16, #tpu.memory_space<vmem>>, vector<1x128x128xbf16>
    %96 = vector.shape_cast %95 : vector<1x128x128xbf16> to vector<128x128xbf16>
    %cst_62 = arith.constant dense<0.000000e+00> : vector<80x128xf32>
    %97 = tpu.matmul %94, %96, %cst_62 {dimension_numbers = #tpu.dot_dimension_numbers<[1], [0], [0], [1], [0, 0, 1, 1], [], []>} : vector<80x128xbf16>, vector<128x128xbf16>, vector<80x128xf32> -> vector<80x128xf32>
    %98 = arith.addf %92, %97 : vector<80x128xf32>
    %c11_63 = arith.constant 11 : index
    %c0_64 = arith.constant 0 : index
    %99 = tpu.strided_load %arg13[%c11_63, %c0_64] {strides = array<i32: 2, 1>} : memref<208x128xf32, #tpu.memory_space<vmem>>, vector<80x128xf32>
    %100 = arith.truncf %99 : vector<80x128xf32> to vector<80x128xbf16>
    %c6 = arith.constant 6 : index
    %c0_65 = arith.constant 0 : index
    %c0_66 = arith.constant 0 : index
    %101 = vector.load %arg4[%c6, %c0_65, %c0_66] : memref<25x128x128xbf16, #tpu.memory_space<vmem>>, vector<1x128x128xbf16>
    %102 = vector.shape_cast %101 : vector<1x128x128xbf16> to vector<128x128xbf16>
    %cst_67 = arith.constant dense<0.000000e+00> : vector<80x128xf32>
    %103 = tpu.matmul %100, %102, %cst_67 {dimension_numbers = #tpu.dot_dimension_numbers<[1], [0], [0], [1], [0, 0, 1, 1], [], []>} : vector<80x128xbf16>, vector<128x128xbf16>, vector<80x128xf32> -> vector<80x128xf32>
    %104 = arith.addf %98, %103 : vector<80x128xf32>
    %c12 = arith.constant 12 : index
    %c0_68 = arith.constant 0 : index
    %105 = tpu.strided_load %arg13[%c12, %c0_68] {strides = array<i32: 2, 1>} : memref<208x128xf32, #tpu.memory_space<vmem>>, vector<80x128xf32>
    %106 = arith.truncf %105 : vector<80x128xf32> to vector<80x128xbf16>
    %c7 = arith.constant 7 : index
    %c0_69 = arith.constant 0 : index
    %c0_70 = arith.constant 0 : index
    %107 = vector.load %arg4[%c7, %c0_69, %c0_70] : memref<25x128x128xbf16, #tpu.memory_space<vmem>>, vector<1x128x128xbf16>
    %108 = vector.shape_cast %107 : vector<1x128x128xbf16> to vector<128x128xbf16>
    %cst_71 = arith.constant dense<0.000000e+00> : vector<80x128xf32>
    %109 = tpu.matmul %106, %108, %cst_71 {dimension_numbers = #tpu.dot_dimension_numbers<[1], [0], [0], [1], [0, 0, 1, 1], [], []>} : vector<80x128xbf16>, vector<128x128xbf16>, vector<80x128xf32> -> vector<80x128xf32>
    %110 = arith.addf %104, %109 : vector<80x128xf32>
    %c13 = arith.constant 13 : index
    %c0_72 = arith.constant 0 : index
    %111 = tpu.strided_load %arg13[%c13, %c0_72] {strides = array<i32: 2, 1>} : memref<208x128xf32, #tpu.memory_space<vmem>>, vector<80x128xf32>
    %112 = arith.truncf %111 : vector<80x128xf32> to vector<80x128xbf16>
    %c8 = arith.constant 8 : index
    %c0_73 = arith.constant 0 : index
    %c0_74 = arith.constant 0 : index
    %113 = vector.load %arg4[%c8, %c0_73, %c0_74] : memref<25x128x128xbf16, #tpu.memory_space<vmem>>, vector<1x128x128xbf16>
    %114 = vector.shape_cast %113 : vector<1x128x128xbf16> to vector<128x128xbf16>
    %cst_75 = arith.constant dense<0.000000e+00> : vector<80x128xf32>
    %115 = tpu.matmul %112, %114, %cst_75 {dimension_numbers = #tpu.dot_dimension_numbers<[1], [0], [0], [1], [0, 0, 1, 1], [], []>} : vector<80x128xbf16>, vector<128x128xbf16>, vector<80x128xf32> -> vector<80x128xf32>
    %116 = arith.addf %110, %115 : vector<80x128xf32>
    %c14 = arith.constant 14 : index
    %c0_76 = arith.constant 0 : index
    %117 = tpu.strided_load %arg13[%c14, %c0_76] {strides = array<i32: 2, 1>} : memref<208x128xf32, #tpu.memory_space<vmem>>, vector<80x128xf32>
    %118 = arith.truncf %117 : vector<80x128xf32> to vector<80x128xbf16>
    %c9 = arith.constant 9 : index
    %c0_77 = arith.constant 0 : index
    %c0_78 = arith.constant 0 : index
    %119 = vector.load %arg4[%c9, %c0_77, %c0_78] : memref<25x128x128xbf16, #tpu.memory_space<vmem>>, vector<1x128x128xbf16>
    %120 = vector.shape_cast %119 : vector<1x128x128xbf16> to vector<128x128xbf16>
    %cst_79 = arith.constant dense<0.000000e+00> : vector<80x128xf32>
    %121 = tpu.matmul %118, %120, %cst_79 {dimension_numbers = #tpu.dot_dimension_numbers<[1], [0], [0], [1], [0, 0, 1, 1], [], []>} : vector<80x128xbf16>, vector<128x128xbf16>, vector<80x128xf32> -> vector<80x128xf32>
    %122 = arith.addf %116, %121 : vector<80x128xf32>
    %c20 = arith.constant 20 : index
    %c0_80 = arith.constant 0 : index
    %123 = tpu.strided_load %arg13[%c20, %c0_80] {strides = array<i32: 2, 1>} : memref<208x128xf32, #tpu.memory_space<vmem>>, vector<80x128xf32>
    %124 = arith.truncf %123 : vector<80x128xf32> to vector<80x128xbf16>
    %c10_81 = arith.constant 10 : index
    %c0_82 = arith.constant 0 : index
    %c0_83 = arith.constant 0 : index
    %125 = vector.load %arg4[%c10_81, %c0_82, %c0_83] : memref<25x128x128xbf16, #tpu.memory_space<vmem>>, vector<1x128x128xbf16>
    %126 = vector.shape_cast %125 : vector<1x128x128xbf16> to vector<128x128xbf16>
    %cst_84 = arith.constant dense<0.000000e+00> : vector<80x128xf32>
    %127 = tpu.matmul %124, %126, %cst_84 {dimension_numbers = #tpu.dot_dimension_numbers<[1], [0], [0], [1], [0, 0, 1, 1], [], []>} : vector<80x128xbf16>, vector<128x128xbf16>, vector<80x128xf32> -> vector<80x128xf32>
    %128 = arith.addf %122, %127 : vector<80x128xf32>
    %c21_85 = arith.constant 21 : index
    %c0_86 = arith.constant 0 : index
    %129 = tpu.strided_load %arg13[%c21_85, %c0_86] {strides = array<i32: 2, 1>} : memref<208x128xf32, #tpu.memory_space<vmem>>, vector<80x128xf32>
    %130 = arith.truncf %129 : vector<80x128xf32> to vector<80x128xbf16>
    %c11_87 = arith.constant 11 : index
    %c0_88 = arith.constant 0 : index
    %c0_89 = arith.constant 0 : index
    %131 = vector.load %arg4[%c11_87, %c0_88, %c0_89] : memref<25x128x128xbf16, #tpu.memory_space<vmem>>, vector<1x128x128xbf16>
    %132 = vector.shape_cast %131 : vector<1x128x128xbf16> to vector<128x128xbf16>
    %cst_90 = arith.constant dense<0.000000e+00> : vector<80x128xf32>
    %133 = tpu.matmul %130, %132, %cst_90 {dimension_numbers = #tpu.dot_dimension_numbers<[1], [0], [0], [1], [0, 0, 1, 1], [], []>} : vector<80x128xbf16>, vector<128x128xbf16>, vector<80x128xf32> -> vector<80x128xf32>
    %134 = arith.addf %128, %133 : vector<80x128xf32>
    %c22 = arith.constant 22 : index
    %c0_91 = arith.constant 0 : index
    %135 = tpu.strided_load %arg13[%c22, %c0_91] {strides = array<i32: 2, 1>} : memref<208x128xf32, #tpu.memory_space<vmem>>, vector<80x128xf32>
    %136 = arith.truncf %135 : vector<80x128xf32> to vector<80x128xbf16>
    %c12_92 = arith.constant 12 : index
    %c0_93 = arith.constant 0 : index
    %c0_94 = arith.constant 0 : index
    %137 = vector.load %arg4[%c12_92, %c0_93, %c0_94] : memref<25x128x128xbf16, #tpu.memory_space<vmem>>, vector<1x128x128xbf16>
    %138 = vector.shape_cast %137 : vector<1x128x128xbf16> to vector<128x128xbf16>
    %cst_95 = arith.constant dense<0.000000e+00> : vector<80x128xf32>
    %139 = tpu.matmul %136, %138, %cst_95 {dimension_numbers = #tpu.dot_dimension_numbers<[1], [0], [0], [1], [0, 0, 1, 1], [], []>} : vector<80x128xbf16>, vector<128x128xbf16>, vector<80x128xf32> -> vector<80x128xf32>
    %140 = arith.addf %134, %139 : vector<80x128xf32>
    %c23 = arith.constant 23 : index
    %c0_96 = arith.constant 0 : index
    %141 = tpu.strided_load %arg13[%c23, %c0_96] {strides = array<i32: 2, 1>} : memref<208x128xf32, #tpu.memory_space<vmem>>, vector<80x128xf32>
    %142 = arith.truncf %141 : vector<80x128xf32> to vector<80x128xbf16>
    %c13_97 = arith.constant 13 : index
    %c0_98 = arith.constant 0 : index
    %c0_99 = arith.constant 0 : index
    %143 = vector.load %arg4[%c13_97, %c0_98, %c0_99] : memref<25x128x128xbf16, #tpu.memory_space<vmem>>, vector<1x128x128xbf16>
    %144 = vector.shape_cast %143 : vector<1x128x128xbf16> to vector<128x128xbf16>
    %cst_100 = arith.constant dense<0.000000e+00> : vector<80x128xf32>
    %145 = tpu.matmul %142, %144, %cst_100 {dimension_numbers = #tpu.dot_dimension_numbers<[1], [0], [0], [1], [0, 0, 1, 1], [], []>} : vector<80x128xbf16>, vector<128x128xbf16>, vector<80x128xf32> -> vector<80x128xf32>
    %146 = arith.addf %140, %145 : vector<80x128xf32>
    %c24 = arith.constant 24 : index
    %c0_101 = arith.constant 0 : index
    %147 = tpu.strided_load %arg13[%c24, %c0_101] {strides = array<i32: 2, 1>} : memref<208x128xf32, #tpu.memory_space<vmem>>, vector<80x128xf32>
    %148 = arith.truncf %147 : vector<80x128xf32> to vector<80x128xbf16>
    %c14_102 = arith.constant 14 : index
    %c0_103 = arith.constant 0 : index
    %c0_104 = arith.constant 0 : index
    %149 = vector.load %arg4[%c14_102, %c0_103, %c0_104] : memref<25x128x128xbf16, #tpu.memory_space<vmem>>, vector<1x128x128xbf16>
    %150 = vector.shape_cast %149 : vector<1x128x128xbf16> to vector<128x128xbf16>
    %cst_105 = arith.constant dense<0.000000e+00> : vector<80x128xf32>
    %151 = tpu.matmul %148, %150, %cst_105 {dimension_numbers = #tpu.dot_dimension_numbers<[1], [0], [0], [1], [0, 0, 1, 1], [], []>} : vector<80x128xbf16>, vector<128x128xbf16>, vector<80x128xf32> -> vector<80x128xf32>
    %152 = arith.addf %146, %151 : vector<80x128xf32>
    %c30 = arith.constant 30 : index
    %c0_106 = arith.constant 0 : index
    %153 = tpu.strided_load %arg13[%c30, %c0_106] {strides = array<i32: 2, 1>} : memref<208x128xf32, #tpu.memory_space<vmem>>, vector<80x128xf32>
    %154 = arith.truncf %153 : vector<80x128xf32> to vector<80x128xbf16>
    %c15 = arith.constant 15 : index
    %c0_107 = arith.constant 0 : index
    %c0_108 = arith.constant 0 : index
    %155 = vector.load %arg4[%c15, %c0_107, %c0_108] : memref<25x128x128xbf16, #tpu.memory_space<vmem>>, vector<1x128x128xbf16>
    %156 = vector.shape_cast %155 : vector<1x128x128xbf16> to vector<128x128xbf16>
    %cst_109 = arith.constant dense<0.000000e+00> : vector<80x128xf32>
    %157 = tpu.matmul %154, %156, %cst_109 {dimension_numbers = #tpu.dot_dimension_numbers<[1], [0], [0], [1], [0, 0, 1, 1], [], []>} : vector<80x128xbf16>, vector<128x128xbf16>, vector<80x128xf32> -> vector<80x128xf32>
    %158 = arith.addf %152, %157 : vector<80x128xf32>
    %c31_110 = arith.constant 31 : index
    %c0_111 = arith.constant 0 : index
    %159 = tpu.strided_load %arg13[%c31_110, %c0_111] {strides = array<i32: 2, 1>} : memref<208x128xf32, #tpu.memory_space<vmem>>, vector<80x128xf32>
    %160 = arith.truncf %159 : vector<80x128xf32> to vector<80x128xbf16>
    %c16 = arith.constant 16 : index
    %c0_112 = arith.constant 0 : index
    %c0_113 = arith.constant 0 : index
    %161 = vector.load %arg4[%c16, %c0_112, %c0_113] : memref<25x128x128xbf16, #tpu.memory_space<vmem>>, vector<1x128x128xbf16>
    %162 = vector.shape_cast %161 : vector<1x128x128xbf16> to vector<128x128xbf16>
    %cst_114 = arith.constant dense<0.000000e+00> : vector<80x128xf32>
    %163 = tpu.matmul %160, %162, %cst_114 {dimension_numbers = #tpu.dot_dimension_numbers<[1], [0], [0], [1], [0, 0, 1, 1], [], []>} : vector<80x128xbf16>, vector<128x128xbf16>, vector<80x128xf32> -> vector<80x128xf32>
    %164 = arith.addf %158, %163 : vector<80x128xf32>
    %c32 = arith.constant 32 : index
    %c0_115 = arith.constant 0 : index
    %165 = tpu.strided_load %arg13[%c32, %c0_115] {strides = array<i32: 2, 1>} : memref<208x128xf32, #tpu.memory_space<vmem>>, vector<80x128xf32>
    %166 = arith.truncf %165 : vector<80x128xf32> to vector<80x128xbf16>
    %c17 = arith.constant 17 : index
    %c0_116 = arith.constant 0 : index
    %c0_117 = arith.constant 0 : index
    %167 = vector.load %arg4[%c17, %c0_116, %c0_117] : memref<25x128x128xbf16, #tpu.memory_space<vmem>>, vector<1x128x128xbf16>
    %168 = vector.shape_cast %167 : vector<1x128x128xbf16> to vector<128x128xbf16>
    %cst_118 = arith.constant dense<0.000000e+00> : vector<80x128xf32>
    %169 = tpu.matmul %166, %168, %cst_118 {dimension_numbers = #tpu.dot_dimension_numbers<[1], [0], [0], [1], [0, 0, 1, 1], [], []>} : vector<80x128xbf16>, vector<128x128xbf16>, vector<80x128xf32> -> vector<80x128xf32>
    %170 = arith.addf %164, %169 : vector<80x128xf32>
    %c33 = arith.constant 33 : index
    %c0_119 = arith.constant 0 : index
    %171 = tpu.strided_load %arg13[%c33, %c0_119] {strides = array<i32: 2, 1>} : memref<208x128xf32, #tpu.memory_space<vmem>>, vector<80x128xf32>
    %172 = arith.truncf %171 : vector<80x128xf32> to vector<80x128xbf16>
    %c18 = arith.constant 18 : index
    %c0_120 = arith.constant 0 : index
    %c0_121 = arith.constant 0 : index
    %173 = vector.load %arg4[%c18, %c0_120, %c0_121] : memref<25x128x128xbf16, #tpu.memory_space<vmem>>, vector<1x128x128xbf16>
    %174 = vector.shape_cast %173 : vector<1x128x128xbf16> to vector<128x128xbf16>
    %cst_122 = arith.constant dense<0.000000e+00> : vector<80x128xf32>
    %175 = tpu.matmul %172, %174, %cst_122 {dimension_numbers = #tpu.dot_dimension_numbers<[1], [0], [0], [1], [0, 0, 1, 1], [], []>} : vector<80x128xbf16>, vector<128x128xbf16>, vector<80x128xf32> -> vector<80x128xf32>
    %176 = arith.addf %170, %175 : vector<80x128xf32>
    %c34 = arith.constant 34 : index
    %c0_123 = arith.constant 0 : index
    %177 = tpu.strided_load %arg13[%c34, %c0_123] {strides = array<i32: 2, 1>} : memref<208x128xf32, #tpu.memory_space<vmem>>, vector<80x128xf32>
    %178 = arith.truncf %177 : vector<80x128xf32> to vector<80x128xbf16>
    %c19 = arith.constant 19 : index
    %c0_124 = arith.constant 0 : index
    %c0_125 = arith.constant 0 : index
    %179 = vector.load %arg4[%c19, %c0_124, %c0_125] : memref<25x128x128xbf16, #tpu.memory_space<vmem>>, vector<1x128x128xbf16>
    %180 = vector.shape_cast %179 : vector<1x128x128xbf16> to vector<128x128xbf16>
    %cst_126 = arith.constant dense<0.000000e+00> : vector<80x128xf32>
    %181 = tpu.matmul %178, %180, %cst_126 {dimension_numbers = #tpu.dot_dimension_numbers<[1], [0], [0], [1], [0, 0, 1, 1], [], []>} : vector<80x128xbf16>, vector<128x128xbf16>, vector<80x128xf32> -> vector<80x128xf32>
    %182 = arith.addf %176, %181 : vector<80x128xf32>
    %c40 = arith.constant 40 : index
    %c0_127 = arith.constant 0 : index
    %183 = tpu.strided_load %arg13[%c40, %c0_127] {strides = array<i32: 2, 1>} : memref<208x128xf32, #tpu.memory_space<vmem>>, vector<80x128xf32>
    %184 = arith.truncf %183 : vector<80x128xf32> to vector<80x128xbf16>
    %c20_128 = arith.constant 20 : index
    %c0_129 = arith.constant 0 : index
    %c0_130 = arith.constant 0 : index
    %185 = vector.load %arg4[%c20_128, %c0_129, %c0_130] : memref<25x128x128xbf16, #tpu.memory_space<vmem>>, vector<1x128x128xbf16>
    %186 = vector.shape_cast %185 : vector<1x128x128xbf16> to vector<128x128xbf16>
    %cst_131 = arith.constant dense<0.000000e+00> : vector<80x128xf32>
    %187 = tpu.matmul %184, %186, %cst_131 {dimension_numbers = #tpu.dot_dimension_numbers<[1], [0], [0], [1], [0, 0, 1, 1], [], []>} : vector<80x128xbf16>, vector<128x128xbf16>, vector<80x128xf32> -> vector<80x128xf32>
    %188 = arith.addf %182, %187 : vector<80x128xf32>
    %c41_132 = arith.constant 41 : index
    %c0_133 = arith.constant 0 : index
    %189 = tpu.strided_load %arg13[%c41_132, %c0_133] {strides = array<i32: 2, 1>} : memref<208x128xf32, #tpu.memory_space<vmem>>, vector<80x128xf32>
    %190 = arith.truncf %189 : vector<80x128xf32> to vector<80x128xbf16>
    %c21_134 = arith.constant 21 : index
    %c0_135 = arith.constant 0 : index
    %c0_136 = arith.constant 0 : index
    %191 = vector.load %arg4[%c21_134, %c0_135, %c0_136] : memref<25x128x128xbf16, #tpu.memory_space<vmem>>, vector<1x128x128xbf16>
    %192 = vector.shape_cast %191 : vector<1x128x128xbf16> to vector<128x128xbf16>
    %cst_137 = arith.constant dense<0.000000e+00> : vector<80x128xf32>
    %193 = tpu.matmul %190, %192, %cst_137 {dimension_numbers = #tpu.dot_dimension_numbers<[1], [0], [0], [1], [0, 0, 1, 1], [], []>} : vector<80x128xbf16>, vector<128x128xbf16>, vector<80x128xf32> -> vector<80x128xf32>
    %194 = arith.addf %188, %193 : vector<80x128xf32>
    %c42 = arith.constant 42 : index
    %c0_138 = arith.constant 0 : index
    %195 = tpu.strided_load %arg13[%c42, %c0_138] {strides = array<i32: 2, 1>} : memref<208x128xf32, #tpu.memory_space<vmem>>, vector<80x128xf32>
    %196 = arith.truncf %195 : vector<80x128xf32> to vector<80x128xbf16>
    %c22_139 = arith.constant 22 : index
    %c0_140 = arith.constant 0 : index
    %c0_141 = arith.constant 0 : index
    %197 = vector.load %arg4[%c22_139, %c0_140, %c0_141] : memref<25x128x128xbf16, #tpu.memory_space<vmem>>, vector<1x128x128xbf16>
    %198 = vector.shape_cast %197 : vector<1x128x128xbf16> to vector<128x128xbf16>
    %cst_142 = arith.constant dense<0.000000e+00> : vector<80x128xf32>
    %199 = tpu.matmul %196, %198, %cst_142 {dimension_numbers = #tpu.dot_dimension_numbers<[1], [0], [0], [1], [0, 0, 1, 1], [], []>} : vector<80x128xbf16>, vector<128x128xbf16>, vector<80x128xf32> -> vector<80x128xf32>
    %200 = arith.addf %194, %199 : vector<80x128xf32>
    %c43 = arith.constant 43 : index
    %c0_143 = arith.constant 0 : index
    %201 = tpu.strided_load %arg13[%c43, %c0_143] {strides = array<i32: 2, 1>} : memref<208x128xf32, #tpu.memory_space<vmem>>, vector<80x128xf32>
    %202 = arith.truncf %201 : vector<80x128xf32> to vector<80x128xbf16>
    %c23_144 = arith.constant 23 : index
    %c0_145 = arith.constant 0 : index
    %c0_146 = arith.constant 0 : index
    %203 = vector.load %arg4[%c23_144, %c0_145, %c0_146] : memref<25x128x128xbf16, #tpu.memory_space<vmem>>, vector<1x128x128xbf16>
    %204 = vector.shape_cast %203 : vector<1x128x128xbf16> to vector<128x128xbf16>
    %cst_147 = arith.constant dense<0.000000e+00> : vector<80x128xf32>
    %205 = tpu.matmul %202, %204, %cst_147 {dimension_numbers = #tpu.dot_dimension_numbers<[1], [0], [0], [1], [0, 0, 1, 1], [], []>} : vector<80x128xbf16>, vector<128x128xbf16>, vector<80x128xf32> -> vector<80x128xf32>
    %206 = arith.addf %200, %205 : vector<80x128xf32>
    %c44 = arith.constant 44 : index
    %c0_148 = arith.constant 0 : index
    %207 = tpu.strided_load %arg13[%c44, %c0_148] {strides = array<i32: 2, 1>} : memref<208x128xf32, #tpu.memory_space<vmem>>, vector<80x128xf32>
    %208 = arith.truncf %207 : vector<80x128xf32> to vector<80x128xbf16>
    %c24_149 = arith.constant 24 : index
    %c0_150 = arith.constant 0 : index
    %c0_151 = arith.constant 0 : index
    %209 = vector.load %arg4[%c24_149, %c0_150, %c0_151] : memref<25x128x128xbf16, #tpu.memory_space<vmem>>, vector<1x128x128xbf16>
    %210 = vector.shape_cast %209 : vector<1x128x128xbf16> to vector<128x128xbf16>
    %cst_152 = arith.constant dense<0.000000e+00> : vector<80x128xf32>
    %211 = tpu.matmul %208, %210, %cst_152 {dimension_numbers = #tpu.dot_dimension_numbers<[1], [0], [0], [1], [0, 0, 1, 1], [], []>} : vector<80x128xbf16>, vector<128x128xbf16>, vector<80x128xf32> -> vector<80x128xf32>
    %212 = arith.addf %206, %211 : vector<80x128xf32>
    %c0_153 = arith.constant 0 : index
    %c0_154 = arith.constant 0 : index
    %213 = vector.load %arg5[%c0_153, %c0_154] : memref<1x128xf32, #tpu.memory_space<vmem>>, vector<1x128xf32>
    %c0_155 = arith.constant 0 : index
    %c0_156 = arith.constant 0 : index
    %214 = vector.load %arg6[%c0_155, %c0_156] : memref<1x128xf32, #tpu.memory_space<vmem>>, vector<1x128xf32>
    %c0_157 = arith.constant 0 : index
    %c0_158 = arith.constant 0 : index
    %215 = vector.load %arg10[%c0_157, %c0_158] : memref<80x1xf32, #tpu.memory_space<vmem>>, vector<80x1xf32>
    %216 = vector.broadcast %215 : vector<80x1xf32> to vector<80x128xf32>
    %217 = arith.mulf %212, %216 : vector<80x128xf32>
    %cst_159 = arith.constant dense<0.000000e+00> : vector<128xf32>
    %218 = vector.multi_reduction <add>, %217, %cst_159 [0] : vector<80x128xf32> to vector<128xf32>
    %219 = vector.shape_cast %218 : vector<128xf32> to vector<1x128xf32>
    %cst_160 = arith.constant 0.055555556 : f32
    %220 = vector.broadcast %cst_160 : f32 to vector<1x128xf32>
    %221 = arith.mulf %219, %220 : vector<1x128xf32>
    %222 = vector.broadcast %221 : vector<1x128xf32> to vector<80x128xf32>
    %223 = arith.subf %212, %222 : vector<80x128xf32>
    %224 = vector.broadcast %215 : vector<80x1xf32> to vector<80x128xf32>
    %225 = arith.mulf %223, %224 : vector<80x128xf32>
    %226 = arith.mulf %225, %225 : vector<80x128xf32>
    %cst_161 = arith.constant dense<0.000000e+00> : vector<128xf32>
    %227 = vector.multi_reduction <add>, %226, %cst_161 [0] : vector<80x128xf32> to vector<128xf32>
    %228 = vector.shape_cast %227 : vector<128xf32> to vector<1x128xf32>
    %cst_162 = arith.constant 0.055555556 : f32
    %229 = vector.broadcast %cst_162 : f32 to vector<1x128xf32>
    %230 = arith.mulf %228, %229 : vector<1x128xf32>
    %cst_163 = arith.constant 9.99999974E-6 : f32
    %231 = vector.broadcast %cst_163 : f32 to vector<1x128xf32>
    %232 = arith.addf %230, %231 : vector<1x128xf32>
    %233 = math.rsqrt %232 : vector<1x128xf32>
    %234 = arith.mulf %233, %213 : vector<1x128xf32>
    %235 = arith.mulf %221, %234 : vector<1x128xf32>
    %236 = arith.subf %214, %235 : vector<1x128xf32>
    %237 = vector.broadcast %234 : vector<1x128xf32> to vector<80x128xf32>
    %238 = arith.mulf %212, %237 : vector<80x128xf32>
    %239 = vector.broadcast %236 : vector<1x128xf32> to vector<80x128xf32>
    %240 = arith.addf %238, %239 : vector<80x128xf32>
    %cst_164 = arith.constant 0.000000e+00 : f32
    %241 = vector.broadcast %cst_164 : f32 to vector<80x128xf32>
    %242 = arith.maximumf %240, %241 : vector<80x128xf32>
    %cst_165 = arith.constant 0.000000e+00 : f32
    %243 = vector.broadcast %cst_165 : f32 to vector<72x128xf32>
    %c0_166 = arith.constant 0 : index
    %c0_167 = arith.constant 0 : index
    %244 = vector.load %arg14[%c0_166, %c0_167] : memref<72x128xf32, #tpu.memory_space<vmem>>, vector<72x128xf32>
    tpu.vector_store %arg14[%c0_166, %c0_167], %243 {strides = array<i32>} : memref<72x128xf32, #tpu.memory_space<vmem>>, vector<72x128xf32>,
    %245 = vector.extract_strided_slice %242 {offsets = [0, 0], sizes = [3, 128], strides = [1, 1]} : vector<80x128xf32> to vector<3x128xf32>
    %c6_168 = arith.constant 6 : index
    %c0_169 = arith.constant 0 : index
    %246 = vector.load %arg14[%c6_168, %c0_169] : memref<72x128xf32, #tpu.memory_space<vmem>>, vector<3x128xf32>
    tpu.vector_store %arg14[%c6_168, %c0_169], %245 {strides = array<i32>} : memref<72x128xf32, #tpu.memory_space<vmem>>, vector<3x128xf32>,
    %247 = vector.extract_strided_slice %242 {offsets = [10, 0], sizes = [3, 128], strides = [1, 1]} : vector<80x128xf32> to vector<3x128xf32>
    %c11_170 = arith.constant 11 : index
    %c0_171 = arith.constant 0 : index
    %248 = vector.load %arg14[%c11_170, %c0_171] : memref<72x128xf32, #tpu.memory_space<vmem>>, vector<3x128xf32>
    tpu.vector_store %arg14[%c11_170, %c0_171], %247 {strides = array<i32>} : memref<72x128xf32, #tpu.memory_space<vmem>>, vector<3x128xf32>,
    %249 = vector.extract_strided_slice %242 {offsets = [20, 0], sizes = [3, 128], strides = [1, 1]} : vector<80x128xf32> to vector<3x128xf32>
    %c16_172 = arith.constant 16 : index
    %c0_173 = arith.constant 0 : index
    %250 = vector.load %arg14[%c16_172, %c0_173] : memref<72x128xf32, #tpu.memory_space<vmem>>, vector<3x128xf32>
    tpu.vector_store %arg14[%c16_172, %c0_173], %249 {strides = array<i32>} : memref<72x128xf32, #tpu.memory_space<vmem>>, vector<3x128xf32>,
    %251 = vector.extract_strided_slice %242 {offsets = [50, 0], sizes = [3, 128], strides = [1, 1]} : vector<80x128xf32> to vector<3x128xf32>
    %c31_174 = arith.constant 31 : index
    %c0_175 = arith.constant 0 : index
    %252 = vector.load %arg14[%c31_174, %c0_175] : memref<72x128xf32, #tpu.memory_space<vmem>>, vector<3x128xf32>
    tpu.vector_store %arg14[%c31_174, %c0_175], %251 {strides = array<i32>} : memref<72x128xf32, #tpu.memory_space<vmem>>, vector<3x128xf32>,
    %253 = vector.extract_strided_slice %242 {offsets = [60, 0], sizes = [3, 128], strides = [1, 1]} : vector<80x128xf32> to vector<3x128xf32>
    %c36 = arith.constant 36 : index
    %c0_176 = arith.constant 0 : index
    %254 = vector.load %arg14[%c36, %c0_176] : memref<72x128xf32, #tpu.memory_space<vmem>>, vector<3x128xf32>
    tpu.vector_store %arg14[%c36, %c0_176], %253 {strides = array<i32>} : memref<72x128xf32, #tpu.memory_space<vmem>>, vector<3x128xf32>,
    %255 = vector.extract_strided_slice %242 {offsets = [70, 0], sizes = [3, 128], strides = [1, 1]} : vector<80x128xf32> to vector<3x128xf32>
    %c41_177 = arith.constant 41 : index
    %c0_178 = arith.constant 0 : index
    %256 = vector.load %arg14[%c41_177, %c0_178] : memref<72x128xf32, #tpu.memory_space<vmem>>, vector<3x128xf32>
    tpu.vector_store %arg14[%c41_177, %c0_178], %255 {strides = array<i32>} : memref<72x128xf32, #tpu.memory_space<vmem>>, vector<3x128xf32>,
    %cst_179 = arith.constant 0.000000e+00 : f32
    %257 = vector.broadcast %cst_179 : f32 to vector<56x128xf32>
    %c0_180 = arith.constant 0 : index
    %c0_181 = arith.constant 0 : index
    %258 = vector.load %arg14[%c0_180, %c0_181] : memref<72x128xf32, #tpu.memory_space<vmem>>, vector<56x128xf32>
    %259 = arith.truncf %258 : vector<56x128xf32> to vector<56x128xbf16>
    %c0_182 = arith.constant 0 : index
    %c0_183 = arith.constant 0 : index
    %c0_184 = arith.constant 0 : index
    %260 = vector.load %arg7[%c0_182, %c0_183, %c0_184] : memref<9x128x128xbf16, #tpu.memory_space<vmem>>, vector<1x128x128xbf16>
    %261 = vector.shape_cast %260 : vector<1x128x128xbf16> to vector<128x128xbf16>
    %cst_185 = arith.constant dense<0.000000e+00> : vector<56x128xf32>
    %262 = tpu.matmul %259, %261, %cst_185 {dimension_numbers = #tpu.dot_dimension_numbers<[1], [0], [0], [1], [0, 0, 1, 1], [], []>} : vector<56x128xbf16>, vector<128x128xbf16>, vector<56x128xf32> -> vector<56x128xf32>
    %263 = arith.addf %257, %262 : vector<56x128xf32>
    %c1_186 = arith.constant 1 : index
    %c0_187 = arith.constant 0 : index
    %264 = vector.load %arg14[%c1_186, %c0_187] : memref<72x128xf32, #tpu.memory_space<vmem>>, vector<56x128xf32>
    %265 = arith.truncf %264 : vector<56x128xf32> to vector<56x128xbf16>
    %c1_188 = arith.constant 1 : index
    %c0_189 = arith.constant 0 : index
    %c0_190 = arith.constant 0 : index
    %266 = vector.load %arg7[%c1_188, %c0_189, %c0_190] : memref<9x128x128xbf16, #tpu.memory_space<vmem>>, vector<1x128x128xbf16>
    %267 = vector.shape_cast %266 : vector<1x128x128xbf16> to vector<128x128xbf16>
    %cst_191 = arith.constant dense<0.000000e+00> : vector<56x128xf32>
    %268 = tpu.matmul %265, %267, %cst_191 {dimension_numbers = #tpu.dot_dimension_numbers<[1], [0], [0], [1], [0, 0, 1, 1], [], []>} : vector<56x128xbf16>, vector<128x128xbf16>, vector<56x128xf32> -> vector<56x128xf32>
    %269 = arith.addf %263, %268 : vector<56x128xf32>
    %c2_192 = arith.constant 2 : index
    %c0_193 = arith.constant 0 : index
    %270 = vector.load %arg14[%c2_192, %c0_193] : memref<72x128xf32, #tpu.memory_space<vmem>>, vector<56x128xf32>
    %271 = arith.truncf %270 : vector<56x128xf32> to vector<56x128xbf16>
    %c2_194 = arith.constant 2 : index
    %c0_195 = arith.constant 0 : index
    %c0_196 = arith.constant 0 : index
    %272 = vector.load %arg7[%c2_194, %c0_195, %c0_196] : memref<9x128x128xbf16, #tpu.memory_space<vmem>>, vector<1x128x128xbf16>
    %273 = vector.shape_cast %272 : vector<1x128x128xbf16> to vector<128x128xbf16>
    %cst_197 = arith.constant dense<0.000000e+00> : vector<56x128xf32>
    %274 = tpu.matmul %271, %273, %cst_197 {dimension_numbers = #tpu.dot_dimension_numbers<[1], [0], [0], [1], [0, 0, 1, 1], [], []>} : vector<56x128xbf16>, vector<128x128xbf16>, vector<56x128xf32> -> vector<56x128xf32>
    %275 = arith.addf %269, %274 : vector<56x128xf32>
    %c5_198 = arith.constant 5 : index
    %c0_199 = arith.constant 0 : index
    %276 = vector.load %arg14[%c5_198, %c0_199] : memref<72x128xf32, #tpu.memory_space<vmem>>, vector<56x128xf32>
    %277 = arith.truncf %276 : vector<56x128xf32> to vector<56x128xbf16>
    %c3_200 = arith.constant 3 : index
    %c0_201 = arith.constant 0 : index
    %c0_202 = arith.constant 0 : index
    %278 = vector.load %arg7[%c3_200, %c0_201, %c0_202] : memref<9x128x128xbf16, #tpu.memory_space<vmem>>, vector<1x128x128xbf16>
    %279 = vector.shape_cast %278 : vector<1x128x128xbf16> to vector<128x128xbf16>
    %cst_203 = arith.constant dense<0.000000e+00> : vector<56x128xf32>
    %280 = tpu.matmul %277, %279, %cst_203 {dimension_numbers = #tpu.dot_dimension_numbers<[1], [0], [0], [1], [0, 0, 1, 1], [], []>} : vector<56x128xbf16>, vector<128x128xbf16>, vector<56x128xf32> -> vector<56x128xf32>
    %281 = arith.addf %275, %280 : vector<56x128xf32>
    %c6_204 = arith.constant 6 : index
    %c0_205 = arith.constant 0 : index
    %282 = vector.load %arg14[%c6_204, %c0_205] : memref<72x128xf32, #tpu.memory_space<vmem>>, vector<56x128xf32>
    %283 = arith.truncf %282 : vector<56x128xf32> to vector<56x128xbf16>
    %c4_206 = arith.constant 4 : index
    %c0_207 = arith.constant 0 : index
    %c0_208 = arith.constant 0 : index
    %284 = vector.load %arg7[%c4_206, %c0_207, %c0_208] : memref<9x128x128xbf16, #tpu.memory_space<vmem>>, vector<1x128x128xbf16>
    %285 = vector.shape_cast %284 : vector<1x128x128xbf16> to vector<128x128xbf16>
    %cst_209 = arith.constant dense<0.000000e+00> : vector<56x128xf32>
    %286 = tpu.matmul %283, %285, %cst_209 {dimension_numbers = #tpu.dot_dimension_numbers<[1], [0], [0], [1], [0, 0, 1, 1], [], []>} : vector<56x128xbf16>, vector<128x128xbf16>, vector<56x128xf32> -> vector<56x128xf32>
    %287 = arith.addf %281, %286 : vector<56x128xf32>
    %c7_210 = arith.constant 7 : index
    %c0_211 = arith.constant 0 : index
    %288 = vector.load %arg14[%c7_210, %c0_211] : memref<72x128xf32, #tpu.memory_space<vmem>>, vector<56x128xf32>
    %289 = arith.truncf %288 : vector<56x128xf32> to vector<56x128xbf16>
    %c5_212 = arith.constant 5 : index
    %c0_213 = arith.constant 0 : index
    %c0_214 = arith.constant 0 : index
    %290 = vector.load %arg7[%c5_212, %c0_213, %c0_214] : memref<9x128x128xbf16, #tpu.memory_space<vmem>>, vector<1x128x128xbf16>
    %291 = vector.shape_cast %290 : vector<1x128x128xbf16> to vector<128x128xbf16>
    %cst_215 = arith.constant dense<0.000000e+00> : vector<56x128xf32>
    %292 = tpu.matmul %289, %291, %cst_215 {dimension_numbers = #tpu.dot_dimension_numbers<[1], [0], [0], [1], [0, 0, 1, 1], [], []>} : vector<56x128xbf16>, vector<128x128xbf16>, vector<56x128xf32> -> vector<56x128xf32>
    %293 = arith.addf %287, %292 : vector<56x128xf32>
    %c10_216 = arith.constant 10 : index
    %c0_217 = arith.constant 0 : index
    %294 = vector.load %arg14[%c10_216, %c0_217] : memref<72x128xf32, #tpu.memory_space<vmem>>, vector<56x128xf32>
    %295 = arith.truncf %294 : vector<56x128xf32> to vector<56x128xbf16>
    %c6_218 = arith.constant 6 : index
    %c0_219 = arith.constant 0 : index
    %c0_220 = arith.constant 0 : index
    %296 = vector.load %arg7[%c6_218, %c0_219, %c0_220] : memref<9x128x128xbf16, #tpu.memory_space<vmem>>, vector<1x128x128xbf16>
    %297 = vector.shape_cast %296 : vector<1x128x128xbf16> to vector<128x128xbf16>
    %cst_221 = arith.constant dense<0.000000e+00> : vector<56x128xf32>
    %298 = tpu.matmul %295, %297, %cst_221 {dimension_numbers = #tpu.dot_dimension_numbers<[1], [0], [0], [1], [0, 0, 1, 1], [], []>} : vector<56x128xbf16>, vector<128x128xbf16>, vector<56x128xf32> -> vector<56x128xf32>
    %299 = arith.addf %293, %298 : vector<56x128xf32>
    %c11_222 = arith.constant 11 : index
    %c0_223 = arith.constant 0 : index
    %300 = vector.load %arg14[%c11_222, %c0_223] : memref<72x128xf32, #tpu.memory_space<vmem>>, vector<56x128xf32>
    %301 = arith.truncf %300 : vector<56x128xf32> to vector<56x128xbf16>
    %c7_224 = arith.constant 7 : index
    %c0_225 = arith.constant 0 : index
    %c0_226 = arith.constant 0 : index
    %302 = vector.load %arg7[%c7_224, %c0_225, %c0_226] : memref<9x128x128xbf16, #tpu.memory_space<vmem>>, vector<1x128x128xbf16>
    %303 = vector.shape_cast %302 : vector<1x128x128xbf16> to vector<128x128xbf16>
    %cst_227 = arith.constant dense<0.000000e+00> : vector<56x128xf32>
    %304 = tpu.matmul %301, %303, %cst_227 {dimension_numbers = #tpu.dot_dimension_numbers<[1], [0], [0], [1], [0, 0, 1, 1], [], []>} : vector<56x128xbf16>, vector<128x128xbf16>, vector<56x128xf32> -> vector<56x128xf32>
    %305 = arith.addf %299, %304 : vector<56x128xf32>
    %c12_228 = arith.constant 12 : index
    %c0_229 = arith.constant 0 : index
    %306 = vector.load %arg14[%c12_228, %c0_229] : memref<72x128xf32, #tpu.memory_space<vmem>>, vector<56x128xf32>
    %307 = arith.truncf %306 : vector<56x128xf32> to vector<56x128xbf16>
    %c8_230 = arith.constant 8 : index
    %c0_231 = arith.constant 0 : index
    %c0_232 = arith.constant 0 : index
    %308 = vector.load %arg7[%c8_230, %c0_231, %c0_232] : memref<9x128x128xbf16, #tpu.memory_space<vmem>>, vector<1x128x128xbf16>
    %309 = vector.shape_cast %308 : vector<1x128x128xbf16> to vector<128x128xbf16>
    %cst_233 = arith.constant dense<0.000000e+00> : vector<56x128xf32>
    %310 = tpu.matmul %307, %309, %cst_233 {dimension_numbers = #tpu.dot_dimension_numbers<[1], [0], [0], [1], [0, 0, 1, 1], [], []>} : vector<56x128xbf16>, vector<128x128xbf16>, vector<56x128xf32> -> vector<56x128xf32>
    %311 = arith.addf %305, %310 : vector<56x128xf32>
    %c0_234 = arith.constant 0 : index
    %c0_235 = arith.constant 0 : index
    %312 = vector.load %arg8[%c0_234, %c0_235] : memref<1x128xf32, #tpu.memory_space<vmem>>, vector<1x128xf32>
    %c0_236 = arith.constant 0 : index
    %c0_237 = arith.constant 0 : index
    %313 = vector.load %arg9[%c0_236, %c0_237] : memref<1x128xf32, #tpu.memory_space<vmem>>, vector<1x128xf32>
    %c0_238 = arith.constant 0 : index
    %c0_239 = arith.constant 0 : index
    %314 = vector.load %arg11[%c0_238, %c0_239] : memref<56x1xf32, #tpu.memory_space<vmem>>, vector<56x1xf32>
    %315 = vector.broadcast %314 : vector<56x1xf32> to vector<56x128xf32>
    %316 = arith.mulf %311, %315 : vector<56x128xf32>
    %cst_240 = arith.constant dense<0.000000e+00> : vector<128xf32>
    %317 = vector.multi_reduction <add>, %316, %cst_240 [0] : vector<56x128xf32> to vector<128xf32>
    %318 = vector.shape_cast %317 : vector<128xf32> to vector<1x128xf32>
    %cst_241 = arith.constant 0.055555556 : f32
    %319 = vector.broadcast %cst_241 : f32 to vector<1x128xf32>
    %320 = arith.mulf %318, %319 : vector<1x128xf32>
    %321 = vector.broadcast %320 : vector<1x128xf32> to vector<56x128xf32>
    %322 = arith.subf %311, %321 : vector<56x128xf32>
    %323 = vector.broadcast %314 : vector<56x1xf32> to vector<56x128xf32>
    %324 = arith.mulf %322, %323 : vector<56x128xf32>
    %325 = arith.mulf %324, %324 : vector<56x128xf32>
    %cst_242 = arith.constant dense<0.000000e+00> : vector<128xf32>
    %326 = vector.multi_reduction <add>, %325, %cst_242 [0] : vector<56x128xf32> to vector<128xf32>
    %327 = vector.shape_cast %326 : vector<128xf32> to vector<1x128xf32>
    %cst_243 = arith.constant 0.055555556 : f32
    %328 = vector.broadcast %cst_243 : f32 to vector<1x128xf32>
    %329 = arith.mulf %327, %328 : vector<1x128xf32>
    %cst_244 = arith.constant 9.99999974E-6 : f32
    %330 = vector.broadcast %cst_244 : f32 to vector<1x128xf32>
    %331 = arith.addf %329, %330 : vector<1x128xf32>
    %332 = math.rsqrt %331 : vector<1x128xf32>
    %333 = arith.mulf %332, %312 : vector<1x128xf32>
    %334 = arith.mulf %320, %333 : vector<1x128xf32>
    %335 = arith.subf %313, %334 : vector<1x128xf32>
    %336 = vector.broadcast %333 : vector<1x128xf32> to vector<56x128xf32>
    %337 = arith.mulf %311, %336 : vector<56x128xf32>
    %338 = vector.broadcast %335 : vector<1x128xf32> to vector<56x128xf32>
    %339 = arith.addf %337, %338 : vector<56x128xf32>
    %cst_245 = arith.constant 0.000000e+00 : f32
    %340 = vector.broadcast %cst_245 : f32 to vector<56x128xf32>
    %341 = arith.maximumf %339, %340 : vector<56x128xf32>
    %c0_246 = arith.constant 0 : index
    %c0_247 = arith.constant 0 : index
    %342 = vector.load %arg12[%c0_246, %c0_247] : memref<56x128xf32, #tpu.memory_space<vmem>>, vector<56x128xf32>
    tpu.vector_store %arg12[%c0_246, %c0_247], %341 {strides = array<i32>} : memref<56x128xf32, #tpu.memory_space<vmem>>, vector<56x128xf32>,
    return
  }
}

</mosaic_0001>

<llo_original>
// kernel: map_encoder_forward.1
$region0: #{map_encoder_forward.1}
  #allocation0 [shape = 'u32[]', space=smem, size = 0x4, offset = 0x4, fixed_abs, tag = 'smem constant byte address 0x4 - core index']
  #allocation1 [shape = 'u32[72,128]{1,0:T(1,128)}', space=vmem, size = 0x9000, scoped, tag = 'internal scratch']
  #allocation2 [shape = 'f32[208,128]{1,0:T(8,128)}', space=vmem, size = 0x1a000, scoped, tag = 'scratch operand']
  #allocation3 [shape = 'f32[72,128]{1,0:T(8,128)}', space=vmem, size = 0x9000, scoped, tag = 'scratch operand']
  %s0 = inlined_call_operand.vmem [shape: bf16[128,256], index: 0, kind: input, shape index: {}]
  %s1 = inlined_call_operand.vmem [shape: bf16[256,128], index: 1, kind: input, shape index: {}]
  %s2 = inlined_call_operand.vmem [shape: f32[1,128], index: 2, kind: input, shape index: {}]
  %s3 = inlined_call_operand.vmem [shape: f32[1,128], index: 3, kind: input, shape index: {}]
  %s4 = inlined_call_operand.vmem [shape: bf16[25,128,128], index: 4, kind: input, shape index: {}]
  %s5 = inlined_call_operand.vmem [shape: f32[1,128], index: 5, kind: input, shape index: {}]
  %s6 = inlined_call_operand.vmem [shape: f32[1,128], index: 6, kind: input, shape index: {}]
  %s7 = inlined_call_operand.vmem [shape: bf16[9,128,128], index: 7, kind: input, shape index: {}]
  %s8 = inlined_call_operand.vmem [shape: f32[1,128], index: 8, kind: input, shape index: {}]
  %s9 = inlined_call_operand.vmem [shape: f32[1,128], index: 9, kind: input, shape index: {}]
  %s10 = inlined_call_operand.vmem [shape: f32[80,1], index: 10, kind: input, shape index: {}]
  %s11 = inlined_call_operand.vmem [shape: f32[56,1], index: 11, kind: input, shape index: {}]
  %s12 = inlined_call_operand.vmem [shape: f32[56,128], index: 12, kind: output, shape index: {}]
  %s13 = sld [smem:[#allocation0]]
  $region58: #{map_encoder_forward.1} parent=0
    _
  %s15 = ssub.s32 1, %s13
  %s16 = scalar_select 0, %s15, %s13
  // Predicated region
  $region2: #{map_encoder_forward.1} parent=0 // pred_check
    _
  $region3: #{map_encoder_forward.1} parent=0 // pred_check_branch
    %18 = sbr.rel (0) target = $region5
  $region4: #{map_encoder_forward.1} parent=0 // pred_region
    _
  $region5: #{map_encoder_forward.1} parent=0 // pred_fallthru
    _
  // Predicated region
  $region6: #{map_encoder_forward.1} parent=0 // pred_check
    _
  $region7: #{map_encoder_forward.1} parent=0 // pred_check_branch
    %20 = sbr.rel (0) target = $region9
  $region8: #{map_encoder_forward.1} parent=0 // pred_region
    _
  $region9: #{map_encoder_forward.1} parent=0 // pred_fallthru
    _
  // Predicated region
  $region10: #{map_encoder_forward.1} parent=0 // pred_check
    _
  $region11: #{map_encoder_forward.1} parent=0 // pred_check_branch
    %22 = sbr.rel (0) target = $region13
  $region12: #{map_encoder_forward.1} parent=0 // pred_region
    _
  $region13: #{map_encoder_forward.1} parent=0 // pred_fallthru
    _
  // Predicated region
  $region14: #{map_encoder_forward.1} parent=0 // pred_check
    _
  $region15: #{map_encoder_forward.1} parent=0 // pred_check_branch
    %24 = sbr.rel (0) target = $region17
  $region16: #{map_encoder_forward.1} parent=0 // pred_region
    _
  $region17: #{map_encoder_forward.1} parent=0 // pred_fallthru
    _
  // Predicated region
  $region18: #{map_encoder_forward.1} parent=0 // pred_check
    _
  $region19: #{map_encoder_forward.1} parent=0 // pred_check_branch
    %26 = sbr.rel (0) target = $region21
  $region20: #{map_encoder_forward.1} parent=0 // pred_region
    _
  $region21: #{map_encoder_forward.1} parent=0 // pred_fallthru
    _
  // Predicated region
  $region22: #{map_encoder_forward.1} parent=0 // pred_check
    _
  $region23: #{map_encoder_forward.1} parent=0 // pred_check_branch
    %28 = sbr.rel (0) target = $region25
  $region24: #{map_encoder_forward.1} parent=0 // pred_region
    _
  $region25: #{map_encoder_forward.1} parent=0 // pred_fallthru
    _
  // Predicated region
  $region26: #{map_encoder_forward.1} parent=0 // pred_check
    _
  $region27: #{map_encoder_forward.1} parent=0 // pred_check_branch
    %30 = sbr.rel (0) target = $region29
  $region28: #{map_encoder_forward.1} parent=0 // pred_region
    _
  $region29: #{map_encoder_forward.1} parent=0 // pred_fallthru
    _
  // Predicated region
  $region30: #{map_encoder_forward.1} parent=0 // pred_check
    _
  $region31: #{map_encoder_forward.1} parent=0 // pred_check_branch
    %32 = sbr.rel (0) target = $region33
  $region32: #{map_encoder_forward.1} parent=0 // pred_region
    _
  $region33: #{map_encoder_forward.1} parent=0 // pred_fallthru
    _
  // Predicated region
  $region34: #{map_encoder_forward.1} parent=0 // pred_check
    _
  $region35: #{map_encoder_forward.1} parent=0 // pred_check_branch
    %34 = sbr.rel (0) target = $region37
  $region36: #{map_encoder_forward.1} parent=0 // pred_region
    _
  $region37: #{map_encoder_forward.1} parent=0 // pred_fallthru
    _
  // Predicated region
  $region38: #{map_encoder_forward.1} parent=0 // pred_check
    _
  $region39: #{map_encoder_forward.1} parent=0 // pred_check_branch
    %36 = sbr.rel (0) target = $region41
  $region40: #{map_encoder_forward.1} parent=0 // pred_region
    _
  $region41: #{map_encoder_forward.1} parent=0 // pred_fallthru
    _
  // Predicated region
  $region42: #{map_encoder_forward.1} parent=0 // pred_check
    _
  $region43: #{map_encoder_forward.1} parent=0 // pred_check_branch
    %38 = sbr.rel (0) target = $region45
  $region44: #{map_encoder_forward.1} parent=0 // pred_region
    _
  $region45: #{map_encoder_forward.1} parent=0 // pred_fallthru
    _
  // Predicated region
  $region46: #{map_encoder_forward.1} parent=0 // pred_check
    _
  $region47: #{map_encoder_forward.1} parent=0 // pred_check_branch
    %40 = sbr.rel (0) target = $region49
  $region48: #{map_encoder_forward.1} parent=0 // pred_region
    _
  $region49: #{map_encoder_forward.1} parent=0 // pred_fallthru
    _
  %v41 = vld [vmem:[%s0] sm:$0xff]
  %v42 = vld [vmem:[%s0 + $0x8] sm:$0xff]
  %v43 = vld [vmem:[%s0 + $0x10] sm:$0xff]
  %v44 = vld [vmem:[%s0 + $0x18] sm:$0xff]
  %v45 = vld [vmem:[%s0 + $0x20] sm:$0xff]
  %v46 = vld [vmem:[%s0 + $0x28] sm:$0xff]
  %v47 = vld [vmem:[%s0 + $0x30] sm:$0xff]
  %v48 = vld [vmem:[%s0 + $0x38] sm:$0xff]
  %v49 = vld [vmem:[%s0 + $0x40] sm:$0xff]
  %v50 = vld [vmem:[%s0 + $0x48] sm:$0xff]
  %v51 = vld [vmem:[%s0 + $0x50] sm:$0xff]
  %v52 = vld [vmem:[%s0 + $0x58] sm:$0xff]
  %v53 = vld [vmem:[%s0 + $0x60] sm:$0xff]
  %v54 = vld [vmem:[%s0 + $0x68] sm:$0xff]
  %v55 = vld [vmem:[%s0 + $0x70] sm:$0xff]
  %v56 = vld [vmem:[%s0 + $0x78] sm:$0xff]
  %v57 = vld [vmem:[%s1] sm:$0xf]
  %v58 = vld [vmem:[%s1 + $0x4] sm:$0xf]
  %v59 = vld [vmem:[%s1 + $0x8] sm:$0xf]
  %v60 = vld [vmem:[%s1 + $0xc] sm:$0xf]
  %v61 = vld [vmem:[%s1 + $0x10] sm:$0xf]
  %v62 = vld [vmem:[%s1 + $0x14] sm:$0xf]
  %v63 = vld [vmem:[%s1 + $0x18] sm:$0xf]
  %v64 = vld [vmem:[%s1 + $0x1c] sm:$0xf]
  %v65 = vld [vmem:[%s1 + $0x20] sm:$0xf]
  %v66 = vld [vmem:[%s1 + $0x24] sm:$0xf]
  %v67 = vld [vmem:[%s1 + $0x28] sm:$0xf]
  %v68 = vld [vmem:[%s1 + $0x2c] sm:$0xf]
  %v69 = vld [vmem:[%s1 + $0x30] sm:$0xf]
  %v70 = vld [vmem:[%s1 + $0x34] sm:$0xf]
  %v71 = vld [vmem:[%s1 + $0x38] sm:$0xf]
  %v72 = vld [vmem:[%s1 + $0x3c] sm:$0xf]
  %v73 = vld [vmem:[%s1 + $0x40] sm:$0xf]
  %v74 = vld [vmem:[%s1 + $0x44] sm:$0xf]
  %v75 = vld [vmem:[%s1 + $0x48] sm:$0xf]
  %v76 = vld [vmem:[%s1 + $0x4c] sm:$0xf]
  %v77 = vld [vmem:[%s1 + $0x50] sm:$0xf]
  %v78 = vld [vmem:[%s1 + $0x54] sm:$0xf]
  %v79 = vld [vmem:[%s1 + $0x58] sm:$0xf]
  %v80 = vld [vmem:[%s1 + $0x5c] sm:$0xf]
  %v81 = vld [vmem:[%s1 + $0x60] sm:$0xf]
  %v82 = vld [vmem:[%s1 + $0x64] sm:$0xf]
  %v83 = vld [vmem:[%s1 + $0x68] sm:$0xf]
  %v84 = vld [vmem:[%s1 + $0x6c] sm:$0xf]
  %v85 = vld [vmem:[%s1 + $0x70] sm:$0xf]
  %v86 = vld [vmem:[%s1 + $0x74] sm:$0xf]
  %v87 = vld [vmem:[%s1 + $0x78] sm:$0xf]
  %v88 = vld [vmem:[%s1 + $0x7c] sm:$0xf]
  %v105 = vunpack.c.l.b16 %v41
  %v106 = vunpack.c.h.b16 %v41
  %v107 = vunpack.c.l.b16 %v42
  %v108 = vunpack.c.h.b16 %v42
  %v109 = vunpack.c.l.b16 %v43
  %v110 = vunpack.c.h.b16 %v43
  %v111 = vunpack.c.l.b16 %v44
  %v112 = vunpack.c.h.b16 %v44
  %v113 = vunpack.c.l.b16 %v45
  %v114 = vunpack.c.h.b16 %v45
  %v115 = vunpack.c.l.b16 %v46
  %v116 = vunpack.c.h.b16 %v46
  %v117 = vunpack.c.l.b16 %v47
  %v118 = vunpack.c.h.b16 %v47
  %v119 = vunpack.c.l.b16 %v48
  %v120 = vunpack.c.h.b16 %v48
  %v121 = vunpack.c.l.b16 %v49
  %v122 = vunpack.c.h.b16 %v49
  %v123 = vunpack.c.l.b16 %v50
  %v124 = vunpack.c.h.b16 %v50
  %v125 = vunpack.c.l.b16 %v51
  %v126 = vunpack.c.h.b16 %v51
  %v127 = vunpack.c.l.b16 %v52
  %v128 = vunpack.c.h.b16 %v52
  %v129 = vunpack.c.l.b16 %v53
  %v130 = vunpack.c.h.b16 %v53
  %v131 = vunpack.c.l.b16 %v54
  %v132 = vunpack.c.h.b16 %v54
  %v133 = vunpack.c.l.b16 %v55
  %v134 = vunpack.c.h.b16 %v55
  %v135 = vunpack.c.l.b16 %v56
  %v136 = vunpack.c.h.b16 %v56
  %v137 = vpack.c.b16 %v107, %v105
  %v138 = vpack.c.b16 %v108, %v106
  %v139 = vpack.c.b16 %v111, %v109
  %v140 = vpack.c.b16 %v112, %v110
  %v141 = vpack.c.b16 %v115, %v113
  %v142 = vpack.c.b16 %v116, %v114
  %v143 = vpack.c.b16 %v119, %v117
  %v144 = vpack.c.b16 %v120, %v118
  %v145 = vpack.c.b16 %v123, %v121
  %v146 = vpack.c.b16 %v124, %v122
  %v147 = vpack.c.b16 %v127, %v125
  %v148 = vpack.c.b16 %v128, %v126
  %v149 = vpack.c.b16 %v131, %v129
  %v150 = vpack.c.b16 %v132, %v130
  %v151 = vpack.c.b16 %v135, %v133
  %v152 = vpack.c.b16 %v136, %v134
  %v201 = vunpack.c.l.b16 %v57
  %v202 = vunpack.c.l.b16 %v58
  %v203 = vunpack.c.l.b16 %v59
  %v204 = vunpack.c.l.b16 %v60
  %v205 = vunpack.c.l.b16 %v61
  %v206 = vunpack.c.l.b16 %v62
  %v207 = vunpack.c.l.b16 %v63
  %v208 = vunpack.c.l.b16 %v64
  %v209 = vunpack.c.l.b16 %v65
  %v210 = vunpack.c.l.b16 %v66
  %v211 = vunpack.c.l.b16 %v67
  %v212 = vunpack.c.l.b16 %v68
  %v213 = vunpack.c.l.b16 %v69
  %v214 = vunpack.c.l.b16 %v70
  %v215 = vunpack.c.l.b16 %v71
  %v216 = vunpack.c.l.b16 %v72
  %v217 = vunpack.c.l.b16 %v73
  %v218 = vunpack.c.l.b16 %v74
  %v219 = vunpack.c.l.b16 %v75
  %v220 = vunpack.c.l.b16 %v76
  %v221 = vunpack.c.l.b16 %v77
  %v222 = vunpack.c.l.b16 %v78
  %v223 = vunpack.c.l.b16 %v79
  %v224 = vunpack.c.l.b16 %v80
  %v225 = vunpack.c.l.b16 %v81
  %v226 = vunpack.c.l.b16 %v82
  %v227 = vunpack.c.l.b16 %v83
  %v228 = vunpack.c.l.b16 %v84
  %v229 = vunpack.c.l.b16 %v85
  %v230 = vunpack.c.l.b16 %v86
  %v231 = vunpack.c.l.b16 %v87
  %v232 = vunpack.c.l.b16 %v88
  %v233 = vpack.c.b16 %v202, %v201
  %v234 = vpack.c.b16 %v204, %v203
  %v235 = vpack.c.b16 %v206, %v205
  %v236 = vpack.c.b16 %v208, %v207
  %v237 = vpack.c.b16 %v210, %v209
  %v238 = vpack.c.b16 %v212, %v211
  %v239 = vpack.c.b16 %v214, %v213
  %v240 = vpack.c.b16 %v216, %v215
  %v241 = vpack.c.b16 %v218, %v217
  %v242 = vpack.c.b16 %v220, %v219
  %v243 = vpack.c.b16 %v222, %v221
  %v244 = vpack.c.b16 %v224, %v223
  %v245 = vpack.c.b16 %v226, %v225
  %v246 = vpack.c.b16 %v228, %v227
  %v247 = vpack.c.b16 %v230, %v229
  %v248 = vpack.c.b16 %v232, %v231
  %265 = vmatpush.bf16.msra.mxu0 %v240
  %266 = vmatpush.bf16.msra.mxu0 %v239
  %267 = vmatpush.bf16.msra.mxu0 %v238
  %268 = vmatpush.bf16.msra.mxu0 %v237
  %269 = vmatpush.bf16.msra.mxu0 %v236
  %270 = vmatpush.bf16.msra.mxu0 %v235
  %271 = vmatpush.bf16.msra.mxu0 %v234
  %272 = vmatpush.bf16.msra.mxu0 %v233
  %273 = vmatmul.bf16.gmra.mxu0 %v137
  %v274 = vpop.f32.mrf.mxu0
  %v275 = vadd.f32 0.0, %v274
  %v276 = vpop.f32.mrf.mxu0
  %v277 = vadd.f32 0.0, %v276
  %278 = vmatmul.bf16.gmra.mxu0 %v139
  %v279 = vpop.f32.mrf.mxu0
  %v280 = vadd.f32 0.0, %v279
  %v281 = vpop.f32.mrf.mxu0
  %v282 = vadd.f32 0.0, %v281
  %283 = vmatmul.bf16.gmra.mxu0 %v141
  %v284 = vpop.f32.mrf.mxu0
  %v285 = vadd.f32 0.0, %v284
  %v286 = vpop.f32.mrf.mxu0
  %v287 = vadd.f32 0.0, %v286
  %288 = vmatmul.bf16.gmra.mxu0 %v143
  %v289 = vpop.f32.mrf.mxu0
  %v290 = vadd.f32 0.0, %v289
  %v291 = vpop.f32.mrf.mxu0
  %v292 = vadd.f32 0.0, %v291
  %293 = vmatmul.bf16.gmra.mxu0 %v145
  %v294 = vpop.f32.mrf.mxu0
  %v295 = vadd.f32 0.0, %v294
  %v296 = vpop.f32.mrf.mxu0
  %v297 = vadd.f32 0.0, %v296
  %298 = vmatmul.bf16.gmra.mxu0 %v147
  %v299 = vpop.f32.mrf.mxu0
  %v300 = vadd.f32 0.0, %v299
  %v301 = vpop.f32.mrf.mxu0
  %v302 = vadd.f32 0.0, %v301
  %303 = vmatmul.bf16.gmra.mxu0 %v149
  %v304 = vpop.f32.mrf.mxu0
  %v305 = vadd.f32 0.0, %v304
  %v306 = vpop.f32.mrf.mxu0
  %v307 = vadd.f32 0.0, %v306
  %308 = vmatmul.bf16.gmra.mxu0 %v151
  %v309 = vpop.f32.mrf.mxu0
  %v310 = vadd.f32 0.0, %v309
  %v311 = vpop.f32.mrf.mxu0
  %v312 = vadd.f32 0.0, %v311
  %313 = vdwg.mxu0
  %314 = vmatpush.bf16.msra.mxu0 %v248
  %315 = vmatpush.bf16.msra.mxu0 %v247
  %316 = vmatpush.bf16.msra.mxu0 %v246
  %317 = vmatpush.bf16.msra.mxu0 %v245
  %318 = vmatpush.bf16.msra.mxu0 %v244
  %319 = vmatpush.bf16.msra.mxu0 %v243
  %320 = vmatpush.bf16.msra.mxu0 %v242
  %321 = vmatpush.bf16.msra.mxu0 %v241
  %322 = vmatmul.bf16.gmra.mxu0 %v138
  %v323 = vpop.f32.mrf.mxu0
  %v324 = vadd.f32 %v275, %v323
  %v325 = vpop.f32.mrf.mxu0
  %v326 = vadd.f32 %v277, %v325
  %327 = vmatmul.bf16.gmra.mxu0 %v140
  %v328 = vpop.f32.mrf.mxu0
  %v329 = vadd.f32 %v280, %v328
  %v330 = vpop.f32.mrf.mxu0
  %v331 = vadd.f32 %v282, %v330
  %332 = vmatmul.bf16.gmra.mxu0 %v142
  %v333 = vpop.f32.mrf.mxu0
  %v334 = vadd.f32 %v285, %v333
  %v335 = vpop.f32.mrf.mxu0
  %v336 = vadd.f32 %v287, %v335
  %337 = vmatmul.bf16.gmra.mxu0 %v144
  %v338 = vpop.f32.mrf.mxu0
  %v339 = vadd.f32 %v290, %v338
  %v340 = vpop.f32.mrf.mxu0
  %v341 = vadd.f32 %v292, %v340
  %342 = vmatmul.bf16.gmra.mxu0 %v146
  %v343 = vpop.f32.mrf.mxu0
  %v344 = vadd.f32 %v295, %v343
  %v345 = vpop.f32.mrf.mxu0
  %v346 = vadd.f32 %v297, %v345
  %347 = vmatmul.bf16.gmra.mxu0 %v148
  %v348 = vpop.f32.mrf.mxu0
  %v349 = vadd.f32 %v300, %v348
  %v350 = vpop.f32.mrf.mxu0
  %v351 = vadd.f32 %v302, %v350
  %352 = vmatmul.bf16.gmra.mxu0 %v150
  %v353 = vpop.f32.mrf.mxu0
  %v354 = vadd.f32 %v305, %v353
  %v355 = vpop.f32.mrf.mxu0
  %v356 = vadd.f32 %v307, %v355
  %357 = vmatmul.bf16.gmra.mxu0 %v152
  %v358 = vpop.f32.mrf.mxu0
  %v359 = vadd.f32 %v310, %v358
  %v360 = vpop.f32.mrf.mxu0
  %v361 = vadd.f32 %v312, %v360
  %362 = vdwg.mxu0
  %v363 = vld [vmem:[%s2] sm:$0x1]
  %v364 = vld [vmem:[%s3] sm:$0x1]
  %v365 = vadd.f32 %v324, %v326
  %v366 = vadd.f32 %v365, %v329
  %v367 = vadd.f32 %v366, %v331
  %v368 = vadd.f32 %v367, %v334
  %v369 = vadd.f32 %v368, %v336
  %v370 = vadd.f32 %v369, %v339
  %v371 = vadd.f32 %v370, %v341
  %v372 = vadd.f32 %v371, %v344
  %v373 = vadd.f32 %v372, %v346
  %v374 = vadd.f32 %v373, %v349
  %v375 = vadd.f32 %v374, %v351
  %v376 = vadd.f32 %v375, %v354
  %v377 = vadd.f32 %v376, %v356
  %v378 = vadd.f32 %v377, %v359
  %v379 = vadd.f32 %v378, %v361
  %v380 = vrot.slane %v379, 4
  %v381 = vadd.f32 %v379, %v380
  %v382 = vrot.slane %v381, 2
  %v383 = vadd.f32 %v381, %v382
  %v384 = vrot.slane %v383, 1
  %v385 = vadd.f32 %v383, %v384
  %v386 = vmul.f32 %v385, 0.0078125
  %v387 = vsub.f32 %v324, %v386
  %v388 = vsub.f32 %v326, %v386
  %v389 = vsub.f32 %v329, %v386
  %v390 = vsub.f32 %v331, %v386
  %v391 = vsub.f32 %v334, %v386
  %v392 = vsub.f32 %v336, %v386
  %v393 = vsub.f32 %v339, %v386
  %v394 = vsub.f32 %v341, %v386
  %v395 = vsub.f32 %v344, %v386
  %v396 = vsub.f32 %v346, %v386
  %v397 = vsub.f32 %v349, %v386
  %v398 = vsub.f32 %v351, %v386
  %v399 = vsub.f32 %v354, %v386
  %v400 = vsub.f32 %v356, %v386
  %v401 = vsub.f32 %v359, %v386
  %v402 = vsub.f32 %v361, %v386
  %v403 = vmul.f32 %v387, %v387
  %v404 = vmul.f32 %v388, %v388
  %v405 = vmul.f32 %v389, %v389
  %v406 = vmul.f32 %v390, %v390
  %v407 = vmul.f32 %v391, %v391
  %v408 = vmul.f32 %v392, %v392
  %v409 = vmul.f32 %v393, %v393
  %v410 = vmul.f32 %v394, %v394
  %v411 = vmul.f32 %v395, %v395
  %v412 = vmul.f32 %v396, %v396
  %v413 = vmul.f32 %v397, %v397
  %v414 = vmul.f32 %v398, %v398
  %v415 = vmul.f32 %v399, %v399
  %v416 = vmul.f32 %v400, %v400
  %v417 = vmul.f32 %v401, %v401
  %v418 = vmul.f32 %v402, %v402
  %v419 = vadd.f32 %v403, %v404
  %v420 = vadd.f32 %v419, %v405
  %v421 = vadd.f32 %v420, %v406
  %v422 = vadd.f32 %v421, %v407
  %v423 = vadd.f32 %v422, %v408
  %v424 = vadd.f32 %v423, %v409
  %v425 = vadd.f32 %v424, %v410
  %v426 = vadd.f32 %v425, %v411
  %v427 = vadd.f32 %v426, %v412
  %v428 = vadd.f32 %v427, %v413
  %v429 = vadd.f32 %v428, %v414
  %v430 = vadd.f32 %v429, %v415
  %v431 = vadd.f32 %v430, %v416
  %v432 = vadd.f32 %v431, %v417
  %v433 = vadd.f32 %v432, %v418
  %v434 = vrot.slane %v433, 4
  %v435 = vadd.f32 %v433, %v434
  %v436 = vrot.slane %v435, 2
  %v437 = vadd.f32 %v435, %v436
  %v438 = vrot.slane %v437, 1
  %v439 = vadd.f32 %v437, %v438
  %v440 = vmul.f32 %v439, 0.0078125
  %v441 = vadd.f32 %v440, 1e-05
  %v442 = vrsqrt.pop %v441
  %v443 = vmul.f32 %v442, %v441
  %v444 = vmul.f32 %v443, %v442
  %v445 = vmul.f32 0.5, %v444
  %v446 = vsub.f32 1.5, %v445
  %v447 = vmul.f32 %v442, %v446
  %vm448 = vweird.f32 %v441
  %vm449 = vweird.f32 %v442
  %vm450 = vmor %vm448, %vm449
  %v451 = vsel %vm450, %v442, %v447
  %v452 = vmul.f32 %v451, %v363
  %v453 = vmul.f32 %v386, %v452
  %v454 = vsub.f32 %v364, %v453
  %v455 = vperm.slane %v452, 0
  %v456 = vmul.f32 %v324, %v455
  %v457 = vmul.f32 %v326, %v455
  %v458 = vmul.f32 %v329, %v455
  %v459 = vmul.f32 %v331, %v455
  %v460 = vmul.f32 %v334, %v455
  %v461 = vmul.f32 %v336, %v455
  %v462 = vmul.f32 %v339, %v455
  %v463 = vmul.f32 %v341, %v455
  %v464 = vmul.f32 %v344, %v455
  %v465 = vmul.f32 %v346, %v455
  %v466 = vmul.f32 %v349, %v455
  %v467 = vmul.f32 %v351, %v455
  %v468 = vmul.f32 %v354, %v455
  %v469 = vmul.f32 %v356, %v455
  %v470 = vmul.f32 %v359, %v455
  %v471 = vmul.f32 %v361, %v455
  %v473 = vperm.slane %v454, 0
  %v475 = vadd.f32 %v456, %v473
  %v476 = vadd.f32 %v457, %v473
  %v477 = vadd.f32 %v458, %v473
  %v478 = vadd.f32 %v459, %v473
  %v479 = vadd.f32 %v460, %v473
  %v480 = vadd.f32 %v461, %v473
  %v481 = vadd.f32 %v462, %v473
  %v482 = vadd.f32 %v463, %v473
  %v483 = vadd.f32 %v464, %v473
  %v484 = vadd.f32 %v465, %v473
  %v485 = vadd.f32 %v466, %v473
  %v486 = vadd.f32 %v467, %v473
  %v487 = vadd.f32 %v468, %v473
  %v488 = vadd.f32 %v469, %v473
  %v489 = vadd.f32 %v470, %v473
  %v490 = vadd.f32 %v471, %v473
  %v491 = vmax.f32 %v475, 0.0
  %v492 = vmax.f32 %v476, 0.0
  %v493 = vmax.f32 %v477, 0.0
  %v494 = vmax.f32 %v478, 0.0
  %v495 = vmax.f32 %v479, 0.0
  %v496 = vmax.f32 %v480, 0.0
  %v497 = vmax.f32 %v481, 0.0
  %v498 = vmax.f32 %v482, 0.0
  %v499 = vmax.f32 %v483, 0.0
  %v500 = vmax.f32 %v484, 0.0
  %v501 = vmax.f32 %v485, 0.0
  %v502 = vmax.f32 %v486, 0.0
  %v503 = vmax.f32 %v487, 0.0
  %v504 = vmax.f32 %v488, 0.0
  %v505 = vmax.f32 %v489, 0.0
  %v506 = vmax.f32 %v490, 0.0
  %507 = vst [vmem:[#allocation2] sm:$0xff] 0.0
  %508 = vst [vmem:[#allocation2 + $0x8] sm:$0xff] 0.0
  %509 = vst [vmem:[#allocation2 + $0x10] sm:$0xff] 0.0
  %510 = vst [vmem:[#allocation2 + $0x18] sm:$0xff] 0.0
  %511 = vst [vmem:[#allocation2 + $0x20] sm:$0xff] 0.0
  %512 = vst [vmem:[#allocation2 + $0x28] sm:$0xff] 0.0
  %513 = vst [vmem:[#allocation2 + $0x30] sm:$0xff] 0.0
  %514 = vst [vmem:[#allocation2 + $0x38] sm:$0xff] 0.0
  %515 = vst [vmem:[#allocation2 + $0x40] sm:$0xff] 0.0
  %516 = vst [vmem:[#allocation2 + $0x48] sm:$0xff] 0.0
  %517 = vst [vmem:[#allocation2 + $0x50] sm:$0xff] 0.0
  %518 = vst [vmem:[#allocation2 + $0x58] sm:$0xff] 0.0
  %519 = vst [vmem:[#allocation2 + $0x60] sm:$0xff] 0.0
  %520 = vst [vmem:[#allocation2 + $0x68] sm:$0xff] 0.0
  %521 = vst [vmem:[#allocation2 + $0x70] sm:$0xff] 0.0
  %522 = vst [vmem:[#allocation2 + $0x78] sm:$0xff] 0.0
  %523 = vst [vmem:[#allocation2 + $0x80] sm:$0xff] 0.0
  %524 = vst [vmem:[#allocation2 + $0x88] sm:$0xff] 0.0
  %525 = vst [vmem:[#allocation2 + $0x90] sm:$0xff] 0.0
  %526 = vst [vmem:[#allocation2 + $0x98] sm:$0xff] 0.0
  %527 = vst [vmem:[#allocation2 + $0xa0] sm:$0xff] 0.0
  %528 = vst [vmem:[#allocation2 + $0xa8] sm:$0xff] 0.0
  %529 = vst [vmem:[#allocation2 + $0xb0] sm:$0xff] 0.0
  %530 = vst [vmem:[#allocation2 + $0xb8] sm:$0xff] 0.0
  %531 = vst [vmem:[#allocation2 + $0xc0] sm:$0xff] 0.0
  %532 = vst [vmem:[#allocation2 + $0xc8] sm:$0xff] 0.0
  %533 = vst [vmem:[#allocation2 + $0xb] sm:$0xff] %v491
  %534 = vst [vmem:[#allocation2 + $0x15] sm:$0xff] %v492
  %535 = vst [vmem:[#allocation2 + $0x1f] sm:$0xff] %v493
  %536 = vst [vmem:[#allocation2 + $0x29] sm:$0xff] %v494
  %537 = vst [vmem:[#allocation2 + $0x33] sm:$0xff] %v495
  %538 = vst [vmem:[#allocation2 + $0x3d] sm:$0xff] %v496
  %539 = vst [vmem:[#allocation2 + $0x47] sm:$0xff] %v497
  %540 = vst [vmem:[#allocation2 + $0x51] sm:$0xff] %v498
  %541 = vst [vmem:[#allocation2 + $0x6f] sm:$0xff] %v499
  %542 = vst [vmem:[#allocation2 + $0x79] sm:$0xff] %v500
  %543 = vst [vmem:[#allocation2 + $0x83] sm:$0xff] %v501
  %544 = vst [vmem:[#allocation2 + $0x8d] sm:$0xff] %v502
  %545 = vst [vmem:[#allocation2 + $0x97] sm:$0xff] %v503
  %546 = vst [vmem:[#allocation2 + $0xa1] sm:$0xff] %v504
  %547 = vst [vmem:[#allocation2 + $0xab] sm:$0xff] %v505
  %548 = vst [vmem:[#allocation2 + $0xb5] sm:$0xff] %v506
  %v549 = vld [vmem:[#allocation2] ss:$2 sm:$0xff]
  %s550 = scalar_lea.vmem [#allocation2], 16
  %v551 = vld [vmem:[%s550] ss:$2 sm:$0xff]
  %s552 = scalar_lea.vmem [#allocation2], 32
  %v553 = vld [vmem:[%s552] ss:$2 sm:$0xff]
  %s554 = scalar_lea.vmem [#allocation2], 48
  %v555 = vld [vmem:[%s554] ss:$2 sm:$0xff]
  %s556 = scalar_lea.vmem [#allocation2], 64
  %v557 = vld [vmem:[%s556] ss:$2 sm:$0xff]
  %s558 = scalar_lea.vmem [#allocation2], 80
  %v559 = vld [vmem:[%s558] ss:$2 sm:$0xff]
  %s560 = scalar_lea.vmem [#allocation2], 96
  %v561 = vld [vmem:[%s560] ss:$2 sm:$0xff]
  %s562 = scalar_lea.vmem [#allocation2], 112
  %v563 = vld [vmem:[%s562] ss:$2 sm:$0xff]
  %s564 = scalar_lea.vmem [#allocation2], 128
  %v565 = vld [vmem:[%s564] ss:$2 sm:$0xff]
  %s566 = scalar_lea.vmem [#allocation2], 144
  %v567 = vld [vmem:[%s566] ss:$2 sm:$0xff]
  %v568 = vpack.c.bf16 %v551, %v549
  %v569 = vpack.c.bf16 %v555, %v553
  %v570 = vpack.c.bf16 %v559, %v557
  %v571 = vpack.c.bf16 %v563, %v561
  %v572 = vpack.c.bf16 %v567, %v565
  %v573 = vld [vmem:[%s4] sm:$0xf]
  %v574 = vld [vmem:[%s4 + $0x4] sm:$0xf]
  %v575 = vld [vmem:[%s4 + $0x8] sm:$0xf]
  %v576 = vld [vmem:[%s4 + $0xc] sm:$0xf]
  %v577 = vld [vmem:[%s4 + $0x10] sm:$0xf]
  %v578 = vld [vmem:[%s4 + $0x14] sm:$0xf]
  %v579 = vld [vmem:[%s4 + $0x18] sm:$0xf]
  %v580 = vld [vmem:[%s4 + $0x1c] sm:$0xf]
  %v581 = vld [vmem:[%s4 + $0x20] sm:$0xf]
  %v582 = vld [vmem:[%s4 + $0x24] sm:$0xf]
  %v583 = vld [vmem:[%s4 + $0x28] sm:$0xf]
  %v584 = vld [vmem:[%s4 + $0x2c] sm:$0xf]
  %v585 = vld [vmem:[%s4 + $0x30] sm:$0xf]
  %v586 = vld [vmem:[%s4 + $0x34] sm:$0xf]
  %v587 = vld [vmem:[%s4 + $0x38] sm:$0xf]
  %v588 = vld [vmem:[%s4 + $0x3c] sm:$0xf]
  %s589 = scalar_lea.vmem [#allocation2], 1
  %v590 = vld [vmem:[%s589] ss:$2 sm:$0xff]
  %s591 = scalar_lea.vmem [#allocation2], 17
  %v592 = vld [vmem:[%s591] ss:$2 sm:$0xff]
  %s593 = scalar_lea.vmem [#allocation2], 33
  %v594 = vld [vmem:[%s593] ss:$2 sm:$0xff]
  %s595 = scalar_lea.vmem [#allocation2], 49
  %v596 = vld [vmem:[%s595] ss:$2 sm:$0xff]
  %s597 = scalar_lea.vmem [#allocation2], 65
  %v598 = vld [vmem:[%s597] ss:$2 sm:$0xff]
  %s599 = scalar_lea.vmem [#allocation2], 81
  %v600 = vld [vmem:[%s599] ss:$2 sm:$0xff]
  %s601 = scalar_lea.vmem [#allocation2], 97
  %v602 = vld [vmem:[%s601] ss:$2 sm:$0xff]
  %s603 = scalar_lea.vmem [#allocation2], 113
  %v604 = vld [vmem:[%s603] ss:$2 sm:$0xff]
  %s605 = scalar_lea.vmem [#allocation2], 129
  %v606 = vld [vmem:[%s605] ss:$2 sm:$0xff]
  %s607 = scalar_lea.vmem [#allocation2], 145
  %v608 = vld [vmem:[%s607] ss:$2 sm:$0xff]
  %v609 = vpack.c.bf16 %v592, %v590
  %v610 = vpack.c.bf16 %v596, %v594
  %v611 = vpack.c.bf16 %v600, %v598
  %v612 = vpack.c.bf16 %v604, %v602
  %v613 = vpack.c.bf16 %v608, %v606
  %s614 = scalar_lea.vmem %s4, 64
  %v615 = vld [vmem:[%s614] sm:$0xf]
  %v616 = vld [vmem:[%s614 + $0x4] sm:$0xf]
  %v617 = vld [vmem:[%s614 + $0x8] sm:$0xf]
  %v618 = vld [vmem:[%s614 + $0xc] sm:$0xf]
  %v619 = vld [vmem:[%s614 + $0x10] sm:$0xf]
  %v620 = vld [vmem:[%s614 + $0x14] sm:$0xf]
  %v621 = vld [vmem:[%s614 + $0x18] sm:$0xf]
  %v622 = vld [vmem:[%s614 + $0x1c] sm:$0xf]
  %v623 = vld [vmem:[%s614 + $0x20] sm:$0xf]
  %v624 = vld [vmem:[%s614 + $0x24] sm:$0xf]
  %v625 = vld [vmem:[%s614 + $0x28] sm:$0xf]
  %v626 = vld [vmem:[%s614 + $0x2c] sm:$0xf]
  %v627 = vld [vmem:[%s614 + $0x30] sm:$0xf]
  %v628 = vld [vmem:[%s614 + $0x34] sm:$0xf]
  %v629 = vld [vmem:[%s614 + $0x38] sm:$0xf]
  %v630 = vld [vmem:[%s614 + $0x3c] sm:$0xf]
  %v647 = vunpack.c.l.b16 %v615
  %v648 = vunpack.c.l.b16 %v616
  %v649 = vunpack.c.l.b16 %v617
  %v650 = vunpack.c.l.b16 %v618
  %v651 = vunpack.c.l.b16 %v619
  %v652 = vunpack.c.l.b16 %v620
  %v653 = vunpack.c.l.b16 %v621
  %v654 = vunpack.c.l.b16 %v622
  %v655 = vunpack.c.l.b16 %v623
  %v656 = vunpack.c.l.b16 %v624
  %v657 = vunpack.c.l.b16 %v625
  %v658 = vunpack.c.l.b16 %v626
  %v659 = vunpack.c.l.b16 %v627
  %v660 = vunpack.c.l.b16 %v628
  %v661 = vunpack.c.l.b16 %v629
  %v662 = vunpack.c.l.b16 %v630
  %v663 = vpack.c.b16 %v648, %v647
  %v664 = vpack.c.b16 %v650, %v649
  %v665 = vpack.c.b16 %v652, %v651
  %v666 = vpack.c.b16 %v654, %v653
  %v667 = vpack.c.b16 %v656, %v655
  %v668 = vpack.c.b16 %v658, %v657
  %v669 = vpack.c.b16 %v660, %v659
  %v670 = vpack.c.b16 %v662, %v661
  %679 = vmatpush.bf16.msra.mxu0 %v670
  %680 = vmatpush.bf16.msra.mxu0 %v669
  %681 = vmatpush.bf16.msra.mxu0 %v668
  %682 = vmatpush.bf16.msra.mxu0 %v667
  %683 = vmatpush.bf16.msra.mxu0 %v666
  %684 = vmatpush.bf16.msra.mxu0 %v665
  %685 = vmatpush.bf16.msra.mxu0 %v664
  %686 = vmatpush.bf16.msra.mxu0 %v663
  %687 = vmatmul.bf16.gmra.mxu0 %v609
  %v688 = vpop.f32.mrf.mxu0
  %v689 = vadd.f32 0.0, %v688
  %v690 = vpop.f32.mrf.mxu0
  %v691 = vadd.f32 0.0, %v690
  %692 = vmatmul.bf16.gmra.mxu0 %v610
  %v693 = vpop.f32.mrf.mxu0
  %v694 = vadd.f32 0.0, %v693
  %v695 = vpop.f32.mrf.mxu0
  %v696 = vadd.f32 0.0, %v695
  %697 = vmatmul.bf16.gmra.mxu0 %v611
  %v698 = vpop.f32.mrf.mxu0
  %v699 = vadd.f32 0.0, %v698
  %v700 = vpop.f32.mrf.mxu0
  %v701 = vadd.f32 0.0, %v700
  %702 = vmatmul.bf16.gmra.mxu0 %v612
  %v703 = vpop.f32.mrf.mxu0
  %v704 = vadd.f32 0.0, %v703
  %v705 = vpop.f32.mrf.mxu0
  %v706 = vadd.f32 0.0, %v705
  %707 = vmatmul.bf16.gmra.mxu0 %v613
  %v708 = vpop.f32.mrf.mxu0
  %v709 = vadd.f32 0.0, %v708
  %v710 = vpop.f32.mrf.mxu0
  %v711 = vadd.f32 0.0, %v710
  %712 = vdwg.mxu0
  %v729 = vunpack.c.l.b16 %v573
  %v730 = vunpack.c.l.b16 %v574
  %v731 = vunpack.c.l.b16 %v575
  %v732 = vunpack.c.l.b16 %v576
  %v733 = vunpack.c.l.b16 %v577
  %v734 = vunpack.c.l.b16 %v578
  %v735 = vunpack.c.l.b16 %v579
  %v736 = vunpack.c.l.b16 %v580
  %v737 = vunpack.c.l.b16 %v581
  %v738 = vunpack.c.l.b16 %v582
  %v739 = vunpack.c.l.b16 %v583
  %v740 = vunpack.c.l.b16 %v584
  %v741 = vunpack.c.l.b16 %v585
  %v742 = vunpack.c.l.b16 %v586
  %v743 = vunpack.c.l.b16 %v587
  %v744 = vunpack.c.l.b16 %v588
  %v745 = vpack.c.b16 %v730, %v729
  %v746 = vpack.c.b16 %v732, %v731
  %v747 = vpack.c.b16 %v734, %v733
  %v748 = vpack.c.b16 %v736, %v735
  %v749 = vpack.c.b16 %v738, %v737
  %v750 = vpack.c.b16 %v740, %v739
  %v751 = vpack.c.b16 %v742, %v741
  %v752 = vpack.c.b16 %v744, %v743
  %761 = vmatpush.bf16.msra.mxu0 %v752
  %762 = vmatpush.bf16.msra.mxu0 %v751
  %763 = vmatpush.bf16.msra.mxu0 %v750
  %764 = vmatpush.bf16.msra.mxu0 %v749
  %765 = vmatpush.bf16.msra.mxu0 %v748
  %766 = vmatpush.bf16.msra.mxu0 %v747
  %767 = vmatpush.bf16.msra.mxu0 %v746
  %768 = vmatpush.bf16.msra.mxu0 %v745
  %769 = vmatmul.bf16.gmra.mxu0 %v568
  %v770 = vpop.f32.mrf.mxu0
  %v771 = vadd.f32 %v689, %v770
  %v772 = vpop.f32.mrf.mxu0
  %v773 = vadd.f32 %v691, %v772
  %774 = vmatmul.bf16.gmra.mxu0 %v569
  %v775 = vpop.f32.mrf.mxu0
  %v776 = vadd.f32 %v694, %v775
  %v777 = vpop.f32.mrf.mxu0
  %v778 = vadd.f32 %v696, %v777
  %779 = vmatmul.bf16.gmra.mxu0 %v570
  %v780 = vpop.f32.mrf.mxu0
  %v781 = vadd.f32 %v699, %v780
  %v782 = vpop.f32.mrf.mxu0
  %v783 = vadd.f32 %v701, %v782
  %784 = vmatmul.bf16.gmra.mxu0 %v571
  %v785 = vpop.f32.mrf.mxu0
  %v786 = vadd.f32 %v704, %v785
  %v787 = vpop.f32.mrf.mxu0
  %v788 = vadd.f32 %v706, %v787
  %789 = vmatmul.bf16.gmra.mxu0 %v572
  %v790 = vpop.f32.mrf.mxu0
  %v791 = vadd.f32 %v709, %v790
  %v792 = vpop.f32.mrf.mxu0
  %v793 = vadd.f32 %v711, %v792
  %794 = vdwg.mxu0
  %s795 = scalar_lea.vmem [#allocation2], 2
  %v796 = vld [vmem:[%s795] ss:$2 sm:$0xff]
  %s797 = scalar_lea.vmem [#allocation2], 18
  %v798 = vld [vmem:[%s797] ss:$2 sm:$0xff]
  %s799 = scalar_lea.vmem [#allocation2], 34
  %v800 = vld [vmem:[%s799] ss:$2 sm:$0xff]
  %s801 = scalar_lea.vmem [#allocation2], 50
  %v802 = vld [vmem:[%s801] ss:$2 sm:$0xff]
  %s803 = scalar_lea.vmem [#allocation2], 66
  %v804 = vld [vmem:[%s803] ss:$2 sm:$0xff]
  %s805 = scalar_lea.vmem [#allocation2], 82
  %v806 = vld [vmem:[%s805] ss:$2 sm:$0xff]
  %s807 = scalar_lea.vmem [#allocation2], 98
  %v808 = vld [vmem:[%s807] ss:$2 sm:$0xff]
  %s809 = scalar_lea.vmem [#allocation2], 114
  %v810 = vld [vmem:[%s809] ss:$2 sm:$0xff]
  %s811 = scalar_lea.vmem [#allocation2], 130
  %v812 = vld [vmem:[%s811] ss:$2 sm:$0xff]
  %s813 = scalar_lea.vmem [#allocation2], 146
  %v814 = vld [vmem:[%s813] ss:$2 sm:$0xff]
  %v815 = vpack.c.bf16 %v798, %v796
  %v816 = vpack.c.bf16 %v802, %v800
  %v817 = vpack.c.bf16 %v806, %v804
  %v818 = vpack.c.bf16 %v810, %v808
  %v819 = vpack.c.bf16 %v814, %v812
  %s820 = scalar_lea.vmem %s4, 128
  %v821 = vld [vmem:[%s820] sm:$0xf]
  %v822 = vld [vmem:[%s820 + $0x4] sm:$0xf]
  %v823 = vld [vmem:[%s820 + $0x8] sm:$0xf]
  %v824 = vld [vmem:[%s820 + $0xc] sm:$0xf]
  %v825 = vld [vmem:[%s820 + $0x10] sm:$0xf]
  %v826 = vld [vmem:[%s820 + $0x14] sm:$0xf]
  %v827 = vld [vmem:[%s820 + $0x18] sm:$0xf]
  %v828 = vld [vmem:[%s820 + $0x1c] sm:$0xf]
  %v829 = vld [vmem:[%s820 + $0x20] sm:$0xf]
  %v830 = vld [vmem:[%s820 + $0x24] sm:$0xf]
  %v831 = vld [vmem:[%s820 + $0x28] sm:$0xf]
  %v832 = vld [vmem:[%s820 + $0x2c] sm:$0xf]
  %v833 = vld [vmem:[%s820 + $0x30] sm:$0xf]
  %v834 = vld [vmem:[%s820 + $0x34] sm:$0xf]
  %v835 = vld [vmem:[%s820 + $0x38] sm:$0xf]
  %v836 = vld [vmem:[%s820 + $0x3c] sm:$0xf]
  %v853 = vunpack.c.l.b16 %v821
  %v854 = vunpack.c.l.b16 %v822
  %v855 = vunpack.c.l.b16 %v823
  %v856 = vunpack.c.l.b16 %v824
  %v857 = vunpack.c.l.b16 %v825
  %v858 = vunpack.c.l.b16 %v826
  %v859 = vunpack.c.l.b16 %v827
  %v860 = vunpack.c.l.b16 %v828
  %v861 = vunpack.c.l.b16 %v829
  %v862 = vunpack.c.l.b16 %v830
  %v863 = vunpack.c.l.b16 %v831
  %v864 = vunpack.c.l.b16 %v832
  %v865 = vunpack.c.l.b16 %v833
  %v866 = vunpack.c.l.b16 %v834
  %v867 = vunpack.c.l.b16 %v835
  %v868 = vunpack.c.l.b16 %v836
  %v869 = vpack.c.b16 %v854, %v853
  %v870 = vpack.c.b16 %v856, %v855
  %v871 = vpack.c.b16 %v858, %v857
  %v872 = vpack.c.b16 %v860, %v859
  %v873 = vpack.c.b16 %v862, %v861
  %v874 = vpack.c.b16 %v864, %v863
  %v875 = vpack.c.b16 %v866, %v865
  %v876 = vpack.c.b16 %v868, %v867
  %885 = vmatpush.bf16.msra.mxu0 %v876
  %886 = vmatpush.bf16.msra.mxu0 %v875
  %887 = vmatpush.bf16.msra.mxu0 %v874
  %888 = vmatpush.bf16.msra.mxu0 %v873
  %889 = vmatpush.bf16.msra.mxu0 %v872
  %890 = vmatpush.bf16.msra.mxu0 %v871
  %891 = vmatpush.bf16.msra.mxu0 %v870
  %892 = vmatpush.bf16.msra.mxu0 %v869
  %893 = vmatmul.bf16.gmra.mxu0 %v815
  %v894 = vpop.f32.mrf.mxu0
  %v895 = vadd.f32 0.0, %v894
  %v896 = vpop.f32.mrf.mxu0
  %v897 = vadd.f32 0.0, %v896
  %898 = vmatmul.bf16.gmra.mxu0 %v816
  %v899 = vpop.f32.mrf.mxu0
  %v900 = vadd.f32 0.0, %v899
  %v901 = vpop.f32.mrf.mxu0
  %v902 = vadd.f32 0.0, %v901
  %903 = vmatmul.bf16.gmra.mxu0 %v817
  %v904 = vpop.f32.mrf.mxu0
  %v905 = vadd.f32 0.0, %v904
  %v906 = vpop.f32.mrf.mxu0
  %v907 = vadd.f32 0.0, %v906
  %908 = vmatmul.bf16.gmra.mxu0 %v818
  %v909 = vpop.f32.mrf.mxu0
  %v910 = vadd.f32 0.0, %v909
  %v911 = vpop.f32.mrf.mxu0
  %v912 = vadd.f32 0.0, %v911
  %913 = vmatmul.bf16.gmra.mxu0 %v819
  %v914 = vpop.f32.mrf.mxu0
  %v915 = vadd.f32 0.0, %v914
  %v916 = vpop.f32.mrf.mxu0
  %v917 = vadd.f32 0.0, %v916
  %918 = vdwg.mxu0
  %v919 = vadd.f32 %v771, %v895
  %v920 = vadd.f32 %v773, %v897
  %v921 = vadd.f32 %v776, %v900
  %v922 = vadd.f32 %v778, %v902
  %v923 = vadd.f32 %v781, %v905
  %v924 = vadd.f32 %v783, %v907
  %v925 = vadd.f32 %v786, %v910
  %v926 = vadd.f32 %v788, %v912
  %v927 = vadd.f32 %v791, %v915
  %v928 = vadd.f32 %v793, %v917
  %s929 = scalar_lea.vmem [#allocation2], 3
  %v930 = vld [vmem:[%s929] ss:$2 sm:$0xff]
  %s931 = scalar_lea.vmem [#allocation2], 19
  %v932 = vld [vmem:[%s931] ss:$2 sm:$0xff]
  %s933 = scalar_lea.vmem [#allocation2], 35
  %v934 = vld [vmem:[%s933] ss:$2 sm:$0xff]
  %s935 = scalar_lea.vmem [#allocation2], 51
  %v936 = vld [vmem:[%s935] ss:$2 sm:$0xff]
  %s937 = scalar_lea.vmem [#allocation2], 67
  %v938 = vld [vmem:[%s937] ss:$2 sm:$0xff]
  %s939 = scalar_lea.vmem [#allocation2], 83
  %v940 = vld [vmem:[%s939] ss:$2 sm:$0xff]
  %s941 = scalar_lea.vmem [#allocation2], 99
  %v942 = vld [vmem:[%s941] ss:$2 sm:$0xff]
  %s943 = scalar_lea.vmem [#allocation2], 115
  %v944 = vld [vmem:[%s943] ss:$2 sm:$0xff]
  %s945 = scalar_lea.vmem [#allocation2], 131
  %v946 = vld [vmem:[%s945] ss:$2 sm:$0xff]
  %s947 = scalar_lea.vmem [#allocation2], 147
  %v948 = vld [vmem:[%s947] ss:$2 sm:$0xff]
  %v949 = vpack.c.bf16 %v932, %v930
  %v950 = vpack.c.bf16 %v936, %v934
  %v951 = vpack.c.bf16 %v940, %v938
  %v952 = vpack.c.bf16 %v944, %v942
  %v953 = vpack.c.bf16 %v948, %v946
  %s954 = scalar_lea.vmem %s4, 192
  %v955 = vld [vmem:[%s954] sm:$0xf]
  %v956 = vld [vmem:[%s954 + $0x4] sm:$0xf]
  %v957 = vld [vmem:[%s954 + $0x8] sm:$0xf]
  %v958 = vld [vmem:[%s954 + $0xc] sm:$0xf]
  %v959 = vld [vmem:[%s954 + $0x10] sm:$0xf]
  %v960 = vld [vmem:[%s954 + $0x14] sm:$0xf]
  %v961 = vld [vmem:[%s954 + $0x18] sm:$0xf]
  %v962 = vld [vmem:[%s954 + $0x1c] sm:$0xf]
  %v963 = vld [vmem:[%s954 + $0x20] sm:$0xf]
  %v964 = vld [vmem:[%s954 + $0x24] sm:$0xf]
  %v965 = vld [vmem:[%s954 + $0x28] sm:$0xf]
  %v966 = vld [vmem:[%s954 + $0x2c] sm:$0xf]
  %v967 = vld [vmem:[%s954 + $0x30] sm:$0xf]
  %v968 = vld [vmem:[%s954 + $0x34] sm:$0xf]
  %v969 = vld [vmem:[%s954 + $0x38] sm:$0xf]
  %v970 = vld [vmem:[%s954 + $0x3c] sm:$0xf]
  %v987 = vunpack.c.l.b16 %v955
  %v988 = vunpack.c.l.b16 %v956
  %v989 = vunpack.c.l.b16 %v957
  %v990 = vunpack.c.l.b16 %v958
  %v991 = vunpack.c.l.b16 %v959
  %v992 = vunpack.c.l.b16 %v960
  %v993 = vunpack.c.l.b16 %v961
  %v994 = vunpack.c.l.b16 %v962
  %v995 = vunpack.c.l.b16 %v963
  %v996 = vunpack.c.l.b16 %v964
  %v997 = vunpack.c.l.b16 %v965
  %v998 = vunpack.c.l.b16 %v966
  %v999 = vunpack.c.l.b16 %v967
  %v1000 = vunpack.c.l.b16 %v968
  %v1001 = vunpack.c.l.b16 %v969
  %v1002 = vunpack.c.l.b16 %v970
  %v1003 = vpack.c.b16 %v988, %v987
  %v1004 = vpack.c.b16 %v990, %v989
  %v1005 = vpack.c.b16 %v992, %v991
  %v1006 = vpack.c.b16 %v994, %v993
  %v1007 = vpack.c.b16 %v996, %v995
  %v1008 = vpack.c.b16 %v998, %v997
  %v1009 = vpack.c.b16 %v1000, %v999
  %v1010 = vpack.c.b16 %v1002, %v1001
  %1019 = vmatpush.bf16.msra.mxu0 %v1010
  %1020 = vmatpush.bf16.msra.mxu0 %v1009
  %1021 = vmatpush.bf16.msra.mxu0 %v1008
  %1022 = vmatpush.bf16.msra.mxu0 %v1007
  %1023 = vmatpush.bf16.msra.mxu0 %v1006
  %1024 = vmatpush.bf16.msra.mxu0 %v1005
  %1025 = vmatpush.bf16.msra.mxu0 %v1004
  %1026 = vmatpush.bf16.msra.mxu0 %v1003
  %1027 = vmatmul.bf16.gmra.mxu0 %v949
  %v1028 = vpop.f32.mrf.mxu0
  %v1029 = vadd.f32 0.0, %v1028
  %v1030 = vpop.f32.mrf.mxu0
  %v1031 = vadd.f32 0.0, %v1030
  %1032 = vmatmul.bf16.gmra.mxu0 %v950
  %v1033 = vpop.f32.mrf.mxu0
  %v1034 = vadd.f32 0.0, %v1033
  %v1035 = vpop.f32.mrf.mxu0
  %v1036 = vadd.f32 0.0, %v1035
  %1037 = vmatmul.bf16.gmra.mxu0 %v951
  %v1038 = vpop.f32.mrf.mxu0
  %v1039 = vadd.f32 0.0, %v1038
  %v1040 = vpop.f32.mrf.mxu0
  %v1041 = vadd.f32 0.0, %v1040
  %1042 = vmatmul.bf16.gmra.mxu0 %v952
  %v1043 = vpop.f32.mrf.mxu0
  %v1044 = vadd.f32 0.0, %v1043
  %v1045 = vpop.f32.mrf.mxu0
  %v1046 = vadd.f32 0.0, %v1045
  %1047 = vmatmul.bf16.gmra.mxu0 %v953
  %v1048 = vpop.f32.mrf.mxu0
  %v1049 = vadd.f32 0.0, %v1048
  %v1050 = vpop.f32.mrf.mxu0
  %v1051 = vadd.f32 0.0, %v1050
  %1052 = vdwg.mxu0
  %v1053 = vadd.f32 %v919, %v1029
  %v1054 = vadd.f32 %v920, %v1031
  %v1055 = vadd.f32 %v921, %v1034
  %v1056 = vadd.f32 %v922, %v1036
  %v1057 = vadd.f32 %v923, %v1039
  %v1058 = vadd.f32 %v924, %v1041
  %v1059 = vadd.f32 %v925, %v1044
  %v1060 = vadd.f32 %v926, %v1046
  %v1061 = vadd.f32 %v927, %v1049
  %v1062 = vadd.f32 %v928, %v1051
  %s1063 = scalar_lea.vmem [#allocation2], 4
  %v1064 = vld [vmem:[%s1063] ss:$2 sm:$0xff]
  %s1065 = scalar_lea.vmem [#allocation2], 20
  %v1066 = vld [vmem:[%s1065] ss:$2 sm:$0xff]
  %s1067 = scalar_lea.vmem [#allocation2], 36
  %v1068 = vld [vmem:[%s1067] ss:$2 sm:$0xff]
  %s1069 = scalar_lea.vmem [#allocation2], 52
  %v1070 = vld [vmem:[%s1069] ss:$2 sm:$0xff]
  %s1071 = scalar_lea.vmem [#allocation2], 68
  %v1072 = vld [vmem:[%s1071] ss:$2 sm:$0xff]
  %s1073 = scalar_lea.vmem [#allocation2], 84
  %v1074 = vld [vmem:[%s1073] ss:$2 sm:$0xff]
  %s1075 = scalar_lea.vmem [#allocation2], 100
  %v1076 = vld [vmem:[%s1075] ss:$2 sm:$0xff]
  %s1077 = scalar_lea.vmem [#allocation2], 116
  %v1078 = vld [vmem:[%s1077] ss:$2 sm:$0xff]
  %s1079 = scalar_lea.vmem [#allocation2], 132
  %v1080 = vld [vmem:[%s1079] ss:$2 sm:$0xff]
  %s1081 = scalar_lea.vmem [#allocation2], 148
  %v1082 = vld [vmem:[%s1081] ss:$2 sm:$0xff]
  %v1083 = vpack.c.bf16 %v1066, %v1064
  %v1084 = vpack.c.bf16 %v1070, %v1068
  %v1085 = vpack.c.bf16 %v1074, %v1072
  %v1086 = vpack.c.bf16 %v1078, %v1076
  %v1087 = vpack.c.bf16 %v1082, %v1080
  %s1088 = scalar_lea.vmem %s4, 256
  %v1089 = vld [vmem:[%s1088] sm:$0xf]
  %v1090 = vld [vmem:[%s1088 + $0x4] sm:$0xf]
  %v1091 = vld [vmem:[%s1088 + $0x8] sm:$0xf]
  %v1092 = vld [vmem:[%s1088 + $0xc] sm:$0xf]
  %v1093 = vld [vmem:[%s1088 + $0x10] sm:$0xf]
  %v1094 = vld [vmem:[%s1088 + $0x14] sm:$0xf]
  %v1095 = vld [vmem:[%s1088 + $0x18] sm:$0xf]
  %v1096 = vld [vmem:[%s1088 + $0x1c] sm:$0xf]
  %v1097 = vld [vmem:[%s1088 + $0x20] sm:$0xf]
  %v1098 = vld [vmem:[%s1088 + $0x24] sm:$0xf]
  %v1099 = vld [vmem:[%s1088 + $0x28] sm:$0xf]
  %v1100 = vld [vmem:[%s1088 + $0x2c] sm:$0xf]
  %v1101 = vld [vmem:[%s1088 + $0x30] sm:$0xf]
  %v1102 = vld [vmem:[%s1088 + $0x34] sm:$0xf]
  %v1103 = vld [vmem:[%s1088 + $0x38] sm:$0xf]
  %v1104 = vld [vmem:[%s1088 + $0x3c] sm:$0xf]
  %v1121 = vunpack.c.l.b16 %v1089
  %v1122 = vunpack.c.l.b16 %v1090
  %v1123 = vunpack.c.l.b16 %v1091
  %v1124 = vunpack.c.l.b16 %v1092
  %v1125 = vunpack.c.l.b16 %v1093
  %v1126 = vunpack.c.l.b16 %v1094
  %v1127 = vunpack.c.l.b16 %v1095
  %v1128 = vunpack.c.l.b16 %v1096
  %v1129 = vunpack.c.l.b16 %v1097
  %v1130 = vunpack.c.l.b16 %v1098
  %v1131 = vunpack.c.l.b16 %v1099
  %v1132 = vunpack.c.l.b16 %v1100
  %v1133 = vunpack.c.l.b16 %v1101
  %v1134 = vunpack.c.l.b16 %v1102
  %v1135 = vunpack.c.l.b16 %v1103
  %v1136 = vunpack.c.l.b16 %v1104
  %v1137 = vpack.c.b16 %v1122, %v1121
  %v1138 = vpack.c.b16 %v1124, %v1123
  %v1139 = vpack.c.b16 %v1126, %v1125
  %v1140 = vpack.c.b16 %v1128, %v1127
  %v1141 = vpack.c.b16 %v1130, %v1129
  %v1142 = vpack.c.b16 %v1132, %v1131
  %v1143 = vpack.c.b16 %v1134, %v1133
  %v1144 = vpack.c.b16 %v1136, %v1135
  %1153 = vmatpush.bf16.msra.mxu0 %v1144
  %1154 = vmatpush.bf16.msra.mxu0 %v1143
  %1155 = vmatpush.bf16.msra.mxu0 %v1142
  %1156 = vmatpush.bf16.msra.mxu0 %v1141
  %1157 = vmatpush.bf16.msra.mxu0 %v1140
  %1158 = vmatpush.bf16.msra.mxu0 %v1139
  %1159 = vmatpush.bf16.msra.mxu0 %v1138
  %1160 = vmatpush.bf16.msra.mxu0 %v1137
  %1161 = vmatmul.bf16.gmra.mxu0 %v1083
  %v1162 = vpop.f32.mrf.mxu0
  %v1163 = vadd.f32 0.0, %v1162
  %v1164 = vpop.f32.mrf.mxu0
  %v1165 = vadd.f32 0.0, %v1164
  %1166 = vmatmul.bf16.gmra.mxu0 %v1084
  %v1167 = vpop.f32.mrf.mxu0
  %v1168 = vadd.f32 0.0, %v1167
  %v1169 = vpop.f32.mrf.mxu0
  %v1170 = vadd.f32 0.0, %v1169
  %1171 = vmatmul.bf16.gmra.mxu0 %v1085
  %v1172 = vpop.f32.mrf.mxu0
  %v1173 = vadd.f32 0.0, %v1172
  %v1174 = vpop.f32.mrf.mxu0
  %v1175 = vadd.f32 0.0, %v1174
  %1176 = vmatmul.bf16.gmra.mxu0 %v1086
  %v1177 = vpop.f32.mrf.mxu0
  %v1178 = vadd.f32 0.0, %v1177
  %v1179 = vpop.f32.mrf.mxu0
  %v1180 = vadd.f32 0.0, %v1179
  %1181 = vmatmul.bf16.gmra.mxu0 %v1087
  %v1182 = vpop.f32.mrf.mxu0
  %v1183 = vadd.f32 0.0, %v1182
  %v1184 = vpop.f32.mrf.mxu0
  %v1185 = vadd.f32 0.0, %v1184
  %1186 = vdwg.mxu0
  %v1187 = vadd.f32 %v1053, %v1163
  %v1188 = vadd.f32 %v1054, %v1165
  %v1189 = vadd.f32 %v1055, %v1168
  %v1190 = vadd.f32 %v1056, %v1170
  %v1191 = vadd.f32 %v1057, %v1173
  %v1192 = vadd.f32 %v1058, %v1175
  %v1193 = vadd.f32 %v1059, %v1178
  %v1194 = vadd.f32 %v1060, %v1180
  %v1195 = vadd.f32 %v1061, %v1183
  %v1196 = vadd.f32 %v1062, %v1185
  %s1197 = scalar_lea.vmem [#allocation2], 10
  %v1198 = vld [vmem:[%s1197] ss:$2 sm:$0xff]
  %s1199 = scalar_lea.vmem [#allocation2], 26
  %v1200 = vld [vmem:[%s1199] ss:$2 sm:$0xff]
  %s1201 = scalar_lea.vmem [#allocation2], 42
  %v1202 = vld [vmem:[%s1201] ss:$2 sm:$0xff]
  %s1203 = scalar_lea.vmem [#allocation2], 58
  %v1204 = vld [vmem:[%s1203] ss:$2 sm:$0xff]
  %s1205 = scalar_lea.vmem [#allocation2], 74
  %v1206 = vld [vmem:[%s1205] ss:$2 sm:$0xff]
  %s1207 = scalar_lea.vmem [#allocation2], 90
  %v1208 = vld [vmem:[%s1207] ss:$2 sm:$0xff]
  %s1209 = scalar_lea.vmem [#allocation2], 106
  %v1210 = vld [vmem:[%s1209] ss:$2 sm:$0xff]
  %s1211 = scalar_lea.vmem [#allocation2], 122
  %v1212 = vld [vmem:[%s1211] ss:$2 sm:$0xff]
  %s1213 = scalar_lea.vmem [#allocation2], 138
  %v1214 = vld [vmem:[%s1213] ss:$2 sm:$0xff]
  %s1215 = scalar_lea.vmem [#allocation2], 154
  %v1216 = vld [vmem:[%s1215] ss:$2 sm:$0xff]
  %v1217 = vpack.c.bf16 %v1200, %v1198
  %v1218 = vpack.c.bf16 %v1204, %v1202
  %v1219 = vpack.c.bf16 %v1208, %v1206
  %v1220 = vpack.c.bf16 %v1212, %v1210
  %v1221 = vpack.c.bf16 %v1216, %v1214
  %s1222 = scalar_lea.vmem %s4, 320
  %v1223 = vld [vmem:[%s1222] sm:$0xf]
  %v1224 = vld [vmem:[%s1222 + $0x4] sm:$0xf]
  %v1225 = vld [vmem:[%s1222 + $0x8] sm:$0xf]
  %v1226 = vld [vmem:[%s1222 + $0xc] sm:$0xf]
  %v1227 = vld [vmem:[%s1222 + $0x10] sm:$0xf]
  %v1228 = vld [vmem:[%s1222 + $0x14] sm:$0xf]
  %v1229 = vld [vmem:[%s1222 + $0x18] sm:$0xf]
  %v1230 = vld [vmem:[%s1222 + $0x1c] sm:$0xf]
  %v1231 = vld [vmem:[%s1222 + $0x20] sm:$0xf]
  %v1232 = vld [vmem:[%s1222 + $0x24] sm:$0xf]
  %v1233 = vld [vmem:[%s1222 + $0x28] sm:$0xf]
  %v1234 = vld [vmem:[%s1222 + $0x2c] sm:$0xf]
  %v1235 = vld [vmem:[%s1222 + $0x30] sm:$0xf]
  %v1236 = vld [vmem:[%s1222 + $0x34] sm:$0xf]
  %v1237 = vld [vmem:[%s1222 + $0x38] sm:$0xf]
  %v1238 = vld [vmem:[%s1222 + $0x3c] sm:$0xf]
  %v1255 = vunpack.c.l.b16 %v1223
  %v1256 = vunpack.c.l.b16 %v1224
  %v1257 = vunpack.c.l.b16 %v1225
  %v1258 = vunpack.c.l.b16 %v1226
  %v1259 = vunpack.c.l.b16 %v1227
  %v1260 = vunpack.c.l.b16 %v1228
  %v1261 = vunpack.c.l.b16 %v1229
  %v1262 = vunpack.c.l.b16 %v1230
  %v1263 = vunpack.c.l.b16 %v1231
  %v1264 = vunpack.c.l.b16 %v1232
  %v1265 = vunpack.c.l.b16 %v1233
  %v1266 = vunpack.c.l.b16 %v1234
  %v1267 = vunpack.c.l.b16 %v1235
  %v1268 = vunpack.c.l.b16 %v1236
  %v1269 = vunpack.c.l.b16 %v1237
  %v1270 = vunpack.c.l.b16 %v1238
  %v1271 = vpack.c.b16 %v1256, %v1255
  %v1272 = vpack.c.b16 %v1258, %v1257
  %v1273 = vpack.c.b16 %v1260, %v1259
  %v1274 = vpack.c.b16 %v1262, %v1261
  %v1275 = vpack.c.b16 %v1264, %v1263
  %v1276 = vpack.c.b16 %v1266, %v1265
  %v1277 = vpack.c.b16 %v1268, %v1267
  %v1278 = vpack.c.b16 %v1270, %v1269
  %1287 = vmatpush.bf16.msra.mxu0 %v1278
  %1288 = vmatpush.bf16.msra.mxu0 %v1277
  %1289 = vmatpush.bf16.msra.mxu0 %v1276
  %1290 = vmatpush.bf16.msra.mxu0 %v1275
  %1291 = vmatpush.bf16.msra.mxu0 %v1274
  %1292 = vmatpush.bf16.msra.mxu0 %v1273
  %1293 = vmatpush.bf16.msra.mxu0 %v1272
  %1294 = vmatpush.bf16.msra.mxu0 %v1271
  %1295 = vmatmul.bf16.gmra.mxu0 %v1217
  %v1296 = vpop.f32.mrf.mxu0
  %v1297 = vadd.f32 0.0, %v1296
  %v1298 = vpop.f32.mrf.mxu0
  %v1299 = vadd.f32 0.0, %v1298
  %1300 = vmatmul.bf16.gmra.mxu0 %v1218
  %v1301 = vpop.f32.mrf.mxu0
  %v1302 = vadd.f32 0.0, %v1301
  %v1303 = vpop.f32.mrf.mxu0
  %v1304 = vadd.f32 0.0, %v1303
  %1305 = vmatmul.bf16.gmra.mxu0 %v1219
  %v1306 = vpop.f32.mrf.mxu0
  %v1307 = vadd.f32 0.0, %v1306
  %v1308 = vpop.f32.mrf.mxu0
  %v1309 = vadd.f32 0.0, %v1308
  %1310 = vmatmul.bf16.gmra.mxu0 %v1220
  %v1311 = vpop.f32.mrf.mxu0
  %v1312 = vadd.f32 0.0, %v1311
  %v1313 = vpop.f32.mrf.mxu0
  %v1314 = vadd.f32 0.0, %v1313
  %1315 = vmatmul.bf16.gmra.mxu0 %v1221
  %v1316 = vpop.f32.mrf.mxu0
  %v1317 = vadd.f32 0.0, %v1316
  %v1318 = vpop.f32.mrf.mxu0
  %v1319 = vadd.f32 0.0, %v1318
  %1320 = vdwg.mxu0
  %v1321 = vadd.f32 %v1187, %v1297
  %v1322 = vadd.f32 %v1188, %v1299
  %v1323 = vadd.f32 %v1189, %v1302
  %v1324 = vadd.f32 %v1190, %v1304
  %v1325 = vadd.f32 %v1191, %v1307
  %v1326 = vadd.f32 %v1192, %v1309
  %v1327 = vadd.f32 %v1193, %v1312
  %v1328 = vadd.f32 %v1194, %v1314
  %v1329 = vadd.f32 %v1195, %v1317
  %v1330 = vadd.f32 %v1196, %v1319
  %s1331 = scalar_lea.vmem [#allocation2], 11
  %v1332 = vld [vmem:[%s1331] ss:$2 sm:$0xff]
  %s1333 = scalar_lea.vmem [#allocation2], 27
  %v1334 = vld [vmem:[%s1333] ss:$2 sm:$0xff]
  %s1335 = scalar_lea.vmem [#allocation2], 43
  %v1336 = vld [vmem:[%s1335] ss:$2 sm:$0xff]
  %s1337 = scalar_lea.vmem [#allocation2], 59
  %v1338 = vld [vmem:[%s1337] ss:$2 sm:$0xff]
  %s1339 = scalar_lea.vmem [#allocation2], 75
  %v1340 = vld [vmem:[%s1339] ss:$2 sm:$0xff]
  %s1341 = scalar_lea.vmem [#allocation2], 91
  %v1342 = vld [vmem:[%s1341] ss:$2 sm:$0xff]
  %s1343 = scalar_lea.vmem [#allocation2], 107
  %v1344 = vld [vmem:[%s1343] ss:$2 sm:$0xff]
  %s1345 = scalar_lea.vmem [#allocation2], 123
  %v1346 = vld [vmem:[%s1345] ss:$2 sm:$0xff]
  %s1347 = scalar_lea.vmem [#allocation2], 139
  %v1348 = vld [vmem:[%s1347] ss:$2 sm:$0xff]
  %s1349 = scalar_lea.vmem [#allocation2], 155
  %v1350 = vld [vmem:[%s1349] ss:$2 sm:$0xff]
  %v1351 = vpack.c.bf16 %v1334, %v1332
  %v1352 = vpack.c.bf16 %v1338, %v1336
  %v1353 = vpack.c.bf16 %v1342, %v1340
  %v1354 = vpack.c.bf16 %v1346, %v1344
  %v1355 = vpack.c.bf16 %v1350, %v1348
  %s1356 = scalar_lea.vmem %s4, 384
  %v1357 = vld [vmem:[%s1356] sm:$0xf]
  %v1358 = vld [vmem:[%s1356 + $0x4] sm:$0xf]
  %v1359 = vld [vmem:[%s1356 + $0x8] sm:$0xf]
  %v1360 = vld [vmem:[%s1356 + $0xc] sm:$0xf]
  %v1361 = vld [vmem:[%s1356 + $0x10] sm:$0xf]
  %v1362 = vld [vmem:[%s1356 + $0x14] sm:$0xf]
  %v1363 = vld [vmem:[%s1356 + $0x18] sm:$0xf]
  %v1364 = vld [vmem:[%s1356 + $0x1c] sm:$0xf]
  %v1365 = vld [vmem:[%s1356 + $0x20] sm:$0xf]
  %v1366 = vld [vmem:[%s1356 + $0x24] sm:$0xf]
  %v1367 = vld [vmem:[%s1356 + $0x28] sm:$0xf]
  %v1368 = vld [vmem:[%s1356 + $0x2c] sm:$0xf]
  %v1369 = vld [vmem:[%s1356 + $0x30] sm:$0xf]
  %v1370 = vld [vmem:[%s1356 + $0x34] sm:$0xf]
  %v1371 = vld [vmem:[%s1356 + $0x38] sm:$0xf]
  %v1372 = vld [vmem:[%s1356 + $0x3c] sm:$0xf]
  %v1389 = vunpack.c.l.b16 %v1357
  %v1390 = vunpack.c.l.b16 %v1358
  %v1391 = vunpack.c.l.b16 %v1359
  %v1392 = vunpack.c.l.b16 %v1360
  %v1393 = vunpack.c.l.b16 %v1361
  %v1394 = vunpack.c.l.b16 %v1362
  %v1395 = vunpack.c.l.b16 %v1363
  %v1396 = vunpack.c.l.b16 %v1364
  %v1397 = vunpack.c.l.b16 %v1365
  %v1398 = vunpack.c.l.b16 %v1366
  %v1399 = vunpack.c.l.b16 %v1367
  %v1400 = vunpack.c.l.b16 %v1368
  %v1401 = vunpack.c.l.b16 %v1369
  %v1402 = vunpack.c.l.b16 %v1370
  %v1403 = vunpack.c.l.b16 %v1371
  %v1404 = vunpack.c.l.b16 %v1372
  %v1405 = vpack.c.b16 %v1390, %v1389
  %v1406 = vpack.c.b16 %v1392, %v1391
  %v1407 = vpack.c.b16 %v1394, %v1393
  %v1408 = vpack.c.b16 %v1396, %v1395
  %v1409 = vpack.c.b16 %v1398, %v1397
  %v1410 = vpack.c.b16 %v1400, %v1399
  %v1411 = vpack.c.b16 %v1402, %v1401
  %v1412 = vpack.c.b16 %v1404, %v1403
  %1421 = vmatpush.bf16.msra.mxu0 %v1412
  %1422 = vmatpush.bf16.msra.mxu0 %v1411
  %1423 = vmatpush.bf16.msra.mxu0 %v1410
  %1424 = vmatpush.bf16.msra.mxu0 %v1409
  %1425 = vmatpush.bf16.msra.mxu0 %v1408
  %1426 = vmatpush.bf16.msra.mxu0 %v1407
  %1427 = vmatpush.bf16.msra.mxu0 %v1406
  %1428 = vmatpush.bf16.msra.mxu0 %v1405
  %1429 = vmatmul.bf16.gmra.mxu0 %v1351
  %v1430 = vpop.f32.mrf.mxu0
  %v1431 = vadd.f32 0.0, %v1430
  %v1432 = vpop.f32.mrf.mxu0
  %v1433 = vadd.f32 0.0, %v1432
  %1434 = vmatmul.bf16.gmra.mxu0 %v1352
  %v1435 = vpop.f32.mrf.mxu0
  %v1436 = vadd.f32 0.0, %v1435
  %v1437 = vpop.f32.mrf.mxu0
  %v1438 = vadd.f32 0.0, %v1437
  %1439 = vmatmul.bf16.gmra.mxu0 %v1353
  %v1440 = vpop.f32.mrf.mxu0
  %v1441 = vadd.f32 0.0, %v1440
  %v1442 = vpop.f32.mrf.mxu0
  %v1443 = vadd.f32 0.0, %v1442
  %1444 = vmatmul.bf16.gmra.mxu0 %v1354
  %v1445 = vpop.f32.mrf.mxu0
  %v1446 = vadd.f32 0.0, %v1445
  %v1447 = vpop.f32.mrf.mxu0
  %v1448 = vadd.f32 0.0, %v1447
  %1449 = vmatmul.bf16.gmra.mxu0 %v1355
  %v1450 = vpop.f32.mrf.mxu0
  %v1451 = vadd.f32 0.0, %v1450
  %v1452 = vpop.f32.mrf.mxu0
  %v1453 = vadd.f32 0.0, %v1452
  %1454 = vdwg.mxu0
  %v1455 = vadd.f32 %v1321, %v1431
  %v1456 = vadd.f32 %v1322, %v1433
  %v1457 = vadd.f32 %v1323, %v1436
  %v1458 = vadd.f32 %v1324, %v1438
  %v1459 = vadd.f32 %v1325, %v1441
  %v1460 = vadd.f32 %v1326, %v1443
  %v1461 = vadd.f32 %v1327, %v1446
  %v1462 = vadd.f32 %v1328, %v1448
  %v1463 = vadd.f32 %v1329, %v1451
  %v1464 = vadd.f32 %v1330, %v1453
  %s1465 = scalar_lea.vmem [#allocation2], 12
  %v1466 = vld [vmem:[%s1465] ss:$2 sm:$0xff]
  %s1467 = scalar_lea.vmem [#allocation2], 28
  %v1468 = vld [vmem:[%s1467] ss:$2 sm:$0xff]
  %s1469 = scalar_lea.vmem [#allocation2], 44
  %v1470 = vld [vmem:[%s1469] ss:$2 sm:$0xff]
  %s1471 = scalar_lea.vmem [#allocation2], 60
  %v1472 = vld [vmem:[%s1471] ss:$2 sm:$0xff]
  %s1473 = scalar_lea.vmem [#allocation2], 76
  %v1474 = vld [vmem:[%s1473] ss:$2 sm:$0xff]
  %s1475 = scalar_lea.vmem [#allocation2], 92
  %v1476 = vld [vmem:[%s1475] ss:$2 sm:$0xff]
  %s1477 = scalar_lea.vmem [#allocation2], 108
  %v1478 = vld [vmem:[%s1477] ss:$2 sm:$0xff]
  %s1479 = scalar_lea.vmem [#allocation2], 124
  %v1480 = vld [vmem:[%s1479] ss:$2 sm:$0xff]
  %s1481 = scalar_lea.vmem [#allocation2], 140
  %v1482 = vld [vmem:[%s1481] ss:$2 sm:$0xff]
  %s1483 = scalar_lea.vmem [#allocation2], 156
  %v1484 = vld [vmem:[%s1483] ss:$2 sm:$0xff]
  %v1485 = vpack.c.bf16 %v1468, %v1466
  %v1486 = vpack.c.bf16 %v1472, %v1470
  %v1487 = vpack.c.bf16 %v1476, %v1474
  %v1488 = vpack.c.bf16 %v1480, %v1478
  %v1489 = vpack.c.bf16 %v1484, %v1482
  %s1490 = scalar_lea.vmem %s4, 448
  %v1491 = vld [vmem:[%s1490] sm:$0xf]
  %v1492 = vld [vmem:[%s1490 + $0x4] sm:$0xf]
  %v1493 = vld [vmem:[%s1490 + $0x8] sm:$0xf]
  %v1494 = vld [vmem:[%s1490 + $0xc] sm:$0xf]
  %v1495 = vld [vmem:[%s1490 + $0x10] sm:$0xf]
  %v1496 = vld [vmem:[%s1490 + $0x14] sm:$0xf]
  %v1497 = vld [vmem:[%s1490 + $0x18] sm:$0xf]
  %v1498 = vld [vmem:[%s1490 + $0x1c] sm:$0xf]
  %v1499 = vld [vmem:[%s1490 + $0x20] sm:$0xf]
  %v1500 = vld [vmem:[%s1490 + $0x24] sm:$0xf]
  %v1501 = vld [vmem:[%s1490 + $0x28] sm:$0xf]
  %v1502 = vld [vmem:[%s1490 + $0x2c] sm:$0xf]
  %v1503 = vld [vmem:[%s1490 + $0x30] sm:$0xf]
  %v1504 = vld [vmem:[%s1490 + $0x34] sm:$0xf]
  %v1505 = vld [vmem:[%s1490 + $0x38] sm:$0xf]
  %v1506 = vld [vmem:[%s1490 + $0x3c] sm:$0xf]
  %v1523 = vunpack.c.l.b16 %v1491
  %v1524 = vunpack.c.l.b16 %v1492
  %v1525 = vunpack.c.l.b16 %v1493
  %v1526 = vunpack.c.l.b16 %v1494
  %v1527 = vunpack.c.l.b16 %v1495
  %v1528 = vunpack.c.l.b16 %v1496
  %v1529 = vunpack.c.l.b16 %v1497
  %v1530 = vunpack.c.l.b16 %v1498
  %v1531 = vunpack.c.l.b16 %v1499
  %v1532 = vunpack.c.l.b16 %v1500
  %v1533 = vunpack.c.l.b16 %v1501
  %v1534 = vunpack.c.l.b16 %v1502
  %v1535 = vunpack.c.l.b16 %v1503
  %v1536 = vunpack.c.l.b16 %v1504
  %v1537 = vunpack.c.l.b16 %v1505
  %v1538 = vunpack.c.l.b16 %v1506
  %v1539 = vpack.c.b16 %v1524, %v1523
  %v1540 = vpack.c.b16 %v1526, %v1525
  %v1541 = vpack.c.b16 %v1528, %v1527
  %v1542 = vpack.c.b16 %v1530, %v1529
  %v1543 = vpack.c.b16 %v1532, %v1531
  %v1544 = vpack.c.b16 %v1534, %v1533
  %v1545 = vpack.c.b16 %v1536, %v1535
  %v1546 = vpack.c.b16 %v1538, %v1537
  %1555 = vmatpush.bf16.msra.mxu0 %v1546
  %1556 = vmatpush.bf16.msra.mxu0 %v1545
  %1557 = vmatpush.bf16.msra.mxu0 %v1544
  %1558 = vmatpush.bf16.msra.mxu0 %v1543
  %1559 = vmatpush.bf16.msra.mxu0 %v1542
  %1560 = vmatpush.bf16.msra.mxu0 %v1541
  %1561 = vmatpush.bf16.msra.mxu0 %v1540
  %1562 = vmatpush.bf16.msra.mxu0 %v1539
  %1563 = vmatmul.bf16.gmra.mxu0 %v1485
  %v1564 = vpop.f32.mrf.mxu0
  %v1565 = vadd.f32 0.0, %v1564
  %v1566 = vpop.f32.mrf.mxu0
  %v1567 = vadd.f32 0.0, %v1566
  %1568 = vmatmul.bf16.gmra.mxu0 %v1486
  %v1569 = vpop.f32.mrf.mxu0
  %v1570 = vadd.f32 0.0, %v1569
  %v1571 = vpop.f32.mrf.mxu0
  %v1572 = vadd.f32 0.0, %v1571
  %1573 = vmatmul.bf16.gmra.mxu0 %v1487
  %v1574 = vpop.f32.mrf.mxu0
  %v1575 = vadd.f32 0.0, %v1574
  %v1576 = vpop.f32.mrf.mxu0
  %v1577 = vadd.f32 0.0, %v1576
  %1578 = vmatmul.bf16.gmra.mxu0 %v1488
  %v1579 = vpop.f32.mrf.mxu0
  %v1580 = vadd.f32 0.0, %v1579
  %v1581 = vpop.f32.mrf.mxu0
  %v1582 = vadd.f32 0.0, %v1581
  %1583 = vmatmul.bf16.gmra.mxu0 %v1489
  %v1584 = vpop.f32.mrf.mxu0
  %v1585 = vadd.f32 0.0, %v1584
  %v1586 = vpop.f32.mrf.mxu0
  %v1587 = vadd.f32 0.0, %v1586
  %1588 = vdwg.mxu0
  %v1589 = vadd.f32 %v1455, %v1565
  %v1590 = vadd.f32 %v1456, %v1567
  %v1591 = vadd.f32 %v1457, %v1570
  %v1592 = vadd.f32 %v1458, %v1572
  %v1593 = vadd.f32 %v1459, %v1575
  %v1594 = vadd.f32 %v1460, %v1577
  %v1595 = vadd.f32 %v1461, %v1580
  %v1596 = vadd.f32 %v1462, %v1582
  %v1597 = vadd.f32 %v1463, %v1585
  %v1598 = vadd.f32 %v1464, %v1587
  %s1599 = scalar_lea.vmem [#allocation2], 13
  %v1600 = vld [vmem:[%s1599] ss:$2 sm:$0xff]
  %s1601 = scalar_lea.vmem [#allocation2], 29
  %v1602 = vld [vmem:[%s1601] ss:$2 sm:$0xff]
  %s1603 = scalar_lea.vmem [#allocation2], 45
  %v1604 = vld [vmem:[%s1603] ss:$2 sm:$0xff]
  %s1605 = scalar_lea.vmem [#allocation2], 61
  %v1606 = vld [vmem:[%s1605] ss:$2 sm:$0xff]
  %s1607 = scalar_lea.vmem [#allocation2], 77
  %v1608 = vld [vmem:[%s1607] ss:$2 sm:$0xff]
  %s1609 = scalar_lea.vmem [#allocation2], 93
  %v1610 = vld [vmem:[%s1609] ss:$2 sm:$0xff]
  %s1611 = scalar_lea.vmem [#allocation2], 109
  %v1612 = vld [vmem:[%s1611] ss:$2 sm:$0xff]
  %s1613 = scalar_lea.vmem [#allocation2], 125
  %v1614 = vld [vmem:[%s1613] ss:$2 sm:$0xff]
  %s1615 = scalar_lea.vmem [#allocation2], 141
  %v1616 = vld [vmem:[%s1615] ss:$2 sm:$0xff]
  %s1617 = scalar_lea.vmem [#allocation2], 157
  %v1618 = vld [vmem:[%s1617] ss:$2 sm:$0xff]
  %v1619 = vpack.c.bf16 %v1602, %v1600
  %v1620 = vpack.c.bf16 %v1606, %v1604
  %v1621 = vpack.c.bf16 %v1610, %v1608
  %v1622 = vpack.c.bf16 %v1614, %v1612
  %v1623 = vpack.c.bf16 %v1618, %v1616
  %s1624 = scalar_lea.vmem %s4, 512
  %v1625 = vld [vmem:[%s1624] sm:$0xf]
  %v1626 = vld [vmem:[%s1624 + $0x4] sm:$0xf]
  %v1627 = vld [vmem:[%s1624 + $0x8] sm:$0xf]
  %v1628 = vld [vmem:[%s1624 + $0xc] sm:$0xf]
  %v1629 = vld [vmem:[%s1624 + $0x10] sm:$0xf]
  %v1630 = vld [vmem:[%s1624 + $0x14] sm:$0xf]
  %v1631 = vld [vmem:[%s1624 + $0x18] sm:$0xf]
  %v1632 = vld [vmem:[%s1624 + $0x1c] sm:$0xf]
  %v1633 = vld [vmem:[%s1624 + $0x20] sm:$0xf]
  %v1634 = vld [vmem:[%s1624 + $0x24] sm:$0xf]
  %v1635 = vld [vmem:[%s1624 + $0x28] sm:$0xf]
  %v1636 = vld [vmem:[%s1624 + $0x2c] sm:$0xf]
  %v1637 = vld [vmem:[%s1624 + $0x30] sm:$0xf]
  %v1638 = vld [vmem:[%s1624 + $0x34] sm:$0xf]
  %v1639 = vld [vmem:[%s1624 + $0x38] sm:$0xf]
  %v1640 = vld [vmem:[%s1624 + $0x3c] sm:$0xf]
  %v1657 = vunpack.c.l.b16 %v1625
  %v1658 = vunpack.c.l.b16 %v1626
  %v1659 = vunpack.c.l.b16 %v1627
  %v1660 = vunpack.c.l.b16 %v1628
  %v1661 = vunpack.c.l.b16 %v1629
  %v1662 = vunpack.c.l.b16 %v1630
  %v1663 = vunpack.c.l.b16 %v1631
  %v1664 = vunpack.c.l.b16 %v1632
  %v1665 = vunpack.c.l.b16 %v1633
  %v1666 = vunpack.c.l.b16 %v1634
  %v1667 = vunpack.c.l.b16 %v1635
  %v1668 = vunpack.c.l.b16 %v1636
  %v1669 = vunpack.c.l.b16 %v1637
  %v1670 = vunpack.c.l.b16 %v1638
  %v1671 = vunpack.c.l.b16 %v1639
  %v1672 = vunpack.c.l.b16 %v1640
  %v1673 = vpack.c.b16 %v1658, %v1657
  %v1674 = vpack.c.b16 %v1660, %v1659
  %v1675 = vpack.c.b16 %v1662, %v1661
  %v1676 = vpack.c.b16 %v1664, %v1663
  %v1677 = vpack.c.b16 %v1666, %v1665
  %v1678 = vpack.c.b16 %v1668, %v1667
  %v1679 = vpack.c.b16 %v1670, %v1669
  %v1680 = vpack.c.b16 %v1672, %v1671
  %1689 = vmatpush.bf16.msra.mxu0 %v1680
  %1690 = vmatpush.bf16.msra.mxu0 %v1679
  %1691 = vmatpush.bf16.msra.mxu0 %v1678
  %1692 = vmatpush.bf16.msra.mxu0 %v1677
  %1693 = vmatpush.bf16.msra.mxu0 %v1676
  %1694 = vmatpush.bf16.msra.mxu0 %v1675
  %1695 = vmatpush.bf16.msra.mxu0 %v1674
  %1696 = vmatpush.bf16.msra.mxu0 %v1673
  %1697 = vmatmul.bf16.gmra.mxu0 %v1619
  %v1698 = vpop.f32.mrf.mxu0
  %v1699 = vadd.f32 0.0, %v1698
  %v1700 = vpop.f32.mrf.mxu0
  %v1701 = vadd.f32 0.0, %v1700
  %1702 = vmatmul.bf16.gmra.mxu0 %v1620
  %v1703 = vpop.f32.mrf.mxu0
  %v1704 = vadd.f32 0.0, %v1703
  %v1705 = vpop.f32.mrf.mxu0
  %v1706 = vadd.f32 0.0, %v1705
  %1707 = vmatmul.bf16.gmra.mxu0 %v1621
  %v1708 = vpop.f32.mrf.mxu0
  %v1709 = vadd.f32 0.0, %v1708
  %v1710 = vpop.f32.mrf.mxu0
  %v1711 = vadd.f32 0.0, %v1710
  %1712 = vmatmul.bf16.gmra.mxu0 %v1622
  %v1713 = vpop.f32.mrf.mxu0
  %v1714 = vadd.f32 0.0, %v1713
  %v1715 = vpop.f32.mrf.mxu0
  %v1716 = vadd.f32 0.0, %v1715
  %1717 = vmatmul.bf16.gmra.mxu0 %v1623
  %v1718 = vpop.f32.mrf.mxu0
  %v1719 = vadd.f32 0.0, %v1718
  %v1720 = vpop.f32.mrf.mxu0
  %v1721 = vadd.f32 0.0, %v1720
  %1722 = vdwg.mxu0
  %v1723 = vadd.f32 %v1589, %v1699
  %v1724 = vadd.f32 %v1590, %v1701
  %v1725 = vadd.f32 %v1591, %v1704
  %v1726 = vadd.f32 %v1592, %v1706
  %v1727 = vadd.f32 %v1593, %v1709
  %v1728 = vadd.f32 %v1594, %v1711
  %v1729 = vadd.f32 %v1595, %v1714
  %v1730 = vadd.f32 %v1596, %v1716
  %v1731 = vadd.f32 %v1597, %v1719
  %v1732 = vadd.f32 %v1598, %v1721
  %s1733 = scalar_lea.vmem [#allocation2], 14
  %v1734 = vld [vmem:[%s1733] ss:$2 sm:$0xff]
  %s1735 = scalar_lea.vmem [#allocation2], 30
  %v1736 = vld [vmem:[%s1735] ss:$2 sm:$0xff]
  %s1737 = scalar_lea.vmem [#allocation2], 46
  %v1738 = vld [vmem:[%s1737] ss:$2 sm:$0xff]
  %s1739 = scalar_lea.vmem [#allocation2], 62
  %v1740 = vld [vmem:[%s1739] ss:$2 sm:$0xff]
  %s1741 = scalar_lea.vmem [#allocation2], 78
  %v1742 = vld [vmem:[%s1741] ss:$2 sm:$0xff]
  %s1743 = scalar_lea.vmem [#allocation2], 94
  %v1744 = vld [vmem:[%s1743] ss:$2 sm:$0xff]
  %s1745 = scalar_lea.vmem [#allocation2], 110
  %v1746 = vld [vmem:[%s1745] ss:$2 sm:$0xff]
  %s1747 = scalar_lea.vmem [#allocation2], 126
  %v1748 = vld [vmem:[%s1747] ss:$2 sm:$0xff]
  %s1749 = scalar_lea.vmem [#allocation2], 142
  %v1750 = vld [vmem:[%s1749] ss:$2 sm:$0xff]
  %s1751 = scalar_lea.vmem [#allocation2], 158
  %v1752 = vld [vmem:[%s1751] ss:$2 sm:$0xff]
  %v1753 = vpack.c.bf16 %v1736, %v1734
  %v1754 = vpack.c.bf16 %v1740, %v1738
  %v1755 = vpack.c.bf16 %v1744, %v1742
  %v1756 = vpack.c.bf16 %v1748, %v1746
  %v1757 = vpack.c.bf16 %v1752, %v1750
  %s1758 = scalar_lea.vmem %s4, 576
  %v1759 = vld [vmem:[%s1758] sm:$0xf]
  %v1760 = vld [vmem:[%s1758 + $0x4] sm:$0xf]
  %v1761 = vld [vmem:[%s1758 + $0x8] sm:$0xf]
  %v1762 = vld [vmem:[%s1758 + $0xc] sm:$0xf]
  %v1763 = vld [vmem:[%s1758 + $0x10] sm:$0xf]
  %v1764 = vld [vmem:[%s1758 + $0x14] sm:$0xf]
  %v1765 = vld [vmem:[%s1758 + $0x18] sm:$0xf]
  %v1766 = vld [vmem:[%s1758 + $0x1c] sm:$0xf]
  %v1767 = vld [vmem:[%s1758 + $0x20] sm:$0xf]
  %v1768 = vld [vmem:[%s1758 + $0x24] sm:$0xf]
  %v1769 = vld [vmem:[%s1758 + $0x28] sm:$0xf]
  %v1770 = vld [vmem:[%s1758 + $0x2c] sm:$0xf]
  %v1771 = vld [vmem:[%s1758 + $0x30] sm:$0xf]
  %v1772 = vld [vmem:[%s1758 + $0x34] sm:$0xf]
  %v1773 = vld [vmem:[%s1758 + $0x38] sm:$0xf]
  %v1774 = vld [vmem:[%s1758 + $0x3c] sm:$0xf]
  %v1791 = vunpack.c.l.b16 %v1759
  %v1792 = vunpack.c.l.b16 %v1760
  %v1793 = vunpack.c.l.b16 %v1761
  %v1794 = vunpack.c.l.b16 %v1762
  %v1795 = vunpack.c.l.b16 %v1763
  %v1796 = vunpack.c.l.b16 %v1764
  %v1797 = vunpack.c.l.b16 %v1765
  %v1798 = vunpack.c.l.b16 %v1766
  %v1799 = vunpack.c.l.b16 %v1767
  %v1800 = vunpack.c.l.b16 %v1768
  %v1801 = vunpack.c.l.b16 %v1769
  %v1802 = vunpack.c.l.b16 %v1770
  %v1803 = vunpack.c.l.b16 %v1771
  %v1804 = vunpack.c.l.b16 %v1772
  %v1805 = vunpack.c.l.b16 %v1773
  %v1806 = vunpack.c.l.b16 %v1774
  %v1807 = vpack.c.b16 %v1792, %v1791
  %v1808 = vpack.c.b16 %v1794, %v1793
  %v1809 = vpack.c.b16 %v1796, %v1795
  %v1810 = vpack.c.b16 %v1798, %v1797
  %v1811 = vpack.c.b16 %v1800, %v1799
  %v1812 = vpack.c.b16 %v1802, %v1801
  %v1813 = vpack.c.b16 %v1804, %v1803
  %v1814 = vpack.c.b16 %v1806, %v1805
  %1823 = vmatpush.bf16.msra.mxu0 %v1814
  %1824 = vmatpush.bf16.msra.mxu0 %v1813
  %1825 = vmatpush.bf16.msra.mxu0 %v1812
  %1826 = vmatpush.bf16.msra.mxu0 %v1811
  %1827 = vmatpush.bf16.msra.mxu0 %v1810
  %1828 = vmatpush.bf16.msra.mxu0 %v1809
  %1829 = vmatpush.bf16.msra.mxu0 %v1808
  %1830 = vmatpush.bf16.msra.mxu0 %v1807
  %1831 = vmatmul.bf16.gmra.mxu0 %v1753
  %v1832 = vpop.f32.mrf.mxu0
  %v1833 = vadd.f32 0.0, %v1832
  %v1834 = vpop.f32.mrf.mxu0
  %v1835 = vadd.f32 0.0, %v1834
  %1836 = vmatmul.bf16.gmra.mxu0 %v1754
  %v1837 = vpop.f32.mrf.mxu0
  %v1838 = vadd.f32 0.0, %v1837
  %v1839 = vpop.f32.mrf.mxu0
  %v1840 = vadd.f32 0.0, %v1839
  %1841 = vmatmul.bf16.gmra.mxu0 %v1755
  %v1842 = vpop.f32.mrf.mxu0
  %v1843 = vadd.f32 0.0, %v1842
  %v1844 = vpop.f32.mrf.mxu0
  %v1845 = vadd.f32 0.0, %v1844
  %1846 = vmatmul.bf16.gmra.mxu0 %v1756
  %v1847 = vpop.f32.mrf.mxu0
  %v1848 = vadd.f32 0.0, %v1847
  %v1849 = vpop.f32.mrf.mxu0
  %v1850 = vadd.f32 0.0, %v1849
  %1851 = vmatmul.bf16.gmra.mxu0 %v1757
  %v1852 = vpop.f32.mrf.mxu0
  %v1853 = vadd.f32 0.0, %v1852
  %v1854 = vpop.f32.mrf.mxu0
  %v1855 = vadd.f32 0.0, %v1854
  %1856 = vdwg.mxu0
  %v1857 = vadd.f32 %v1723, %v1833
  %v1858 = vadd.f32 %v1724, %v1835
  %v1859 = vadd.f32 %v1725, %v1838
  %v1860 = vadd.f32 %v1726, %v1840
  %v1861 = vadd.f32 %v1727, %v1843
  %v1862 = vadd.f32 %v1728, %v1845
  %v1863 = vadd.f32 %v1729, %v1848
  %v1864 = vadd.f32 %v1730, %v1850
  %v1865 = vadd.f32 %v1731, %v1853
  %v1866 = vadd.f32 %v1732, %v1855
  %v1867 = vld [vmem:[%s1065] ss:$2 sm:$0xff]
  %v1868 = vld [vmem:[%s1067] ss:$2 sm:$0xff]
  %v1869 = vld [vmem:[%s1069] ss:$2 sm:$0xff]
  %v1870 = vld [vmem:[%s1071] ss:$2 sm:$0xff]
  %v1871 = vld [vmem:[%s1073] ss:$2 sm:$0xff]
  %v1872 = vld [vmem:[%s1075] ss:$2 sm:$0xff]
  %v1873 = vld [vmem:[%s1077] ss:$2 sm:$0xff]
  %v1874 = vld [vmem:[%s1079] ss:$2 sm:$0xff]
  %v1875 = vld [vmem:[%s1081] ss:$2 sm:$0xff]
  %s1876 = scalar_lea.vmem [#allocation2], 164
  %v1877 = vld [vmem:[%s1876] ss:$2 sm:$0xff]
  %v1878 = vpack.c.bf16 %v1868, %v1867
  %v1879 = vpack.c.bf16 %v1870, %v1869
  %v1880 = vpack.c.bf16 %v1872, %v1871
  %v1881 = vpack.c.bf16 %v1874, %v1873
  %v1882 = vpack.c.bf16 %v1877, %v1875
  %s1883 = scalar_lea.vmem %s4, 640
  %v1884 = vld [vmem:[%s1883] sm:$0xf]
  %v1885 = vld [vmem:[%s1883 + $0x4] sm:$0xf]
  %v1886 = vld [vmem:[%s1883 + $0x8] sm:$0xf]
  %v1887 = vld [vmem:[%s1883 + $0xc] sm:$0xf]
  %v1888 = vld [vmem:[%s1883 + $0x10] sm:$0xf]
  %v1889 = vld [vmem:[%s1883 + $0x14] sm:$0xf]
  %v1890 = vld [vmem:[%s1883 + $0x18] sm:$0xf]
  %v1891 = vld [vmem:[%s1883 + $0x1c] sm:$0xf]
  %v1892 = vld [vmem:[%s1883 + $0x20] sm:$0xf]
  %v1893 = vld [vmem:[%s1883 + $0x24] sm:$0xf]
  %v1894 = vld [vmem:[%s1883 + $0x28] sm:$0xf]
  %v1895 = vld [vmem:[%s1883 + $0x2c] sm:$0xf]
  %v1896 = vld [vmem:[%s1883 + $0x30] sm:$0xf]
  %v1897 = vld [vmem:[%s1883 + $0x34] sm:$0xf]
  %v1898 = vld [vmem:[%s1883 + $0x38] sm:$0xf]
  %v1899 = vld [vmem:[%s1883 + $0x3c] sm:$0xf]
  %v1916 = vunpack.c.l.b16 %v1884
  %v1917 = vunpack.c.l.b16 %v1885
  %v1918 = vunpack.c.l.b16 %v1886
  %v1919 = vunpack.c.l.b16 %v1887
  %v1920 = vunpack.c.l.b16 %v1888
  %v1921 = vunpack.c.l.b16 %v1889
  %v1922 = vunpack.c.l.b16 %v1890
  %v1923 = vunpack.c.l.b16 %v1891
  %v1924 = vunpack.c.l.b16 %v1892
  %v1925 = vunpack.c.l.b16 %v1893
  %v1926 = vunpack.c.l.b16 %v1894
  %v1927 = vunpack.c.l.b16 %v1895
  %v1928 = vunpack.c.l.b16 %v1896
  %v1929 = vunpack.c.l.b16 %v1897
  %v1930 = vunpack.c.l.b16 %v1898
  %v1931 = vunpack.c.l.b16 %v1899
  %v1932 = vpack.c.b16 %v1917, %v1916
  %v1933 = vpack.c.b16 %v1919, %v1918
  %v1934 = vpack.c.b16 %v1921, %v1920
  %v1935 = vpack.c.b16 %v1923, %v1922
  %v1936 = vpack.c.b16 %v1925, %v1924
  %v1937 = vpack.c.b16 %v1927, %v1926
  %v1938 = vpack.c.b16 %v1929, %v1928
  %v1939 = vpack.c.b16 %v1931, %v1930
  %1948 = vmatpush.bf16.msra.mxu0 %v1939
  %1949 = vmatpush.bf16.msra.mxu0 %v1938
  %1950 = vmatpush.bf16.msra.mxu0 %v1937
  %1951 = vmatpush.bf16.msra.mxu0 %v1936
  %1952 = vmatpush.bf16.msra.mxu0 %v1935
  %1953 = vmatpush.bf16.msra.mxu0 %v1934
  %1954 = vmatpush.bf16.msra.mxu0 %v1933
  %1955 = vmatpush.bf16.msra.mxu0 %v1932
  %1956 = vmatmul.bf16.gmra.mxu0 %v1878
  %v1957 = vpop.f32.mrf.mxu0
  %v1958 = vadd.f32 0.0, %v1957
  %v1959 = vpop.f32.mrf.mxu0
  %v1960 = vadd.f32 0.0, %v1959
  %1961 = vmatmul.bf16.gmra.mxu0 %v1879
  %v1962 = vpop.f32.mrf.mxu0
  %v1963 = vadd.f32 0.0, %v1962
  %v1964 = vpop.f32.mrf.mxu0
  %v1965 = vadd.f32 0.0, %v1964
  %1966 = vmatmul.bf16.gmra.mxu0 %v1880
  %v1967 = vpop.f32.mrf.mxu0
  %v1968 = vadd.f32 0.0, %v1967
  %v1969 = vpop.f32.mrf.mxu0
  %v1970 = vadd.f32 0.0, %v1969
  %1971 = vmatmul.bf16.gmra.mxu0 %v1881
  %v1972 = vpop.f32.mrf.mxu0
  %v1973 = vadd.f32 0.0, %v1972
  %v1974 = vpop.f32.mrf.mxu0
  %v1975 = vadd.f32 0.0, %v1974
  %1976 = vmatmul.bf16.gmra.mxu0 %v1882
  %v1977 = vpop.f32.mrf.mxu0
  %v1978 = vadd.f32 0.0, %v1977
  %v1979 = vpop.f32.mrf.mxu0
  %v1980 = vadd.f32 0.0, %v1979
  %1981 = vdwg.mxu0
  %v1982 = vadd.f32 %v1857, %v1958
  %v1983 = vadd.f32 %v1858, %v1960
  %v1984 = vadd.f32 %v1859, %v1963
  %v1985 = vadd.f32 %v1860, %v1965
  %v1986 = vadd.f32 %v1861, %v1968
  %v1987 = vadd.f32 %v1862, %v1970
  %v1988 = vadd.f32 %v1863, %v1973
  %v1989 = vadd.f32 %v1864, %v1975
  %v1990 = vadd.f32 %v1865, %v1978
  %v1991 = vadd.f32 %v1866, %v1980
  %s1992 = scalar_lea.vmem [#allocation2], 21
  %v1993 = vld [vmem:[%s1992] ss:$2 sm:$0xff]
  %s1994 = scalar_lea.vmem [#allocation2], 37
  %v1995 = vld [vmem:[%s1994] ss:$2 sm:$0xff]
  %s1996 = scalar_lea.vmem [#allocation2], 53
  %v1997 = vld [vmem:[%s1996] ss:$2 sm:$0xff]
  %s1998 = scalar_lea.vmem [#allocation2], 69
  %v1999 = vld [vmem:[%s1998] ss:$2 sm:$0xff]
  %s2000 = scalar_lea.vmem [#allocation2], 85
  %v2001 = vld [vmem:[%s2000] ss:$2 sm:$0xff]
  %s2002 = scalar_lea.vmem [#allocation2], 101
  %v2003 = vld [vmem:[%s2002] ss:$2 sm:$0xff]
  %s2004 = scalar_lea.vmem [#allocation2], 117
  %v2005 = vld [vmem:[%s2004] ss:$2 sm:$0xff]
  %s2006 = scalar_lea.vmem [#allocation2], 133
  %v2007 = vld [vmem:[%s2006] ss:$2 sm:$0xff]
  %s2008 = scalar_lea.vmem [#allocation2], 149
  %v2009 = vld [vmem:[%s2008] ss:$2 sm:$0xff]
  %s2010 = scalar_lea.vmem [#allocation2], 165
  %v2011 = vld [vmem:[%s2010] ss:$2 sm:$0xff]
  %v2012 = vpack.c.bf16 %v1995, %v1993
  %v2013 = vpack.c.bf16 %v1999, %v1997
  %v2014 = vpack.c.bf16 %v2003, %v2001
  %v2015 = vpack.c.bf16 %v2007, %v2005
  %v2016 = vpack.c.bf16 %v2011, %v2009
  %s2017 = scalar_lea.vmem %s4, 704
  %v2018 = vld [vmem:[%s2017] sm:$0xf]
  %v2019 = vld [vmem:[%s2017 + $0x4] sm:$0xf]
  %v2020 = vld [vmem:[%s2017 + $0x8] sm:$0xf]
  %v2021 = vld [vmem:[%s2017 + $0xc] sm:$0xf]
  %v2022 = vld [vmem:[%s2017 + $0x10] sm:$0xf]
  %v2023 = vld [vmem:[%s2017 + $0x14] sm:$0xf]
  %v2024 = vld [vmem:[%s2017 + $0x18] sm:$0xf]
  %v2025 = vld [vmem:[%s2017 + $0x1c] sm:$0xf]
  %v2026 = vld [vmem:[%s2017 + $0x20] sm:$0xf]
  %v2027 = vld [vmem:[%s2017 + $0x24] sm:$0xf]
  %v2028 = vld [vmem:[%s2017 + $0x28] sm:$0xf]
  %v2029 = vld [vmem:[%s2017 + $0x2c] sm:$0xf]
  %v2030 = vld [vmem:[%s2017 + $0x30] sm:$0xf]
  %v2031 = vld [vmem:[%s2017 + $0x34] sm:$0xf]
  %v2032 = vld [vmem:[%s2017 + $0x38] sm:$0xf]
  %v2033 = vld [vmem:[%s2017 + $0x3c] sm:$0xf]
  %v2050 = vunpack.c.l.b16 %v2018
  %v2051 = vunpack.c.l.b16 %v2019
  %v2052 = vunpack.c.l.b16 %v2020
  %v2053 = vunpack.c.l.b16 %v2021
  %v2054 = vunpack.c.l.b16 %v2022
  %v2055 = vunpack.c.l.b16 %v2023
  %v2056 = vunpack.c.l.b16 %v2024
  %v2057 = vunpack.c.l.b16 %v2025
  %v2058 = vunpack.c.l.b16 %v2026
  %v2059 = vunpack.c.l.b16 %v2027
  %v2060 = vunpack.c.l.b16 %v2028
  %v2061 = vunpack.c.l.b16 %v2029
  %v2062 = vunpack.c.l.b16 %v2030
  %v2063 = vunpack.c.l.b16 %v2031
  %v2064 = vunpack.c.l.b16 %v2032
  %v2065 = vunpack.c.l.b16 %v2033
  %v2066 = vpack.c.b16 %v2051, %v2050
  %v2067 = vpack.c.b16 %v2053, %v2052
  %v2068 = vpack.c.b16 %v2055, %v2054
  %v2069 = vpack.c.b16 %v2057, %v2056
  %v2070 = vpack.c.b16 %v2059, %v2058
  %v2071 = vpack.c.b16 %v2061, %v2060
  %v2072 = vpack.c.b16 %v2063, %v2062
  %v2073 = vpack.c.b16 %v2065, %v2064
  %2082 = vmatpush.bf16.msra.mxu0 %v2073
  %2083 = vmatpush.bf16.msra.mxu0 %v2072
  %2084 = vmatpush.bf16.msra.mxu0 %v2071
  %2085 = vmatpush.bf16.msra.mxu0 %v2070
  %2086 = vmatpush.bf16.msra.mxu0 %v2069
  %2087 = vmatpush.bf16.msra.mxu0 %v2068
  %2088 = vmatpush.bf16.msra.mxu0 %v2067
  %2089 = vmatpush.bf16.msra.mxu0 %v2066
  %2090 = vmatmul.bf16.gmra.mxu0 %v2012
  %v2091 = vpop.f32.mrf.mxu0
  %v2092 = vadd.f32 0.0, %v2091
  %v2093 = vpop.f32.mrf.mxu0
  %v2094 = vadd.f32 0.0, %v2093
  %2095 = vmatmul.bf16.gmra.mxu0 %v2013
  %v2096 = vpop.f32.mrf.mxu0
  %v2097 = vadd.f32 0.0, %v2096
  %v2098 = vpop.f32.mrf.mxu0
  %v2099 = vadd.f32 0.0, %v2098
  %2100 = vmatmul.bf16.gmra.mxu0 %v2014
  %v2101 = vpop.f32.mrf.mxu0
  %v2102 = vadd.f32 0.0, %v2101
  %v2103 = vpop.f32.mrf.mxu0
  %v2104 = vadd.f32 0.0, %v2103
  %2105 = vmatmul.bf16.gmra.mxu0 %v2015
  %v2106 = vpop.f32.mrf.mxu0
  %v2107 = vadd.f32 0.0, %v2106
  %v2108 = vpop.f32.mrf.mxu0
  %v2109 = vadd.f32 0.0, %v2108
  %2110 = vmatmul.bf16.gmra.mxu0 %v2016
  %v2111 = vpop.f32.mrf.mxu0
  %v2112 = vadd.f32 0.0, %v2111
  %v2113 = vpop.f32.mrf.mxu0
  %v2114 = vadd.f32 0.0, %v2113
  %2115 = vdwg.mxu0
  %v2116 = vadd.f32 %v1982, %v2092
  %v2117 = vadd.f32 %v1983, %v2094
  %v2118 = vadd.f32 %v1984, %v2097
  %v2119 = vadd.f32 %v1985, %v2099
  %v2120 = vadd.f32 %v1986, %v2102
  %v2121 = vadd.f32 %v1987, %v2104
  %v2122 = vadd.f32 %v1988, %v2107
  %v2123 = vadd.f32 %v1989, %v2109
  %v2124 = vadd.f32 %v1990, %v2112
  %v2125 = vadd.f32 %v1991, %v2114
  %s2126 = scalar_lea.vmem [#allocation2], 22
  %v2127 = vld [vmem:[%s2126] ss:$2 sm:$0xff]
  %s2128 = scalar_lea.vmem [#allocation2], 38
  %v2129 = vld [vmem:[%s2128] ss:$2 sm:$0xff]
  %s2130 = scalar_lea.vmem [#allocation2], 54
  %v2131 = vld [vmem:[%s2130] ss:$2 sm:$0xff]
  %s2132 = scalar_lea.vmem [#allocation2], 70
  %v2133 = vld [vmem:[%s2132] ss:$2 sm:$0xff]
  %s2134 = scalar_lea.vmem [#allocation2], 86
  %v2135 = vld [vmem:[%s2134] ss:$2 sm:$0xff]
  %s2136 = scalar_lea.vmem [#allocation2], 102
  %v2137 = vld [vmem:[%s2136] ss:$2 sm:$0xff]
  %s2138 = scalar_lea.vmem [#allocation2], 118
  %v2139 = vld [vmem:[%s2138] ss:$2 sm:$0xff]
  %s2140 = scalar_lea.vmem [#allocation2], 134
  %v2141 = vld [vmem:[%s2140] ss:$2 sm:$0xff]
  %s2142 = scalar_lea.vmem [#allocation2], 150
  %v2143 = vld [vmem:[%s2142] ss:$2 sm:$0xff]
  %s2144 = scalar_lea.vmem [#allocation2], 166
  %v2145 = vld [vmem:[%s2144] ss:$2 sm:$0xff]
  %v2146 = vpack.c.bf16 %v2129, %v2127
  %v2147 = vpack.c.bf16 %v2133, %v2131
  %v2148 = vpack.c.bf16 %v2137, %v2135
  %v2149 = vpack.c.bf16 %v2141, %v2139
  %v2150 = vpack.c.bf16 %v2145, %v2143
  %s2151 = scalar_lea.vmem %s4, 768
  %v2152 = vld [vmem:[%s2151] sm:$0xf]
  %v2153 = vld [vmem:[%s2151 + $0x4] sm:$0xf]
  %v2154 = vld [vmem:[%s2151 + $0x8] sm:$0xf]
  %v2155 = vld [vmem:[%s2151 + $0xc] sm:$0xf]
  %v2156 = vld [vmem:[%s2151 + $0x10] sm:$0xf]
  %v2157 = vld [vmem:[%s2151 + $0x14] sm:$0xf]
  %v2158 = vld [vmem:[%s2151 + $0x18] sm:$0xf]
  %v2159 = vld [vmem:[%s2151 + $0x1c] sm:$0xf]
  %v2160 = vld [vmem:[%s2151 + $0x20] sm:$0xf]
  %v2161 = vld [vmem:[%s2151 + $0x24] sm:$0xf]
  %v2162 = vld [vmem:[%s2151 + $0x28] sm:$0xf]
  %v2163 = vld [vmem:[%s2151 + $0x2c] sm:$0xf]
  %v2164 = vld [vmem:[%s2151 + $0x30] sm:$0xf]
  %v2165 = vld [vmem:[%s2151 + $0x34] sm:$0xf]
  %v2166 = vld [vmem:[%s2151 + $0x38] sm:$0xf]
  %v2167 = vld [vmem:[%s2151 + $0x3c] sm:$0xf]
  %v2184 = vunpack.c.l.b16 %v2152
  %v2185 = vunpack.c.l.b16 %v2153
  %v2186 = vunpack.c.l.b16 %v2154
  %v2187 = vunpack.c.l.b16 %v2155
  %v2188 = vunpack.c.l.b16 %v2156
  %v2189 = vunpack.c.l.b16 %v2157
  %v2190 = vunpack.c.l.b16 %v2158
  %v2191 = vunpack.c.l.b16 %v2159
  %v2192 = vunpack.c.l.b16 %v2160
  %v2193 = vunpack.c.l.b16 %v2161
  %v2194 = vunpack.c.l.b16 %v2162
  %v2195 = vunpack.c.l.b16 %v2163
  %v2196 = vunpack.c.l.b16 %v2164
  %v2197 = vunpack.c.l.b16 %v2165
  %v2198 = vunpack.c.l.b16 %v2166
  %v2199 = vunpack.c.l.b16 %v2167
  %v2200 = vpack.c.b16 %v2185, %v2184
  %v2201 = vpack.c.b16 %v2187, %v2186
  %v2202 = vpack.c.b16 %v2189, %v2188
  %v2203 = vpack.c.b16 %v2191, %v2190
  %v2204 = vpack.c.b16 %v2193, %v2192
  %v2205 = vpack.c.b16 %v2195, %v2194
  %v2206 = vpack.c.b16 %v2197, %v2196
  %v2207 = vpack.c.b16 %v2199, %v2198
  %2216 = vmatpush.bf16.msra.mxu0 %v2207
  %2217 = vmatpush.bf16.msra.mxu0 %v2206
  %2218 = vmatpush.bf16.msra.mxu0 %v2205
  %2219 = vmatpush.bf16.msra.mxu0 %v2204
  %2220 = vmatpush.bf16.msra.mxu0 %v2203
  %2221 = vmatpush.bf16.msra.mxu0 %v2202
  %2222 = vmatpush.bf16.msra.mxu0 %v2201
  %2223 = vmatpush.bf16.msra.mxu0 %v2200
  %2224 = vmatmul.bf16.gmra.mxu0 %v2146
  %v2225 = vpop.f32.mrf.mxu0
  %v2226 = vadd.f32 0.0, %v2225
  %v2227 = vpop.f32.mrf.mxu0
  %v2228 = vadd.f32 0.0, %v2227
  %2229 = vmatmul.bf16.gmra.mxu0 %v2147
  %v2230 = vpop.f32.mrf.mxu0
  %v2231 = vadd.f32 0.0, %v2230
  %v2232 = vpop.f32.mrf.mxu0
  %v2233 = vadd.f32 0.0, %v2232
  %2234 = vmatmul.bf16.gmra.mxu0 %v2148
  %v2235 = vpop.f32.mrf.mxu0
  %v2236 = vadd.f32 0.0, %v2235
  %v2237 = vpop.f32.mrf.mxu0
  %v2238 = vadd.f32 0.0, %v2237
  %2239 = vmatmul.bf16.gmra.mxu0 %v2149
  %v2240 = vpop.f32.mrf.mxu0
  %v2241 = vadd.f32 0.0, %v2240
  %v2242 = vpop.f32.mrf.mxu0
  %v2243 = vadd.f32 0.0, %v2242
  %2244 = vmatmul.bf16.gmra.mxu0 %v2150
  %v2245 = vpop.f32.mrf.mxu0
  %v2246 = vadd.f32 0.0, %v2245
  %v2247 = vpop.f32.mrf.mxu0
  %v2248 = vadd.f32 0.0, %v2247
  %2249 = vdwg.mxu0
  %v2250 = vadd.f32 %v2116, %v2226
  %v2251 = vadd.f32 %v2117, %v2228
  %v2252 = vadd.f32 %v2118, %v2231
  %v2253 = vadd.f32 %v2119, %v2233
  %v2254 = vadd.f32 %v2120, %v2236
  %v2255 = vadd.f32 %v2121, %v2238
  %v2256 = vadd.f32 %v2122, %v2241
  %v2257 = vadd.f32 %v2123, %v2243
  %v2258 = vadd.f32 %v2124, %v2246
  %v2259 = vadd.f32 %v2125, %v2248
  %s2260 = scalar_lea.vmem [#allocation2], 23
  %v2261 = vld [vmem:[%s2260] ss:$2 sm:$0xff]
  %s2262 = scalar_lea.vmem [#allocation2], 39
  %v2263 = vld [vmem:[%s2262] ss:$2 sm:$0xff]
  %s2264 = scalar_lea.vmem [#allocation2], 55
  %v2265 = vld [vmem:[%s2264] ss:$2 sm:$0xff]
  %s2266 = scalar_lea.vmem [#allocation2], 71
  %v2267 = vld [vmem:[%s2266] ss:$2 sm:$0xff]
  %s2268 = scalar_lea.vmem [#allocation2], 87
  %v2269 = vld [vmem:[%s2268] ss:$2 sm:$0xff]
  %s2270 = scalar_lea.vmem [#allocation2], 103
  %v2271 = vld [vmem:[%s2270] ss:$2 sm:$0xff]
  %s2272 = scalar_lea.vmem [#allocation2], 119
  %v2273 = vld [vmem:[%s2272] ss:$2 sm:$0xff]
  %s2274 = scalar_lea.vmem [#allocation2], 135
  %v2275 = vld [vmem:[%s2274] ss:$2 sm:$0xff]
  %s2276 = scalar_lea.vmem [#allocation2], 151
  %v2277 = vld [vmem:[%s2276] ss:$2 sm:$0xff]
  %s2278 = scalar_lea.vmem [#allocation2], 167
  %v2279 = vld [vmem:[%s2278] ss:$2 sm:$0xff]
  %v2280 = vpack.c.bf16 %v2263, %v2261
  %v2281 = vpack.c.bf16 %v2267, %v2265
  %v2282 = vpack.c.bf16 %v2271, %v2269
  %v2283 = vpack.c.bf16 %v2275, %v2273
  %v2284 = vpack.c.bf16 %v2279, %v2277
  %s2285 = scalar_lea.vmem %s4, 832
  %v2286 = vld [vmem:[%s2285] sm:$0xf]
  %v2287 = vld [vmem:[%s2285 + $0x4] sm:$0xf]
  %v2288 = vld [vmem:[%s2285 + $0x8] sm:$0xf]
  %v2289 = vld [vmem:[%s2285 + $0xc] sm:$0xf]
  %v2290 = vld [vmem:[%s2285 + $0x10] sm:$0xf]
  %v2291 = vld [vmem:[%s2285 + $0x14] sm:$0xf]
  %v2292 = vld [vmem:[%s2285 + $0x18] sm:$0xf]
  %v2293 = vld [vmem:[%s2285 + $0x1c] sm:$0xf]
  %v2294 = vld [vmem:[%s2285 + $0x20] sm:$0xf]
  %v2295 = vld [vmem:[%s2285 + $0x24] sm:$0xf]
  %v2296 = vld [vmem:[%s2285 + $0x28] sm:$0xf]
  %v2297 = vld [vmem:[%s2285 + $0x2c] sm:$0xf]
  %v2298 = vld [vmem:[%s2285 + $0x30] sm:$0xf]
  %v2299 = vld [vmem:[%s2285 + $0x34] sm:$0xf]
  %v2300 = vld [vmem:[%s2285 + $0x38] sm:$0xf]
  %v2301 = vld [vmem:[%s2285 + $0x3c] sm:$0xf]
  %v2318 = vunpack.c.l.b16 %v2286
  %v2319 = vunpack.c.l.b16 %v2287
  %v2320 = vunpack.c.l.b16 %v2288
  %v2321 = vunpack.c.l.b16 %v2289
  %v2322 = vunpack.c.l.b16 %v2290
  %v2323 = vunpack.c.l.b16 %v2291
  %v2324 = vunpack.c.l.b16 %v2292
  %v2325 = vunpack.c.l.b16 %v2293
  %v2326 = vunpack.c.l.b16 %v2294
  %v2327 = vunpack.c.l.b16 %v2295
  %v2328 = vunpack.c.l.b16 %v2296
  %v2329 = vunpack.c.l.b16 %v2297
  %v2330 = vunpack.c.l.b16 %v2298
  %v2331 = vunpack.c.l.b16 %v2299
  %v2332 = vunpack.c.l.b16 %v2300
  %v2333 = vunpack.c.l.b16 %v2301
  %v2334 = vpack.c.b16 %v2319, %v2318
  %v2335 = vpack.c.b16 %v2321, %v2320
  %v2336 = vpack.c.b16 %v2323, %v2322
  %v2337 = vpack.c.b16 %v2325, %v2324
  %v2338 = vpack.c.b16 %v2327, %v2326
  %v2339 = vpack.c.b16 %v2329, %v2328
  %v2340 = vpack.c.b16 %v2331, %v2330
  %v2341 = vpack.c.b16 %v2333, %v2332
  %2350 = vmatpush.bf16.msra.mxu0 %v2341
  %2351 = vmatpush.bf16.msra.mxu0 %v2340
  %2352 = vmatpush.bf16.msra.mxu0 %v2339
  %2353 = vmatpush.bf16.msra.mxu0 %v2338
  %2354 = vmatpush.bf16.msra.mxu0 %v2337
  %2355 = vmatpush.bf16.msra.mxu0 %v2336
  %2356 = vmatpush.bf16.msra.mxu0 %v2335
  %2357 = vmatpush.bf16.msra.mxu0 %v2334
  %2358 = vmatmul.bf16.gmra.mxu0 %v2280
  %v2359 = vpop.f32.mrf.mxu0
  %v2360 = vadd.f32 0.0, %v2359
  %v2361 = vpop.f32.mrf.mxu0
  %v2362 = vadd.f32 0.0, %v2361
  %2363 = vmatmul.bf16.gmra.mxu0 %v2281
  %v2364 = vpop.f32.mrf.mxu0
  %v2365 = vadd.f32 0.0, %v2364
  %v2366 = vpop.f32.mrf.mxu0
  %v2367 = vadd.f32 0.0, %v2366
  %2368 = vmatmul.bf16.gmra.mxu0 %v2282
  %v2369 = vpop.f32.mrf.mxu0
  %v2370 = vadd.f32 0.0, %v2369
  %v2371 = vpop.f32.mrf.mxu0
  %v2372 = vadd.f32 0.0, %v2371
  %2373 = vmatmul.bf16.gmra.mxu0 %v2283
  %v2374 = vpop.f32.mrf.mxu0
  %v2375 = vadd.f32 0.0, %v2374
  %v2376 = vpop.f32.mrf.mxu0
  %v2377 = vadd.f32 0.0, %v2376
  %2378 = vmatmul.bf16.gmra.mxu0 %v2284
  %v2379 = vpop.f32.mrf.mxu0
  %v2380 = vadd.f32 0.0, %v2379
  %v2381 = vpop.f32.mrf.mxu0
  %v2382 = vadd.f32 0.0, %v2381
  %2383 = vdwg.mxu0
  %v2384 = vadd.f32 %v2250, %v2360
  %v2385 = vadd.f32 %v2251, %v2362
  %v2386 = vadd.f32 %v2252, %v2365
  %v2387 = vadd.f32 %v2253, %v2367
  %v2388 = vadd.f32 %v2254, %v2370
  %v2389 = vadd.f32 %v2255, %v2372
  %v2390 = vadd.f32 %v2256, %v2375
  %v2391 = vadd.f32 %v2257, %v2377
  %v2392 = vadd.f32 %v2258, %v2380
  %v2393 = vadd.f32 %v2259, %v2382
  %s2394 = scalar_lea.vmem [#allocation2], 24
  %v2395 = vld [vmem:[%s2394] ss:$2 sm:$0xff]
  %s2396 = scalar_lea.vmem [#allocation2], 40
  %v2397 = vld [vmem:[%s2396] ss:$2 sm:$0xff]
  %s2398 = scalar_lea.vmem [#allocation2], 56
  %v2399 = vld [vmem:[%s2398] ss:$2 sm:$0xff]
  %s2400 = scalar_lea.vmem [#allocation2], 72
  %v2401 = vld [vmem:[%s2400] ss:$2 sm:$0xff]
  %s2402 = scalar_lea.vmem [#allocation2], 88
  %v2403 = vld [vmem:[%s2402] ss:$2 sm:$0xff]
  %s2404 = scalar_lea.vmem [#allocation2], 104
  %v2405 = vld [vmem:[%s2404] ss:$2 sm:$0xff]
  %s2406 = scalar_lea.vmem [#allocation2], 120
  %v2407 = vld [vmem:[%s2406] ss:$2 sm:$0xff]
  %s2408 = scalar_lea.vmem [#allocation2], 136
  %v2409 = vld [vmem:[%s2408] ss:$2 sm:$0xff]
  %s2410 = scalar_lea.vmem [#allocation2], 152
  %v2411 = vld [vmem:[%s2410] ss:$2 sm:$0xff]
  %s2412 = scalar_lea.vmem [#allocation2], 168
  %v2413 = vld [vmem:[%s2412] ss:$2 sm:$0xff]
  %v2414 = vpack.c.bf16 %v2397, %v2395
  %v2415 = vpack.c.bf16 %v2401, %v2399
  %v2416 = vpack.c.bf16 %v2405, %v2403
  %v2417 = vpack.c.bf16 %v2409, %v2407
  %v2418 = vpack.c.bf16 %v2413, %v2411
  %s2419 = scalar_lea.vmem %s4, 896
  %v2420 = vld [vmem:[%s2419] sm:$0xf]
  %v2421 = vld [vmem:[%s2419 + $0x4] sm:$0xf]
  %v2422 = vld [vmem:[%s2419 + $0x8] sm:$0xf]
  %v2423 = vld [vmem:[%s2419 + $0xc] sm:$0xf]
  %v2424 = vld [vmem:[%s2419 + $0x10] sm:$0xf]
  %v2425 = vld [vmem:[%s2419 + $0x14] sm:$0xf]
  %v2426 = vld [vmem:[%s2419 + $0x18] sm:$0xf]
  %v2427 = vld [vmem:[%s2419 + $0x1c] sm:$0xf]
  %v2428 = vld [vmem:[%s2419 + $0x20] sm:$0xf]
  %v2429 = vld [vmem:[%s2419 + $0x24] sm:$0xf]
  %v2430 = vld [vmem:[%s2419 + $0x28] sm:$0xf]
  %v2431 = vld [vmem:[%s2419 + $0x2c] sm:$0xf]
  %v2432 = vld [vmem:[%s2419 + $0x30] sm:$0xf]
  %v2433 = vld [vmem:[%s2419 + $0x34] sm:$0xf]
  %v2434 = vld [vmem:[%s2419 + $0x38] sm:$0xf]
  %v2435 = vld [vmem:[%s2419 + $0x3c] sm:$0xf]
  %v2452 = vunpack.c.l.b16 %v2420
  %v2453 = vunpack.c.l.b16 %v2421
  %v2454 = vunpack.c.l.b16 %v2422
  %v2455 = vunpack.c.l.b16 %v2423
  %v2456 = vunpack.c.l.b16 %v2424
  %v2457 = vunpack.c.l.b16 %v2425
  %v2458 = vunpack.c.l.b16 %v2426
  %v2459 = vunpack.c.l.b16 %v2427
  %v2460 = vunpack.c.l.b16 %v2428
  %v2461 = vunpack.c.l.b16 %v2429
  %v2462 = vunpack.c.l.b16 %v2430
  %v2463 = vunpack.c.l.b16 %v2431
  %v2464 = vunpack.c.l.b16 %v2432
  %v2465 = vunpack.c.l.b16 %v2433
  %v2466 = vunpack.c.l.b16 %v2434
  %v2467 = vunpack.c.l.b16 %v2435
  %v2468 = vpack.c.b16 %v2453, %v2452
  %v2469 = vpack.c.b16 %v2455, %v2454
  %v2470 = vpack.c.b16 %v2457, %v2456
  %v2471 = vpack.c.b16 %v2459, %v2458
  %v2472 = vpack.c.b16 %v2461, %v2460
  %v2473 = vpack.c.b16 %v2463, %v2462
  %v2474 = vpack.c.b16 %v2465, %v2464
  %v2475 = vpack.c.b16 %v2467, %v2466
  %2484 = vmatpush.bf16.msra.mxu0 %v2475
  %2485 = vmatpush.bf16.msra.mxu0 %v2474
  %2486 = vmatpush.bf16.msra.mxu0 %v2473
  %2487 = vmatpush.bf16.msra.mxu0 %v2472
  %2488 = vmatpush.bf16.msra.mxu0 %v2471
  %2489 = vmatpush.bf16.msra.mxu0 %v2470
  %2490 = vmatpush.bf16.msra.mxu0 %v2469
  %2491 = vmatpush.bf16.msra.mxu0 %v2468
  %2492 = vmatmul.bf16.gmra.mxu0 %v2414
  %v2493 = vpop.f32.mrf.mxu0
  %v2494 = vadd.f32 0.0, %v2493
  %v2495 = vpop.f32.mrf.mxu0
  %v2496 = vadd.f32 0.0, %v2495
  %2497 = vmatmul.bf16.gmra.mxu0 %v2415
  %v2498 = vpop.f32.mrf.mxu0
  %v2499 = vadd.f32 0.0, %v2498
  %v2500 = vpop.f32.mrf.mxu0
  %v2501 = vadd.f32 0.0, %v2500
  %2502 = vmatmul.bf16.gmra.mxu0 %v2416
  %v2503 = vpop.f32.mrf.mxu0
  %v2504 = vadd.f32 0.0, %v2503
  %v2505 = vpop.f32.mrf.mxu0
  %v2506 = vadd.f32 0.0, %v2505
  %2507 = vmatmul.bf16.gmra.mxu0 %v2417
  %v2508 = vpop.f32.mrf.mxu0
  %v2509 = vadd.f32 0.0, %v2508
  %v2510 = vpop.f32.mrf.mxu0
  %v2511 = vadd.f32 0.0, %v2510
  %2512 = vmatmul.bf16.gmra.mxu0 %v2418
  %v2513 = vpop.f32.mrf.mxu0
  %v2514 = vadd.f32 0.0, %v2513
  %v2515 = vpop.f32.mrf.mxu0
  %v2516 = vadd.f32 0.0, %v2515
  %2517 = vdwg.mxu0
  %v2518 = vadd.f32 %v2384, %v2494
  %v2519 = vadd.f32 %v2385, %v2496
  %v2520 = vadd.f32 %v2386, %v2499
  %v2521 = vadd.f32 %v2387, %v2501
  %v2522 = vadd.f32 %v2388, %v2504
  %v2523 = vadd.f32 %v2389, %v2506
  %v2524 = vadd.f32 %v2390, %v2509
  %v2525 = vadd.f32 %v2391, %v2511
  %v2526 = vadd.f32 %v2392, %v2514
  %v2527 = vadd.f32 %v2393, %v2516
  %v2528 = vld [vmem:[%s1735] ss:$2 sm:$0xff]
  %v2529 = vld [vmem:[%s1737] ss:$2 sm:$0xff]
  %v2530 = vld [vmem:[%s1739] ss:$2 sm:$0xff]
  %v2531 = vld [vmem:[%s1741] ss:$2 sm:$0xff]
  %v2532 = vld [vmem:[%s1743] ss:$2 sm:$0xff]
  %v2533 = vld [vmem:[%s1745] ss:$2 sm:$0xff]
  %v2534 = vld [vmem:[%s1747] ss:$2 sm:$0xff]
  %v2535 = vld [vmem:[%s1749] ss:$2 sm:$0xff]
  %v2536 = vld [vmem:[%s1751] ss:$2 sm:$0xff]
  %s2537 = scalar_lea.vmem [#allocation2], 174
  %v2538 = vld [vmem:[%s2537] ss:$2 sm:$0xff]
  %v2539 = vpack.c.bf16 %v2529, %v2528
  %v2540 = vpack.c.bf16 %v2531, %v2530
  %v2541 = vpack.c.bf16 %v2533, %v2532
  %v2542 = vpack.c.bf16 %v2535, %v2534
  %v2543 = vpack.c.bf16 %v2538, %v2536
  %s2544 = scalar_lea.vmem %s4, 960
  %v2545 = vld [vmem:[%s2544] sm:$0xf]
  %v2546 = vld [vmem:[%s2544 + $0x4] sm:$0xf]
  %v2547 = vld [vmem:[%s2544 + $0x8] sm:$0xf]
  %v2548 = vld [vmem:[%s2544 + $0xc] sm:$0xf]
  %v2549 = vld [vmem:[%s2544 + $0x10] sm:$0xf]
  %v2550 = vld [vmem:[%s2544 + $0x14] sm:$0xf]
  %v2551 = vld [vmem:[%s2544 + $0x18] sm:$0xf]
  %v2552 = vld [vmem:[%s2544 + $0x1c] sm:$0xf]
  %v2553 = vld [vmem:[%s2544 + $0x20] sm:$0xf]
  %v2554 = vld [vmem:[%s2544 + $0x24] sm:$0xf]
  %v2555 = vld [vmem:[%s2544 + $0x28] sm:$0xf]
  %v2556 = vld [vmem:[%s2544 + $0x2c] sm:$0xf]
  %v2557 = vld [vmem:[%s2544 + $0x30] sm:$0xf]
  %v2558 = vld [vmem:[%s2544 + $0x34] sm:$0xf]
  %v2559 = vld [vmem:[%s2544 + $0x38] sm:$0xf]
  %v2560 = vld [vmem:[%s2544 + $0x3c] sm:$0xf]
  %v2577 = vunpack.c.l.b16 %v2545
  %v2578 = vunpack.c.l.b16 %v2546
  %v2579 = vunpack.c.l.b16 %v2547
  %v2580 = vunpack.c.l.b16 %v2548
  %v2581 = vunpack.c.l.b16 %v2549
  %v2582 = vunpack.c.l.b16 %v2550
  %v2583 = vunpack.c.l.b16 %v2551
  %v2584 = vunpack.c.l.b16 %v2552
  %v2585 = vunpack.c.l.b16 %v2553
  %v2586 = vunpack.c.l.b16 %v2554
  %v2587 = vunpack.c.l.b16 %v2555
  %v2588 = vunpack.c.l.b16 %v2556
  %v2589 = vunpack.c.l.b16 %v2557
  %v2590 = vunpack.c.l.b16 %v2558
  %v2591 = vunpack.c.l.b16 %v2559
  %v2592 = vunpack.c.l.b16 %v2560
  %v2593 = vpack.c.b16 %v2578, %v2577
  %v2594 = vpack.c.b16 %v2580, %v2579
  %v2595 = vpack.c.b16 %v2582, %v2581
  %v2596 = vpack.c.b16 %v2584, %v2583
  %v2597 = vpack.c.b16 %v2586, %v2585
  %v2598 = vpack.c.b16 %v2588, %v2587
  %v2599 = vpack.c.b16 %v2590, %v2589
  %v2600 = vpack.c.b16 %v2592, %v2591
  %2609 = vmatpush.bf16.msra.mxu0 %v2600
  %2610 = vmatpush.bf16.msra.mxu0 %v2599
  %2611 = vmatpush.bf16.msra.mxu0 %v2598
  %2612 = vmatpush.bf16.msra.mxu0 %v2597
  %2613 = vmatpush.bf16.msra.mxu0 %v2596
  %2614 = vmatpush.bf16.msra.mxu0 %v2595
  %2615 = vmatpush.bf16.msra.mxu0 %v2594
  %2616 = vmatpush.bf16.msra.mxu0 %v2593
  %2617 = vmatmul.bf16.gmra.mxu0 %v2539
  %v2618 = vpop.f32.mrf.mxu0
  %v2619 = vadd.f32 0.0, %v2618
  %v2620 = vpop.f32.mrf.mxu0
  %v2621 = vadd.f32 0.0, %v2620
  %2622 = vmatmul.bf16.gmra.mxu0 %v2540
  %v2623 = vpop.f32.mrf.mxu0
  %v2624 = vadd.f32 0.0, %v2623
  %v2625 = vpop.f32.mrf.mxu0
  %v2626 = vadd.f32 0.0, %v2625
  %2627 = vmatmul.bf16.gmra.mxu0 %v2541
  %v2628 = vpop.f32.mrf.mxu0
  %v2629 = vadd.f32 0.0, %v2628
  %v2630 = vpop.f32.mrf.mxu0
  %v2631 = vadd.f32 0.0, %v2630
  %2632 = vmatmul.bf16.gmra.mxu0 %v2542
  %v2633 = vpop.f32.mrf.mxu0
  %v2634 = vadd.f32 0.0, %v2633
  %v2635 = vpop.f32.mrf.mxu0
  %v2636 = vadd.f32 0.0, %v2635
  %2637 = vmatmul.bf16.gmra.mxu0 %v2543
  %v2638 = vpop.f32.mrf.mxu0
  %v2639 = vadd.f32 0.0, %v2638
  %v2640 = vpop.f32.mrf.mxu0
  %v2641 = vadd.f32 0.0, %v2640
  %2642 = vdwg.mxu0
  %v2643 = vadd.f32 %v2518, %v2619
  %v2644 = vadd.f32 %v2519, %v2621
  %v2645 = vadd.f32 %v2520, %v2624
  %v2646 = vadd.f32 %v2521, %v2626
  %v2647 = vadd.f32 %v2522, %v2629
  %v2648 = vadd.f32 %v2523, %v2631
  %v2649 = vadd.f32 %v2524, %v2634
  %v2650 = vadd.f32 %v2525, %v2636
  %v2651 = vadd.f32 %v2526, %v2639
  %v2652 = vadd.f32 %v2527, %v2641
  %s2653 = scalar_lea.vmem [#allocation2], 31
  %v2654 = vld [vmem:[%s2653] ss:$2 sm:$0xff]
  %s2655 = scalar_lea.vmem [#allocation2], 47
  %v2656 = vld [vmem:[%s2655] ss:$2 sm:$0xff]
  %s2657 = scalar_lea.vmem [#allocation2], 63
  %v2658 = vld [vmem:[%s2657] ss:$2 sm:$0xff]
  %s2659 = scalar_lea.vmem [#allocation2], 79
  %v2660 = vld [vmem:[%s2659] ss:$2 sm:$0xff]
  %s2661 = scalar_lea.vmem [#allocation2], 95
  %v2662 = vld [vmem:[%s2661] ss:$2 sm:$0xff]
  %s2663 = scalar_lea.vmem [#allocation2], 111
  %v2664 = vld [vmem:[%s2663] ss:$2 sm:$0xff]
  %s2665 = scalar_lea.vmem [#allocation2], 127
  %v2666 = vld [vmem:[%s2665] ss:$2 sm:$0xff]
  %s2667 = scalar_lea.vmem [#allocation2], 143
  %v2668 = vld [vmem:[%s2667] ss:$2 sm:$0xff]
  %s2669 = scalar_lea.vmem [#allocation2], 159
  %v2670 = vld [vmem:[%s2669] ss:$2 sm:$0xff]
  %s2671 = scalar_lea.vmem [#allocation2], 175
  %v2672 = vld [vmem:[%s2671] ss:$2 sm:$0xff]
  %v2673 = vpack.c.bf16 %v2656, %v2654
  %v2674 = vpack.c.bf16 %v2660, %v2658
  %v2675 = vpack.c.bf16 %v2664, %v2662
  %v2676 = vpack.c.bf16 %v2668, %v2666
  %v2677 = vpack.c.bf16 %v2672, %v2670
  %s2678 = scalar_lea.vmem %s4, 1024
  %v2679 = vld [vmem:[%s2678] sm:$0xf]
  %v2680 = vld [vmem:[%s2678 + $0x4] sm:$0xf]
  %v2681 = vld [vmem:[%s2678 + $0x8] sm:$0xf]
  %v2682 = vld [vmem:[%s2678 + $0xc] sm:$0xf]
  %v2683 = vld [vmem:[%s2678 + $0x10] sm:$0xf]
  %v2684 = vld [vmem:[%s2678 + $0x14] sm:$0xf]
  %v2685 = vld [vmem:[%s2678 + $0x18] sm:$0xf]
  %v2686 = vld [vmem:[%s2678 + $0x1c] sm:$0xf]
  %v2687 = vld [vmem:[%s2678 + $0x20] sm:$0xf]
  %v2688 = vld [vmem:[%s2678 + $0x24] sm:$0xf]
  %v2689 = vld [vmem:[%s2678 + $0x28] sm:$0xf]
  %v2690 = vld [vmem:[%s2678 + $0x2c] sm:$0xf]
  %v2691 = vld [vmem:[%s2678 + $0x30] sm:$0xf]
  %v2692 = vld [vmem:[%s2678 + $0x34] sm:$0xf]
  %v2693 = vld [vmem:[%s2678 + $0x38] sm:$0xf]
  %v2694 = vld [vmem:[%s2678 + $0x3c] sm:$0xf]
  %v2711 = vunpack.c.l.b16 %v2679
  %v2712 = vunpack.c.l.b16 %v2680
  %v2713 = vunpack.c.l.b16 %v2681
  %v2714 = vunpack.c.l.b16 %v2682
  %v2715 = vunpack.c.l.b16 %v2683
  %v2716 = vunpack.c.l.b16 %v2684
  %v2717 = vunpack.c.l.b16 %v2685
  %v2718 = vunpack.c.l.b16 %v2686
  %v2719 = vunpack.c.l.b16 %v2687
  %v2720 = vunpack.c.l.b16 %v2688
  %v2721 = vunpack.c.l.b16 %v2689
  %v2722 = vunpack.c.l.b16 %v2690
  %v2723 = vunpack.c.l.b16 %v2691
  %v2724 = vunpack.c.l.b16 %v2692
  %v2725 = vunpack.c.l.b16 %v2693
  %v2726 = vunpack.c.l.b16 %v2694
  %v2727 = vpack.c.b16 %v2712, %v2711
  %v2728 = vpack.c.b16 %v2714, %v2713
  %v2729 = vpack.c.b16 %v2716, %v2715
  %v2730 = vpack.c.b16 %v2718, %v2717
  %v2731 = vpack.c.b16 %v2720, %v2719
  %v2732 = vpack.c.b16 %v2722, %v2721
  %v2733 = vpack.c.b16 %v2724, %v2723
  %v2734 = vpack.c.b16 %v2726, %v2725
  %2743 = vmatpush.bf16.msra.mxu0 %v2734
  %2744 = vmatpush.bf16.msra.mxu0 %v2733
  %2745 = vmatpush.bf16.msra.mxu0 %v2732
  %2746 = vmatpush.bf16.msra.mxu0 %v2731
  %2747 = vmatpush.bf16.msra.mxu0 %v2730
  %2748 = vmatpush.bf16.msra.mxu0 %v2729
  %2749 = vmatpush.bf16.msra.mxu0 %v2728
  %2750 = vmatpush.bf16.msra.mxu0 %v2727
  %2751 = vmatmul.bf16.gmra.mxu0 %v2673
  %v2752 = vpop.f32.mrf.mxu0
  %v2753 = vadd.f32 0.0, %v2752
  %v2754 = vpop.f32.mrf.mxu0
  %v2755 = vadd.f32 0.0, %v2754
  %2756 = vmatmul.bf16.gmra.mxu0 %v2674
  %v2757 = vpop.f32.mrf.mxu0
  %v2758 = vadd.f32 0.0, %v2757
  %v2759 = vpop.f32.mrf.mxu0
  %v2760 = vadd.f32 0.0, %v2759
  %2761 = vmatmul.bf16.gmra.mxu0 %v2675
  %v2762 = vpop.f32.mrf.mxu0
  %v2763 = vadd.f32 0.0, %v2762
  %v2764 = vpop.f32.mrf.mxu0
  %v2765 = vadd.f32 0.0, %v2764
  %2766 = vmatmul.bf16.gmra.mxu0 %v2676
  %v2767 = vpop.f32.mrf.mxu0
  %v2768 = vadd.f32 0.0, %v2767
  %v2769 = vpop.f32.mrf.mxu0
  %v2770 = vadd.f32 0.0, %v2769
  %2771 = vmatmul.bf16.gmra.mxu0 %v2677
  %v2772 = vpop.f32.mrf.mxu0
  %v2773 = vadd.f32 0.0, %v2772
  %v2774 = vpop.f32.mrf.mxu0
  %v2775 = vadd.f32 0.0, %v2774
  %2776 = vdwg.mxu0
  %v2777 = vadd.f32 %v2643, %v2753
  %v2778 = vadd.f32 %v2644, %v2755
  %v2779 = vadd.f32 %v2645, %v2758
  %v2780 = vadd.f32 %v2646, %v2760
  %v2781 = vadd.f32 %v2647, %v2763
  %v2782 = vadd.f32 %v2648, %v2765
  %v2783 = vadd.f32 %v2649, %v2768
  %v2784 = vadd.f32 %v2650, %v2770
  %v2785 = vadd.f32 %v2651, %v2773
  %v2786 = vadd.f32 %v2652, %v2775
  %v2787 = vld [vmem:[%s552] ss:$2 sm:$0xff]
  %v2788 = vld [vmem:[%s554] ss:$2 sm:$0xff]
  %v2789 = vld [vmem:[%s556] ss:$2 sm:$0xff]
  %v2790 = vld [vmem:[%s558] ss:$2 sm:$0xff]
  %v2791 = vld [vmem:[%s560] ss:$2 sm:$0xff]
  %v2792 = vld [vmem:[%s562] ss:$2 sm:$0xff]
  %v2793 = vld [vmem:[%s564] ss:$2 sm:$0xff]
  %v2794 = vld [vmem:[%s566] ss:$2 sm:$0xff]
  %s2795 = scalar_lea.vmem [#allocation2], 160
  %v2796 = vld [vmem:[%s2795] ss:$2 sm:$0xff]
  %s2797 = scalar_lea.vmem [#allocation2], 176
  %v2798 = vld [vmem:[%s2797] ss:$2 sm:$0xff]
  %v2799 = vpack.c.bf16 %v2788, %v2787
  %v2800 = vpack.c.bf16 %v2790, %v2789
  %v2801 = vpack.c.bf16 %v2792, %v2791
  %v2802 = vpack.c.bf16 %v2794, %v2793
  %v2803 = vpack.c.bf16 %v2798, %v2796
  %s2804 = scalar_lea.vmem %s4, 1088
  %v2805 = vld [vmem:[%s2804] sm:$0xf]
  %v2806 = vld [vmem:[%s2804 + $0x4] sm:$0xf]
  %v2807 = vld [vmem:[%s2804 + $0x8] sm:$0xf]
  %v2808 = vld [vmem:[%s2804 + $0xc] sm:$0xf]
  %v2809 = vld [vmem:[%s2804 + $0x10] sm:$0xf]
  %v2810 = vld [vmem:[%s2804 + $0x14] sm:$0xf]
  %v2811 = vld [vmem:[%s2804 + $0x18] sm:$0xf]
  %v2812 = vld [vmem:[%s2804 + $0x1c] sm:$0xf]
  %v2813 = vld [vmem:[%s2804 + $0x20] sm:$0xf]
  %v2814 = vld [vmem:[%s2804 + $0x24] sm:$0xf]
  %v2815 = vld [vmem:[%s2804 + $0x28] sm:$0xf]
  %v2816 = vld [vmem:[%s2804 + $0x2c] sm:$0xf]
  %v2817 = vld [vmem:[%s2804 + $0x30] sm:$0xf]
  %v2818 = vld [vmem:[%s2804 + $0x34] sm:$0xf]
  %v2819 = vld [vmem:[%s2804 + $0x38] sm:$0xf]
  %v2820 = vld [vmem:[%s2804 + $0x3c] sm:$0xf]
  %v2837 = vunpack.c.l.b16 %v2805
  %v2838 = vunpack.c.l.b16 %v2806
  %v2839 = vunpack.c.l.b16 %v2807
  %v2840 = vunpack.c.l.b16 %v2808
  %v2841 = vunpack.c.l.b16 %v2809
  %v2842 = vunpack.c.l.b16 %v2810
  %v2843 = vunpack.c.l.b16 %v2811
  %v2844 = vunpack.c.l.b16 %v2812
  %v2845 = vunpack.c.l.b16 %v2813
  %v2846 = vunpack.c.l.b16 %v2814
  %v2847 = vunpack.c.l.b16 %v2815
  %v2848 = vunpack.c.l.b16 %v2816
  %v2849 = vunpack.c.l.b16 %v2817
  %v2850 = vunpack.c.l.b16 %v2818
  %v2851 = vunpack.c.l.b16 %v2819
  %v2852 = vunpack.c.l.b16 %v2820
  %v2853 = vpack.c.b16 %v2838, %v2837
  %v2854 = vpack.c.b16 %v2840, %v2839
  %v2855 = vpack.c.b16 %v2842, %v2841
  %v2856 = vpack.c.b16 %v2844, %v2843
  %v2857 = vpack.c.b16 %v2846, %v2845
  %v2858 = vpack.c.b16 %v2848, %v2847
  %v2859 = vpack.c.b16 %v2850, %v2849
  %v2860 = vpack.c.b16 %v2852, %v2851
  %2869 = vmatpush.bf16.msra.mxu0 %v2860
  %2870 = vmatpush.bf16.msra.mxu0 %v2859
  %2871 = vmatpush.bf16.msra.mxu0 %v2858
  %2872 = vmatpush.bf16.msra.mxu0 %v2857
  %2873 = vmatpush.bf16.msra.mxu0 %v2856
  %2874 = vmatpush.bf16.msra.mxu0 %v2855
  %2875 = vmatpush.bf16.msra.mxu0 %v2854
  %2876 = vmatpush.bf16.msra.mxu0 %v2853
  %2877 = vmatmul.bf16.gmra.mxu0 %v2799
  %v2878 = vpop.f32.mrf.mxu0
  %v2879 = vadd.f32 0.0, %v2878
  %v2880 = vpop.f32.mrf.mxu0
  %v2881 = vadd.f32 0.0, %v2880
  %2882 = vmatmul.bf16.gmra.mxu0 %v2800
  %v2883 = vpop.f32.mrf.mxu0
  %v2884 = vadd.f32 0.0, %v2883
  %v2885 = vpop.f32.mrf.mxu0
  %v2886 = vadd.f32 0.0, %v2885
  %2887 = vmatmul.bf16.gmra.mxu0 %v2801
  %v2888 = vpop.f32.mrf.mxu0
  %v2889 = vadd.f32 0.0, %v2888
  %v2890 = vpop.f32.mrf.mxu0
  %v2891 = vadd.f32 0.0, %v2890
  %2892 = vmatmul.bf16.gmra.mxu0 %v2802
  %v2893 = vpop.f32.mrf.mxu0
  %v2894 = vadd.f32 0.0, %v2893
  %v2895 = vpop.f32.mrf.mxu0
  %v2896 = vadd.f32 0.0, %v2895
  %2897 = vmatmul.bf16.gmra.mxu0 %v2803
  %v2898 = vpop.f32.mrf.mxu0
  %v2899 = vadd.f32 0.0, %v2898
  %v2900 = vpop.f32.mrf.mxu0
  %v2901 = vadd.f32 0.0, %v2900
  %2902 = vdwg.mxu0
  %v2903 = vadd.f32 %v2777, %v2879
  %v2904 = vadd.f32 %v2778, %v2881
  %v2905 = vadd.f32 %v2779, %v2884
  %v2906 = vadd.f32 %v2780, %v2886
  %v2907 = vadd.f32 %v2781, %v2889
  %v2908 = vadd.f32 %v2782, %v2891
  %v2909 = vadd.f32 %v2783, %v2894
  %v2910 = vadd.f32 %v2784, %v2896
  %v2911 = vadd.f32 %v2785, %v2899
  %v2912 = vadd.f32 %v2786, %v2901
  %v2913 = vld [vmem:[%s593] ss:$2 sm:$0xff]
  %v2914 = vld [vmem:[%s595] ss:$2 sm:$0xff]
  %v2915 = vld [vmem:[%s597] ss:$2 sm:$0xff]
  %v2916 = vld [vmem:[%s599] ss:$2 sm:$0xff]
  %v2917 = vld [vmem:[%s601] ss:$2 sm:$0xff]
  %v2918 = vld [vmem:[%s603] ss:$2 sm:$0xff]
  %v2919 = vld [vmem:[%s605] ss:$2 sm:$0xff]
  %v2920 = vld [vmem:[%s607] ss:$2 sm:$0xff]
  %s2921 = scalar_lea.vmem [#allocation2], 161
  %v2922 = vld [vmem:[%s2921] ss:$2 sm:$0xff]
  %s2923 = scalar_lea.vmem [#allocation2], 177
  %v2924 = vld [vmem:[%s2923] ss:$2 sm:$0xff]
  %v2925 = vpack.c.bf16 %v2914, %v2913
  %v2926 = vpack.c.bf16 %v2916, %v2915
  %v2927 = vpack.c.bf16 %v2918, %v2917
  %v2928 = vpack.c.bf16 %v2920, %v2919
  %v2929 = vpack.c.bf16 %v2924, %v2922
  %s2930 = scalar_lea.vmem %s4, 1152
  %v2931 = vld [vmem:[%s2930] sm:$0xf]
  %v2932 = vld [vmem:[%s2930 + $0x4] sm:$0xf]
  %v2933 = vld [vmem:[%s2930 + $0x8] sm:$0xf]
  %v2934 = vld [vmem:[%s2930 + $0xc] sm:$0xf]
  %v2935 = vld [vmem:[%s2930 + $0x10] sm:$0xf]
  %v2936 = vld [vmem:[%s2930 + $0x14] sm:$0xf]
  %v2937 = vld [vmem:[%s2930 + $0x18] sm:$0xf]
  %v2938 = vld [vmem:[%s2930 + $0x1c] sm:$0xf]
  %v2939 = vld [vmem:[%s2930 + $0x20] sm:$0xf]
  %v2940 = vld [vmem:[%s2930 + $0x24] sm:$0xf]
  %v2941 = vld [vmem:[%s2930 + $0x28] sm:$0xf]
  %v2942 = vld [vmem:[%s2930 + $0x2c] sm:$0xf]
  %v2943 = vld [vmem:[%s2930 + $0x30] sm:$0xf]
  %v2944 = vld [vmem:[%s2930 + $0x34] sm:$0xf]
  %v2945 = vld [vmem:[%s2930 + $0x38] sm:$0xf]
  %v2946 = vld [vmem:[%s2930 + $0x3c] sm:$0xf]
  %v2963 = vunpack.c.l.b16 %v2931
  %v2964 = vunpack.c.l.b16 %v2932
  %v2965 = vunpack.c.l.b16 %v2933
  %v2966 = vunpack.c.l.b16 %v2934
  %v2967 = vunpack.c.l.b16 %v2935
  %v2968 = vunpack.c.l.b16 %v2936
  %v2969 = vunpack.c.l.b16 %v2937
  %v2970 = vunpack.c.l.b16 %v2938
  %v2971 = vunpack.c.l.b16 %v2939
  %v2972 = vunpack.c.l.b16 %v2940
  %v2973 = vunpack.c.l.b16 %v2941
  %v2974 = vunpack.c.l.b16 %v2942
  %v2975 = vunpack.c.l.b16 %v2943
  %v2976 = vunpack.c.l.b16 %v2944
  %v2977 = vunpack.c.l.b16 %v2945
  %v2978 = vunpack.c.l.b16 %v2946
  %v2979 = vpack.c.b16 %v2964, %v2963
  %v2980 = vpack.c.b16 %v2966, %v2965
  %v2981 = vpack.c.b16 %v2968, %v2967
  %v2982 = vpack.c.b16 %v2970, %v2969
  %v2983 = vpack.c.b16 %v2972, %v2971
  %v2984 = vpack.c.b16 %v2974, %v2973
  %v2985 = vpack.c.b16 %v2976, %v2975
  %v2986 = vpack.c.b16 %v2978, %v2977
  %2995 = vmatpush.bf16.msra.mxu0 %v2986
  %2996 = vmatpush.bf16.msra.mxu0 %v2985
  %2997 = vmatpush.bf16.msra.mxu0 %v2984
  %2998 = vmatpush.bf16.msra.mxu0 %v2983
  %2999 = vmatpush.bf16.msra.mxu0 %v2982
  %3000 = vmatpush.bf16.msra.mxu0 %v2981
  %3001 = vmatpush.bf16.msra.mxu0 %v2980
  %3002 = vmatpush.bf16.msra.mxu0 %v2979
  %3003 = vmatmul.bf16.gmra.mxu0 %v2925
  %v3004 = vpop.f32.mrf.mxu0
  %v3005 = vadd.f32 0.0, %v3004
  %v3006 = vpop.f32.mrf.mxu0
  %v3007 = vadd.f32 0.0, %v3006
  %3008 = vmatmul.bf16.gmra.mxu0 %v2926
  %v3009 = vpop.f32.mrf.mxu0
  %v3010 = vadd.f32 0.0, %v3009
  %v3011 = vpop.f32.mrf.mxu0
  %v3012 = vadd.f32 0.0, %v3011
  %3013 = vmatmul.bf16.gmra.mxu0 %v2927
  %v3014 = vpop.f32.mrf.mxu0
  %v3015 = vadd.f32 0.0, %v3014
  %v3016 = vpop.f32.mrf.mxu0
  %v3017 = vadd.f32 0.0, %v3016
  %3018 = vmatmul.bf16.gmra.mxu0 %v2928
  %v3019 = vpop.f32.mrf.mxu0
  %v3020 = vadd.f32 0.0, %v3019
  %v3021 = vpop.f32.mrf.mxu0
  %v3022 = vadd.f32 0.0, %v3021
  %3023 = vmatmul.bf16.gmra.mxu0 %v2929
  %v3024 = vpop.f32.mrf.mxu0
  %v3025 = vadd.f32 0.0, %v3024
  %v3026 = vpop.f32.mrf.mxu0
  %v3027 = vadd.f32 0.0, %v3026
  %3028 = vdwg.mxu0
  %v3029 = vadd.f32 %v2903, %v3005
  %v3030 = vadd.f32 %v2904, %v3007
  %v3031 = vadd.f32 %v2905, %v3010
  %v3032 = vadd.f32 %v2906, %v3012
  %v3033 = vadd.f32 %v2907, %v3015
  %v3034 = vadd.f32 %v2908, %v3017
  %v3035 = vadd.f32 %v2909, %v3020
  %v3036 = vadd.f32 %v2910, %v3022
  %v3037 = vadd.f32 %v2911, %v3025
  %v3038 = vadd.f32 %v2912, %v3027
  %v3039 = vld [vmem:[%s799] ss:$2 sm:$0xff]
  %v3040 = vld [vmem:[%s801] ss:$2 sm:$0xff]
  %v3041 = vld [vmem:[%s803] ss:$2 sm:$0xff]
  %v3042 = vld [vmem:[%s805] ss:$2 sm:$0xff]
  %v3043 = vld [vmem:[%s807] ss:$2 sm:$0xff]
  %v3044 = vld [vmem:[%s809] ss:$2 sm:$0xff]
  %v3045 = vld [vmem:[%s811] ss:$2 sm:$0xff]
  %v3046 = vld [vmem:[%s813] ss:$2 sm:$0xff]
  %s3047 = scalar_lea.vmem [#allocation2], 162
  %v3048 = vld [vmem:[%s3047] ss:$2 sm:$0xff]
  %s3049 = scalar_lea.vmem [#allocation2], 178
  %v3050 = vld [vmem:[%s3049] ss:$2 sm:$0xff]
  %v3051 = vpack.c.bf16 %v3040, %v3039
  %v3052 = vpack.c.bf16 %v3042, %v3041
  %v3053 = vpack.c.bf16 %v3044, %v3043
  %v3054 = vpack.c.bf16 %v3046, %v3045
  %v3055 = vpack.c.bf16 %v3050, %v3048
  %s3056 = scalar_lea.vmem %s4, 1216
  %v3057 = vld [vmem:[%s3056] sm:$0xf]
  %v3058 = vld [vmem:[%s3056 + $0x4] sm:$0xf]
  %v3059 = vld [vmem:[%s3056 + $0x8] sm:$0xf]
  %v3060 = vld [vmem:[%s3056 + $0xc] sm:$0xf]
  %v3061 = vld [vmem:[%s3056 + $0x10] sm:$0xf]
  %v3062 = vld [vmem:[%s3056 + $0x14] sm:$0xf]
  %v3063 = vld [vmem:[%s3056 + $0x18] sm:$0xf]
  %v3064 = vld [vmem:[%s3056 + $0x1c] sm:$0xf]
  %v3065 = vld [vmem:[%s3056 + $0x20] sm:$0xf]
  %v3066 = vld [vmem:[%s3056 + $0x24] sm:$0xf]
  %v3067 = vld [vmem:[%s3056 + $0x28] sm:$0xf]
  %v3068 = vld [vmem:[%s3056 + $0x2c] sm:$0xf]
  %v3069 = vld [vmem:[%s3056 + $0x30] sm:$0xf]
  %v3070 = vld [vmem:[%s3056 + $0x34] sm:$0xf]
  %v3071 = vld [vmem:[%s3056 + $0x38] sm:$0xf]
  %v3072 = vld [vmem:[%s3056 + $0x3c] sm:$0xf]
  %v3089 = vunpack.c.l.b16 %v3057
  %v3090 = vunpack.c.l.b16 %v3058
  %v3091 = vunpack.c.l.b16 %v3059
  %v3092 = vunpack.c.l.b16 %v3060
  %v3093 = vunpack.c.l.b16 %v3061
  %v3094 = vunpack.c.l.b16 %v3062
  %v3095 = vunpack.c.l.b16 %v3063
  %v3096 = vunpack.c.l.b16 %v3064
  %v3097 = vunpack.c.l.b16 %v3065
  %v3098 = vunpack.c.l.b16 %v3066
  %v3099 = vunpack.c.l.b16 %v3067
  %v3100 = vunpack.c.l.b16 %v3068
  %v3101 = vunpack.c.l.b16 %v3069
  %v3102 = vunpack.c.l.b16 %v3070
  %v3103 = vunpack.c.l.b16 %v3071
  %v3104 = vunpack.c.l.b16 %v3072
  %v3105 = vpack.c.b16 %v3090, %v3089
  %v3106 = vpack.c.b16 %v3092, %v3091
  %v3107 = vpack.c.b16 %v3094, %v3093
  %v3108 = vpack.c.b16 %v3096, %v3095
  %v3109 = vpack.c.b16 %v3098, %v3097
  %v3110 = vpack.c.b16 %v3100, %v3099
  %v3111 = vpack.c.b16 %v3102, %v3101
  %v3112 = vpack.c.b16 %v3104, %v3103
  %3121 = vmatpush.bf16.msra.mxu0 %v3112
  %3122 = vmatpush.bf16.msra.mxu0 %v3111
  %3123 = vmatpush.bf16.msra.mxu0 %v3110
  %3124 = vmatpush.bf16.msra.mxu0 %v3109
  %3125 = vmatpush.bf16.msra.mxu0 %v3108
  %3126 = vmatpush.bf16.msra.mxu0 %v3107
  %3127 = vmatpush.bf16.msra.mxu0 %v3106
  %3128 = vmatpush.bf16.msra.mxu0 %v3105
  %3129 = vmatmul.bf16.gmra.mxu0 %v3051
  %v3130 = vpop.f32.mrf.mxu0
  %v3131 = vadd.f32 0.0, %v3130
  %v3132 = vpop.f32.mrf.mxu0
  %v3133 = vadd.f32 0.0, %v3132
  %3134 = vmatmul.bf16.gmra.mxu0 %v3052
  %v3135 = vpop.f32.mrf.mxu0
  %v3136 = vadd.f32 0.0, %v3135
  %v3137 = vpop.f32.mrf.mxu0
  %v3138 = vadd.f32 0.0, %v3137
  %3139 = vmatmul.bf16.gmra.mxu0 %v3053
  %v3140 = vpop.f32.mrf.mxu0
  %v3141 = vadd.f32 0.0, %v3140
  %v3142 = vpop.f32.mrf.mxu0
  %v3143 = vadd.f32 0.0, %v3142
  %3144 = vmatmul.bf16.gmra.mxu0 %v3054
  %v3145 = vpop.f32.mrf.mxu0
  %v3146 = vadd.f32 0.0, %v3145
  %v3147 = vpop.f32.mrf.mxu0
  %v3148 = vadd.f32 0.0, %v3147
  %3149 = vmatmul.bf16.gmra.mxu0 %v3055
  %v3150 = vpop.f32.mrf.mxu0
  %v3151 = vadd.f32 0.0, %v3150
  %v3152 = vpop.f32.mrf.mxu0
  %v3153 = vadd.f32 0.0, %v3152
  %3154 = vdwg.mxu0
  %v3155 = vadd.f32 %v3029, %v3131
  %v3156 = vadd.f32 %v3030, %v3133
  %v3157 = vadd.f32 %v3031, %v3136
  %v3158 = vadd.f32 %v3032, %v3138
  %v3159 = vadd.f32 %v3033, %v3141
  %v3160 = vadd.f32 %v3034, %v3143
  %v3161 = vadd.f32 %v3035, %v3146
  %v3162 = vadd.f32 %v3036, %v3148
  %v3163 = vadd.f32 %v3037, %v3151
  %v3164 = vadd.f32 %v3038, %v3153
  %v3165 = vld [vmem:[%s2396] ss:$2 sm:$0xff]
  %v3166 = vld [vmem:[%s2398] ss:$2 sm:$0xff]
  %v3167 = vld [vmem:[%s2400] ss:$2 sm:$0xff]
  %v3168 = vld [vmem:[%s2402] ss:$2 sm:$0xff]
  %v3169 = vld [vmem:[%s2404] ss:$2 sm:$0xff]
  %v3170 = vld [vmem:[%s2406] ss:$2 sm:$0xff]
  %v3171 = vld [vmem:[%s2408] ss:$2 sm:$0xff]
  %v3172 = vld [vmem:[%s2410] ss:$2 sm:$0xff]
  %v3173 = vld [vmem:[%s2412] ss:$2 sm:$0xff]
  %s3174 = scalar_lea.vmem [#allocation2], 184
  %v3175 = vld [vmem:[%s3174] ss:$2 sm:$0xff]
  %v3176 = vpack.c.bf16 %v3166, %v3165
  %v3177 = vpack.c.bf16 %v3168, %v3167
  %v3178 = vpack.c.bf16 %v3170, %v3169
  %v3179 = vpack.c.bf16 %v3172, %v3171
  %v3180 = vpack.c.bf16 %v3175, %v3173
  %s3181 = scalar_lea.vmem %s4, 1280
  %v3182 = vld [vmem:[%s3181] sm:$0xf]
  %v3183 = vld [vmem:[%s3181 + $0x4] sm:$0xf]
  %v3184 = vld [vmem:[%s3181 + $0x8] sm:$0xf]
  %v3185 = vld [vmem:[%s3181 + $0xc] sm:$0xf]
  %v3186 = vld [vmem:[%s3181 + $0x10] sm:$0xf]
  %v3187 = vld [vmem:[%s3181 + $0x14] sm:$0xf]
  %v3188 = vld [vmem:[%s3181 + $0x18] sm:$0xf]
  %v3189 = vld [vmem:[%s3181 + $0x1c] sm:$0xf]
  %v3190 = vld [vmem:[%s3181 + $0x20] sm:$0xf]
  %v3191 = vld [vmem:[%s3181 + $0x24] sm:$0xf]
  %v3192 = vld [vmem:[%s3181 + $0x28] sm:$0xf]
  %v3193 = vld [vmem:[%s3181 + $0x2c] sm:$0xf]
  %v3194 = vld [vmem:[%s3181 + $0x30] sm:$0xf]
  %v3195 = vld [vmem:[%s3181 + $0x34] sm:$0xf]
  %v3196 = vld [vmem:[%s3181 + $0x38] sm:$0xf]
  %v3197 = vld [vmem:[%s3181 + $0x3c] sm:$0xf]
  %v3214 = vunpack.c.l.b16 %v3182
  %v3215 = vunpack.c.l.b16 %v3183
  %v3216 = vunpack.c.l.b16 %v3184
  %v3217 = vunpack.c.l.b16 %v3185
  %v3218 = vunpack.c.l.b16 %v3186
  %v3219 = vunpack.c.l.b16 %v3187
  %v3220 = vunpack.c.l.b16 %v3188
  %v3221 = vunpack.c.l.b16 %v3189
  %v3222 = vunpack.c.l.b16 %v3190
  %v3223 = vunpack.c.l.b16 %v3191
  %v3224 = vunpack.c.l.b16 %v3192
  %v3225 = vunpack.c.l.b16 %v3193
  %v3226 = vunpack.c.l.b16 %v3194
  %v3227 = vunpack.c.l.b16 %v3195
  %v3228 = vunpack.c.l.b16 %v3196
  %v3229 = vunpack.c.l.b16 %v3197
  %v3230 = vpack.c.b16 %v3215, %v3214
  %v3231 = vpack.c.b16 %v3217, %v3216
  %v3232 = vpack.c.b16 %v3219, %v3218
  %v3233 = vpack.c.b16 %v3221, %v3220
  %v3234 = vpack.c.b16 %v3223, %v3222
  %v3235 = vpack.c.b16 %v3225, %v3224
  %v3236 = vpack.c.b16 %v3227, %v3226
  %v3237 = vpack.c.b16 %v3229, %v3228
  %3246 = vmatpush.bf16.msra.mxu0 %v3237
  %3247 = vmatpush.bf16.msra.mxu0 %v3236
  %3248 = vmatpush.bf16.msra.mxu0 %v3235
  %3249 = vmatpush.bf16.msra.mxu0 %v3234
  %3250 = vmatpush.bf16.msra.mxu0 %v3233
  %3251 = vmatpush.bf16.msra.mxu0 %v3232
  %3252 = vmatpush.bf16.msra.mxu0 %v3231
  %3253 = vmatpush.bf16.msra.mxu0 %v3230
  %3254 = vmatmul.bf16.gmra.mxu0 %v3176
  %v3255 = vpop.f32.mrf.mxu0
  %v3256 = vadd.f32 0.0, %v3255
  %v3257 = vpop.f32.mrf.mxu0
  %v3258 = vadd.f32 0.0, %v3257
  %3259 = vmatmul.bf16.gmra.mxu0 %v3177
  %v3260 = vpop.f32.mrf.mxu0
  %v3261 = vadd.f32 0.0, %v3260
  %v3262 = vpop.f32.mrf.mxu0
  %v3263 = vadd.f32 0.0, %v3262
  %3264 = vmatmul.bf16.gmra.mxu0 %v3178
  %v3265 = vpop.f32.mrf.mxu0
  %v3266 = vadd.f32 0.0, %v3265
  %v3267 = vpop.f32.mrf.mxu0
  %v3268 = vadd.f32 0.0, %v3267
  %3269 = vmatmul.bf16.gmra.mxu0 %v3179
  %v3270 = vpop.f32.mrf.mxu0
  %v3271 = vadd.f32 0.0, %v3270
  %v3272 = vpop.f32.mrf.mxu0
  %v3273 = vadd.f32 0.0, %v3272
  %3274 = vmatmul.bf16.gmra.mxu0 %v3180
  %v3275 = vpop.f32.mrf.mxu0
  %v3276 = vadd.f32 0.0, %v3275
  %v3277 = vpop.f32.mrf.mxu0
  %v3278 = vadd.f32 0.0, %v3277
  %3279 = vdwg.mxu0
  %v3280 = vadd.f32 %v3155, %v3256
  %v3281 = vadd.f32 %v3156, %v3258
  %v3282 = vadd.f32 %v3157, %v3261
  %v3283 = vadd.f32 %v3158, %v3263
  %v3284 = vadd.f32 %v3159, %v3266
  %v3285 = vadd.f32 %v3160, %v3268
  %v3286 = vadd.f32 %v3161, %v3271
  %v3287 = vadd.f32 %v3162, %v3273
  %v3288 = vadd.f32 %v3163, %v3276
  %v3289 = vadd.f32 %v3164, %v3278
  %s3290 = scalar_lea.vmem [#allocation2], 41
  %v3291 = vld [vmem:[%s3290] ss:$2 sm:$0xff]
  %s3292 = scalar_lea.vmem [#allocation2], 57
  %v3293 = vld [vmem:[%s3292] ss:$2 sm:$0xff]
  %s3294 = scalar_lea.vmem [#allocation2], 73
  %v3295 = vld [vmem:[%s3294] ss:$2 sm:$0xff]
  %s3296 = scalar_lea.vmem [#allocation2], 89
  %v3297 = vld [vmem:[%s3296] ss:$2 sm:$0xff]
  %s3298 = scalar_lea.vmem [#allocation2], 105
  %v3299 = vld [vmem:[%s3298] ss:$2 sm:$0xff]
  %s3300 = scalar_lea.vmem [#allocation2], 121
  %v3301 = vld [vmem:[%s3300] ss:$2 sm:$0xff]
  %s3302 = scalar_lea.vmem [#allocation2], 137
  %v3303 = vld [vmem:[%s3302] ss:$2 sm:$0xff]
  %s3304 = scalar_lea.vmem [#allocation2], 153
  %v3305 = vld [vmem:[%s3304] ss:$2 sm:$0xff]
  %s3306 = scalar_lea.vmem [#allocation2], 169
  %v3307 = vld [vmem:[%s3306] ss:$2 sm:$0xff]
  %s3308 = scalar_lea.vmem [#allocation2], 185
  %v3309 = vld [vmem:[%s3308] ss:$2 sm:$0xff]
  %v3310 = vpack.c.bf16 %v3293, %v3291
  %v3311 = vpack.c.bf16 %v3297, %v3295
  %v3312 = vpack.c.bf16 %v3301, %v3299
  %v3313 = vpack.c.bf16 %v3305, %v3303
  %v3314 = vpack.c.bf16 %v3309, %v3307
  %s3315 = scalar_lea.vmem %s4, 1344
  %v3316 = vld [vmem:[%s3315] sm:$0xf]
  %v3317 = vld [vmem:[%s3315 + $0x4] sm:$0xf]
  %v3318 = vld [vmem:[%s3315 + $0x8] sm:$0xf]
  %v3319 = vld [vmem:[%s3315 + $0xc] sm:$0xf]
  %v3320 = vld [vmem:[%s3315 + $0x10] sm:$0xf]
  %v3321 = vld [vmem:[%s3315 + $0x14] sm:$0xf]
  %v3322 = vld [vmem:[%s3315 + $0x18] sm:$0xf]
  %v3323 = vld [vmem:[%s3315 + $0x1c] sm:$0xf]
  %v3324 = vld [vmem:[%s3315 + $0x20] sm:$0xf]
  %v3325 = vld [vmem:[%s3315 + $0x24] sm:$0xf]
  %v3326 = vld [vmem:[%s3315 + $0x28] sm:$0xf]
  %v3327 = vld [vmem:[%s3315 + $0x2c] sm:$0xf]
  %v3328 = vld [vmem:[%s3315 + $0x30] sm:$0xf]
  %v3329 = vld [vmem:[%s3315 + $0x34] sm:$0xf]
  %v3330 = vld [vmem:[%s3315 + $0x38] sm:$0xf]
  %v3331 = vld [vmem:[%s3315 + $0x3c] sm:$0xf]
  %v3348 = vunpack.c.l.b16 %v3316
  %v3349 = vunpack.c.l.b16 %v3317
  %v3350 = vunpack.c.l.b16 %v3318
  %v3351 = vunpack.c.l.b16 %v3319
  %v3352 = vunpack.c.l.b16 %v3320
  %v3353 = vunpack.c.l.b16 %v3321
  %v3354 = vunpack.c.l.b16 %v3322
  %v3355 = vunpack.c.l.b16 %v3323
  %v3356 = vunpack.c.l.b16 %v3324
  %v3357 = vunpack.c.l.b16 %v3325
  %v3358 = vunpack.c.l.b16 %v3326
  %v3359 = vunpack.c.l.b16 %v3327
  %v3360 = vunpack.c.l.b16 %v3328
  %v3361 = vunpack.c.l.b16 %v3329
  %v3362 = vunpack.c.l.b16 %v3330
  %v3363 = vunpack.c.l.b16 %v3331
  %v3364 = vpack.c.b16 %v3349, %v3348
  %v3365 = vpack.c.b16 %v3351, %v3350
  %v3366 = vpack.c.b16 %v3353, %v3352
  %v3367 = vpack.c.b16 %v3355, %v3354
  %v3368 = vpack.c.b16 %v3357, %v3356
  %v3369 = vpack.c.b16 %v3359, %v3358
  %v3370 = vpack.c.b16 %v3361, %v3360
  %v3371 = vpack.c.b16 %v3363, %v3362
  %3380 = vmatpush.bf16.msra.mxu0 %v3371
  %3381 = vmatpush.bf16.msra.mxu0 %v3370
  %3382 = vmatpush.bf16.msra.mxu0 %v3369
  %3383 = vmatpush.bf16.msra.mxu0 %v3368
  %3384 = vmatpush.bf16.msra.mxu0 %v3367
  %3385 = vmatpush.bf16.msra.mxu0 %v3366
  %3386 = vmatpush.bf16.msra.mxu0 %v3365
  %3387 = vmatpush.bf16.msra.mxu0 %v3364
  %3388 = vmatmul.bf16.gmra.mxu0 %v3310
  %v3389 = vpop.f32.mrf.mxu0
  %v3390 = vadd.f32 0.0, %v3389
  %v3391 = vpop.f32.mrf.mxu0
  %v3392 = vadd.f32 0.0, %v3391
  %3393 = vmatmul.bf16.gmra.mxu0 %v3311
  %v3394 = vpop.f32.mrf.mxu0
  %v3395 = vadd.f32 0.0, %v3394
  %v3396 = vpop.f32.mrf.mxu0
  %v3397 = vadd.f32 0.0, %v3396
  %3398 = vmatmul.bf16.gmra.mxu0 %v3312
  %v3399 = vpop.f32.mrf.mxu0
  %v3400 = vadd.f32 0.0, %v3399
  %v3401 = vpop.f32.mrf.mxu0
  %v3402 = vadd.f32 0.0, %v3401
  %3403 = vmatmul.bf16.gmra.mxu0 %v3313
  %v3404 = vpop.f32.mrf.mxu0
  %v3405 = vadd.f32 0.0, %v3404
  %v3406 = vpop.f32.mrf.mxu0
  %v3407 = vadd.f32 0.0, %v3406
  %3408 = vmatmul.bf16.gmra.mxu0 %v3314
  %v3409 = vpop.f32.mrf.mxu0
  %v3410 = vadd.f32 0.0, %v3409
  %v3411 = vpop.f32.mrf.mxu0
  %v3412 = vadd.f32 0.0, %v3411
  %3413 = vdwg.mxu0
  %v3414 = vadd.f32 %v3280, %v3390
  %v3415 = vadd.f32 %v3281, %v3392
  %v3416 = vadd.f32 %v3282, %v3395
  %v3417 = vadd.f32 %v3283, %v3397
  %v3418 = vadd.f32 %v3284, %v3400
  %v3419 = vadd.f32 %v3285, %v3402
  %v3420 = vadd.f32 %v3286, %v3405
  %v3421 = vadd.f32 %v3287, %v3407
  %v3422 = vadd.f32 %v3288, %v3410
  %v3423 = vadd.f32 %v3289, %v3412
  %v3424 = vld [vmem:[%s1201] ss:$2 sm:$0xff]
  %v3425 = vld [vmem:[%s1203] ss:$2 sm:$0xff]
  %v3426 = vld [vmem:[%s1205] ss:$2 sm:$0xff]
  %v3427 = vld [vmem:[%s1207] ss:$2 sm:$0xff]
  %v3428 = vld [vmem:[%s1209] ss:$2 sm:$0xff]
  %v3429 = vld [vmem:[%s1211] ss:$2 sm:$0xff]
  %v3430 = vld [vmem:[%s1213] ss:$2 sm:$0xff]
  %v3431 = vld [vmem:[%s1215] ss:$2 sm:$0xff]
  %s3432 = scalar_lea.vmem [#allocation2], 170
  %v3433 = vld [vmem:[%s3432] ss:$2 sm:$0xff]
  %s3434 = scalar_lea.vmem [#allocation2], 186
  %v3435 = vld [vmem:[%s3434] ss:$2 sm:$0xff]
  %v3436 = vpack.c.bf16 %v3425, %v3424
  %v3437 = vpack.c.bf16 %v3427, %v3426
  %v3438 = vpack.c.bf16 %v3429, %v3428
  %v3439 = vpack.c.bf16 %v3431, %v3430
  %v3440 = vpack.c.bf16 %v3435, %v3433
  %s3441 = scalar_lea.vmem %s4, 1408
  %v3442 = vld [vmem:[%s3441] sm:$0xf]
  %v3443 = vld [vmem:[%s3441 + $0x4] sm:$0xf]
  %v3444 = vld [vmem:[%s3441 + $0x8] sm:$0xf]
  %v3445 = vld [vmem:[%s3441 + $0xc] sm:$0xf]
  %v3446 = vld [vmem:[%s3441 + $0x10] sm:$0xf]
  %v3447 = vld [vmem:[%s3441 + $0x14] sm:$0xf]
  %v3448 = vld [vmem:[%s3441 + $0x18] sm:$0xf]
  %v3449 = vld [vmem:[%s3441 + $0x1c] sm:$0xf]
  %v3450 = vld [vmem:[%s3441 + $0x20] sm:$0xf]
  %v3451 = vld [vmem:[%s3441 + $0x24] sm:$0xf]
  %v3452 = vld [vmem:[%s3441 + $0x28] sm:$0xf]
  %v3453 = vld [vmem:[%s3441 + $0x2c] sm:$0xf]
  %v3454 = vld [vmem:[%s3441 + $0x30] sm:$0xf]
  %v3455 = vld [vmem:[%s3441 + $0x34] sm:$0xf]
  %v3456 = vld [vmem:[%s3441 + $0x38] sm:$0xf]
  %v3457 = vld [vmem:[%s3441 + $0x3c] sm:$0xf]
  %v3474 = vunpack.c.l.b16 %v3442
  %v3475 = vunpack.c.l.b16 %v3443
  %v3476 = vunpack.c.l.b16 %v3444
  %v3477 = vunpack.c.l.b16 %v3445
  %v3478 = vunpack.c.l.b16 %v3446
  %v3479 = vunpack.c.l.b16 %v3447
  %v3480 = vunpack.c.l.b16 %v3448
  %v3481 = vunpack.c.l.b16 %v3449
  %v3482 = vunpack.c.l.b16 %v3450
  %v3483 = vunpack.c.l.b16 %v3451
  %v3484 = vunpack.c.l.b16 %v3452
  %v3485 = vunpack.c.l.b16 %v3453
  %v3486 = vunpack.c.l.b16 %v3454
  %v3487 = vunpack.c.l.b16 %v3455
  %v3488 = vunpack.c.l.b16 %v3456
  %v3489 = vunpack.c.l.b16 %v3457
  %v3490 = vpack.c.b16 %v3475, %v3474
  %v3491 = vpack.c.b16 %v3477, %v3476
  %v3492 = vpack.c.b16 %v3479, %v3478
  %v3493 = vpack.c.b16 %v3481, %v3480
  %v3494 = vpack.c.b16 %v3483, %v3482
  %v3495 = vpack.c.b16 %v3485, %v3484
  %v3496 = vpack.c.b16 %v3487, %v3486
  %v3497 = vpack.c.b16 %v3489, %v3488
  %3506 = vmatpush.bf16.msra.mxu0 %v3497
  %3507 = vmatpush.bf16.msra.mxu0 %v3496
  %3508 = vmatpush.bf16.msra.mxu0 %v3495
  %3509 = vmatpush.bf16.msra.mxu0 %v3494
  %3510 = vmatpush.bf16.msra.mxu0 %v3493
  %3511 = vmatpush.bf16.msra.mxu0 %v3492
  %3512 = vmatpush.bf16.msra.mxu0 %v3491
  %3513 = vmatpush.bf16.msra.mxu0 %v3490
  %3514 = vmatmul.bf16.gmra.mxu0 %v3436
  %v3515 = vpop.f32.mrf.mxu0
  %v3516 = vadd.f32 0.0, %v3515
  %v3517 = vpop.f32.mrf.mxu0
  %v3518 = vadd.f32 0.0, %v3517
  %3519 = vmatmul.bf16.gmra.mxu0 %v3437
  %v3520 = vpop.f32.mrf.mxu0
  %v3521 = vadd.f32 0.0, %v3520
  %v3522 = vpop.f32.mrf.mxu0
  %v3523 = vadd.f32 0.0, %v3522
  %3524 = vmatmul.bf16.gmra.mxu0 %v3438
  %v3525 = vpop.f32.mrf.mxu0
  %v3526 = vadd.f32 0.0, %v3525
  %v3527 = vpop.f32.mrf.mxu0
  %v3528 = vadd.f32 0.0, %v3527
  %3529 = vmatmul.bf16.gmra.mxu0 %v3439
  %v3530 = vpop.f32.mrf.mxu0
  %v3531 = vadd.f32 0.0, %v3530
  %v3532 = vpop.f32.mrf.mxu0
  %v3533 = vadd.f32 0.0, %v3532
  %3534 = vmatmul.bf16.gmra.mxu0 %v3440
  %v3535 = vpop.f32.mrf.mxu0
  %v3536 = vadd.f32 0.0, %v3535
  %v3537 = vpop.f32.mrf.mxu0
  %v3538 = vadd.f32 0.0, %v3537
  %3539 = vdwg.mxu0
  %v3540 = vadd.f32 %v3414, %v3516
  %v3541 = vadd.f32 %v3415, %v3518
  %v3542 = vadd.f32 %v3416, %v3521
  %v3543 = vadd.f32 %v3417, %v3523
  %v3544 = vadd.f32 %v3418, %v3526
  %v3545 = vadd.f32 %v3419, %v3528
  %v3546 = vadd.f32 %v3420, %v3531
  %v3547 = vadd.f32 %v3421, %v3533
  %v3548 = vadd.f32 %v3422, %v3536
  %v3549 = vadd.f32 %v3423, %v3538
  %v3550 = vld [vmem:[%s1335] ss:$2 sm:$0xff]
  %v3551 = vld [vmem:[%s1337] ss:$2 sm:$0xff]
  %v3552 = vld [vmem:[%s1339] ss:$2 sm:$0xff]
  %v3553 = vld [vmem:[%s1341] ss:$2 sm:$0xff]
  %v3554 = vld [vmem:[%s1343] ss:$2 sm:$0xff]
  %v3555 = vld [vmem:[%s1345] ss:$2 sm:$0xff]
  %v3556 = vld [vmem:[%s1347] ss:$2 sm:$0xff]
  %v3557 = vld [vmem:[%s1349] ss:$2 sm:$0xff]
  %s3558 = scalar_lea.vmem [#allocation2], 171
  %v3559 = vld [vmem:[%s3558] ss:$2 sm:$0xff]
  %s3560 = scalar_lea.vmem [#allocation2], 187
  %v3561 = vld [vmem:[%s3560] ss:$2 sm:$0xff]
  %v3562 = vpack.c.bf16 %v3551, %v3550
  %v3563 = vpack.c.bf16 %v3553, %v3552
  %v3564 = vpack.c.bf16 %v3555, %v3554
  %v3565 = vpack.c.bf16 %v3557, %v3556
  %v3566 = vpack.c.bf16 %v3561, %v3559
  %s3567 = scalar_lea.vmem %s4, 1472
  %v3568 = vld [vmem:[%s3567] sm:$0xf]
  %v3569 = vld [vmem:[%s3567 + $0x4] sm:$0xf]
  %v3570 = vld [vmem:[%s3567 + $0x8] sm:$0xf]
  %v3571 = vld [vmem:[%s3567 + $0xc] sm:$0xf]
  %v3572 = vld [vmem:[%s3567 + $0x10] sm:$0xf]
  %v3573 = vld [vmem:[%s3567 + $0x14] sm:$0xf]
  %v3574 = vld [vmem:[%s3567 + $0x18] sm:$0xf]
  %v3575 = vld [vmem:[%s3567 + $0x1c] sm:$0xf]
  %v3576 = vld [vmem:[%s3567 + $0x20] sm:$0xf]
  %v3577 = vld [vmem:[%s3567 + $0x24] sm:$0xf]
  %v3578 = vld [vmem:[%s3567 + $0x28] sm:$0xf]
  %v3579 = vld [vmem:[%s3567 + $0x2c] sm:$0xf]
  %v3580 = vld [vmem:[%s3567 + $0x30] sm:$0xf]
  %v3581 = vld [vmem:[%s3567 + $0x34] sm:$0xf]
  %v3582 = vld [vmem:[%s3567 + $0x38] sm:$0xf]
  %v3583 = vld [vmem:[%s3567 + $0x3c] sm:$0xf]
  %v3600 = vunpack.c.l.b16 %v3568
  %v3601 = vunpack.c.l.b16 %v3569
  %v3602 = vunpack.c.l.b16 %v3570
  %v3603 = vunpack.c.l.b16 %v3571
  %v3604 = vunpack.c.l.b16 %v3572
  %v3605 = vunpack.c.l.b16 %v3573
  %v3606 = vunpack.c.l.b16 %v3574
  %v3607 = vunpack.c.l.b16 %v3575
  %v3608 = vunpack.c.l.b16 %v3576
  %v3609 = vunpack.c.l.b16 %v3577
  %v3610 = vunpack.c.l.b16 %v3578
  %v3611 = vunpack.c.l.b16 %v3579
  %v3612 = vunpack.c.l.b16 %v3580
  %v3613 = vunpack.c.l.b16 %v3581
  %v3614 = vunpack.c.l.b16 %v3582
  %v3615 = vunpack.c.l.b16 %v3583
  %v3616 = vpack.c.b16 %v3601, %v3600
  %v3617 = vpack.c.b16 %v3603, %v3602
  %v3618 = vpack.c.b16 %v3605, %v3604
  %v3619 = vpack.c.b16 %v3607, %v3606
  %v3620 = vpack.c.b16 %v3609, %v3608
  %v3621 = vpack.c.b16 %v3611, %v3610
  %v3622 = vpack.c.b16 %v3613, %v3612
  %v3623 = vpack.c.b16 %v3615, %v3614
  %3632 = vmatpush.bf16.msra.mxu0 %v3623
  %3633 = vmatpush.bf16.msra.mxu0 %v3622
  %3634 = vmatpush.bf16.msra.mxu0 %v3621
  %3635 = vmatpush.bf16.msra.mxu0 %v3620
  %3636 = vmatpush.bf16.msra.mxu0 %v3619
  %3637 = vmatpush.bf16.msra.mxu0 %v3618
  %3638 = vmatpush.bf16.msra.mxu0 %v3617
  %3639 = vmatpush.bf16.msra.mxu0 %v3616
  %3640 = vmatmul.bf16.gmra.mxu0 %v3562
  %v3641 = vpop.f32.mrf.mxu0
  %v3642 = vadd.f32 0.0, %v3641
  %v3643 = vpop.f32.mrf.mxu0
  %v3644 = vadd.f32 0.0, %v3643
  %3645 = vmatmul.bf16.gmra.mxu0 %v3563
  %v3646 = vpop.f32.mrf.mxu0
  %v3647 = vadd.f32 0.0, %v3646
  %v3648 = vpop.f32.mrf.mxu0
  %v3649 = vadd.f32 0.0, %v3648
  %3650 = vmatmul.bf16.gmra.mxu0 %v3564
  %v3651 = vpop.f32.mrf.mxu0
  %v3652 = vadd.f32 0.0, %v3651
  %v3653 = vpop.f32.mrf.mxu0
  %v3654 = vadd.f32 0.0, %v3653
  %3655 = vmatmul.bf16.gmra.mxu0 %v3565
  %v3656 = vpop.f32.mrf.mxu0
  %v3657 = vadd.f32 0.0, %v3656
  %v3658 = vpop.f32.mrf.mxu0
  %v3659 = vadd.f32 0.0, %v3658
  %3660 = vmatmul.bf16.gmra.mxu0 %v3566
  %v3661 = vpop.f32.mrf.mxu0
  %v3662 = vadd.f32 0.0, %v3661
  %v3663 = vpop.f32.mrf.mxu0
  %v3664 = vadd.f32 0.0, %v3663
  %3665 = vdwg.mxu0
  %v3666 = vadd.f32 %v3540, %v3642
  %v3667 = vadd.f32 %v3541, %v3644
  %v3668 = vadd.f32 %v3542, %v3647
  %v3669 = vadd.f32 %v3543, %v3649
  %v3670 = vadd.f32 %v3544, %v3652
  %v3671 = vadd.f32 %v3545, %v3654
  %v3672 = vadd.f32 %v3546, %v3657
  %v3673 = vadd.f32 %v3547, %v3659
  %v3674 = vadd.f32 %v3548, %v3662
  %v3675 = vadd.f32 %v3549, %v3664
  %v3676 = vld [vmem:[%s1469] ss:$2 sm:$0xff]
  %v3677 = vld [vmem:[%s1471] ss:$2 sm:$0xff]
  %v3678 = vld [vmem:[%s1473] ss:$2 sm:$0xff]
  %v3679 = vld [vmem:[%s1475] ss:$2 sm:$0xff]
  %v3680 = vld [vmem:[%s1477] ss:$2 sm:$0xff]
  %v3681 = vld [vmem:[%s1479] ss:$2 sm:$0xff]
  %v3682 = vld [vmem:[%s1481] ss:$2 sm:$0xff]
  %v3683 = vld [vmem:[%s1483] ss:$2 sm:$0xff]
  %s3684 = scalar_lea.vmem [#allocation2], 172
  %v3685 = vld [vmem:[%s3684] ss:$2 sm:$0xff]
  %s3686 = scalar_lea.vmem [#allocation2], 188
  %v3687 = vld [vmem:[%s3686] ss:$2 sm:$0xff]
  %v3688 = vpack.c.bf16 %v3677, %v3676
  %v3689 = vpack.c.bf16 %v3679, %v3678
  %v3690 = vpack.c.bf16 %v3681, %v3680
  %v3691 = vpack.c.bf16 %v3683, %v3682
  %v3692 = vpack.c.bf16 %v3687, %v3685
  %s3693 = scalar_lea.vmem %s4, 1536
  %v3694 = vld [vmem:[%s3693] sm:$0xf]
  %v3695 = vld [vmem:[%s3693 + $0x4] sm:$0xf]
  %v3696 = vld [vmem:[%s3693 + $0x8] sm:$0xf]
  %v3697 = vld [vmem:[%s3693 + $0xc] sm:$0xf]
  %v3698 = vld [vmem:[%s3693 + $0x10] sm:$0xf]
  %v3699 = vld [vmem:[%s3693 + $0x14] sm:$0xf]
  %v3700 = vld [vmem:[%s3693 + $0x18] sm:$0xf]
  %v3701 = vld [vmem:[%s3693 + $0x1c] sm:$0xf]
  %v3702 = vld [vmem:[%s3693 + $0x20] sm:$0xf]
  %v3703 = vld [vmem:[%s3693 + $0x24] sm:$0xf]
  %v3704 = vld [vmem:[%s3693 + $0x28] sm:$0xf]
  %v3705 = vld [vmem:[%s3693 + $0x2c] sm:$0xf]
  %v3706 = vld [vmem:[%s3693 + $0x30] sm:$0xf]
  %v3707 = vld [vmem:[%s3693 + $0x34] sm:$0xf]
  %v3708 = vld [vmem:[%s3693 + $0x38] sm:$0xf]
  %v3709 = vld [vmem:[%s3693 + $0x3c] sm:$0xf]
  %v3726 = vunpack.c.l.b16 %v3694
  %v3727 = vunpack.c.l.b16 %v3695
  %v3728 = vunpack.c.l.b16 %v3696
  %v3729 = vunpack.c.l.b16 %v3697
  %v3730 = vunpack.c.l.b16 %v3698
  %v3731 = vunpack.c.l.b16 %v3699
  %v3732 = vunpack.c.l.b16 %v3700
  %v3733 = vunpack.c.l.b16 %v3701
  %v3734 = vunpack.c.l.b16 %v3702
  %v3735 = vunpack.c.l.b16 %v3703
  %v3736 = vunpack.c.l.b16 %v3704
  %v3737 = vunpack.c.l.b16 %v3705
  %v3738 = vunpack.c.l.b16 %v3706
  %v3739 = vunpack.c.l.b16 %v3707
  %v3740 = vunpack.c.l.b16 %v3708
  %v3741 = vunpack.c.l.b16 %v3709
  %v3742 = vpack.c.b16 %v3727, %v3726
  %v3743 = vpack.c.b16 %v3729, %v3728
  %v3744 = vpack.c.b16 %v3731, %v3730
  %v3745 = vpack.c.b16 %v3733, %v3732
  %v3746 = vpack.c.b16 %v3735, %v3734
  %v3747 = vpack.c.b16 %v3737, %v3736
  %v3748 = vpack.c.b16 %v3739, %v3738
  %v3749 = vpack.c.b16 %v3741, %v3740
  %3758 = vmatpush.bf16.msra.mxu0 %v3749
  %3759 = vmatpush.bf16.msra.mxu0 %v3748
  %3760 = vmatpush.bf16.msra.mxu0 %v3747
  %3761 = vmatpush.bf16.msra.mxu0 %v3746
  %3762 = vmatpush.bf16.msra.mxu0 %v3745
  %3763 = vmatpush.bf16.msra.mxu0 %v3744
  %3764 = vmatpush.bf16.msra.mxu0 %v3743
  %3765 = vmatpush.bf16.msra.mxu0 %v3742
  %3766 = vmatmul.bf16.gmra.mxu0 %v3688
  %v3767 = vpop.f32.mrf.mxu0
  %v3768 = vadd.f32 0.0, %v3767
  %v3769 = vpop.f32.mrf.mxu0
  %v3770 = vadd.f32 0.0, %v3769
  %3771 = vmatmul.bf16.gmra.mxu0 %v3689
  %v3772 = vpop.f32.mrf.mxu0
  %v3773 = vadd.f32 0.0, %v3772
  %v3774 = vpop.f32.mrf.mxu0
  %v3775 = vadd.f32 0.0, %v3774
  %3776 = vmatmul.bf16.gmra.mxu0 %v3690
  %v3777 = vpop.f32.mrf.mxu0
  %v3778 = vadd.f32 0.0, %v3777
  %v3779 = vpop.f32.mrf.mxu0
  %v3780 = vadd.f32 0.0, %v3779
  %3781 = vmatmul.bf16.gmra.mxu0 %v3691
  %v3782 = vpop.f32.mrf.mxu0
  %v3783 = vadd.f32 0.0, %v3782
  %v3784 = vpop.f32.mrf.mxu0
  %v3785 = vadd.f32 0.0, %v3784
  %3786 = vmatmul.bf16.gmra.mxu0 %v3692
  %v3787 = vpop.f32.mrf.mxu0
  %v3788 = vadd.f32 0.0, %v3787
  %v3789 = vpop.f32.mrf.mxu0
  %v3790 = vadd.f32 0.0, %v3789
  %3791 = vdwg.mxu0
  %v3792 = vadd.f32 %v3666, %v3768
  %v3793 = vadd.f32 %v3667, %v3770
  %v3794 = vadd.f32 %v3668, %v3773
  %v3795 = vadd.f32 %v3669, %v3775
  %v3796 = vadd.f32 %v3670, %v3778
  %v3797 = vadd.f32 %v3671, %v3780
  %v3798 = vadd.f32 %v3672, %v3783
  %v3799 = vadd.f32 %v3673, %v3785
  %v3800 = vadd.f32 %v3674, %v3788
  %v3801 = vadd.f32 %v3675, %v3790
  %v3802 = vld [vmem:[%s5] sm:$0x1]
  %v3803 = vld [vmem:[%s6] sm:$0x1]
  %v3804 = vld [vmem:[%s10] sm:$0xff]
  %v3805 = vld [vmem:[%s10 + $0x8] sm:$0xff]
  %v3806 = vld [vmem:[%s10 + $0x10] sm:$0xff]
  %v3807 = vld [vmem:[%s10 + $0x18] sm:$0xff]
  %v3808 = vld [vmem:[%s10 + $0x20] sm:$0xff]
  %v3809 = vld [vmem:[%s10 + $0x28] sm:$0xff]
  %v3810 = vld [vmem:[%s10 + $0x30] sm:$0xff]
  %v3811 = vld [vmem:[%s10 + $0x38] sm:$0xff]
  %v3812 = vld [vmem:[%s10 + $0x40] sm:$0xff]
  %v3813 = vld [vmem:[%s10 + $0x48] sm:$0xff]
  %3815 = vset.pattern.permute.xlu0 0
  %3816 = vperm.xlu0 %3815, %v3804
  %v3817 = vpop.permute.xlu0 %3816
  %3820 = vset.pattern.permute.xlu0 0
  %3821 = vperm.xlu0 %3820, %v3805
  %v3822 = vpop.permute.xlu0 %3821
  %3825 = vset.pattern.permute.xlu0 0
  %3826 = vperm.xlu0 %3825, %v3806
  %v3827 = vpop.permute.xlu0 %3826
  %3830 = vset.pattern.permute.xlu0 0
  %3831 = vperm.xlu0 %3830, %v3807
  %v3832 = vpop.permute.xlu0 %3831
  %3835 = vset.pattern.permute.xlu0 0
  %3836 = vperm.xlu0 %3835, %v3808
  %v3837 = vpop.permute.xlu0 %3836
  %3840 = vset.pattern.permute.xlu0 0
  %3841 = vperm.xlu0 %3840, %v3809
  %v3842 = vpop.permute.xlu0 %3841
  %3845 = vset.pattern.permute.xlu0 0
  %3846 = vperm.xlu0 %3845, %v3810
  %v3847 = vpop.permute.xlu0 %3846
  %3850 = vset.pattern.permute.xlu0 0
  %3851 = vperm.xlu0 %3850, %v3811
  %v3852 = vpop.permute.xlu0 %3851
  %3855 = vset.pattern.permute.xlu0 0
  %3856 = vperm.xlu0 %3855, %v3812
  %v3857 = vpop.permute.xlu0 %3856
  %3860 = vset.pattern.permute.xlu0 0
  %3861 = vperm.xlu0 %3860, %v3813
  %v3862 = vpop.permute.xlu0 %3861
  %v3864 = vmul.f32 %v3792, %v3817
  %v3865 = vmul.f32 %v3793, %v3822
  %v3866 = vmul.f32 %v3794, %v3827
  %v3867 = vmul.f32 %v3795, %v3832
  %v3868 = vmul.f32 %v3796, %v3837
  %v3869 = vmul.f32 %v3797, %v3842
  %v3870 = vmul.f32 %v3798, %v3847
  %v3871 = vmul.f32 %v3799, %v3852
  %v3872 = vmul.f32 %v3800, %v3857
  %v3873 = vmul.f32 %v3801, %v3862
  %v3874 = vadd.f32 %v3864, %v3865
  %v3875 = vadd.f32 %v3874, %v3866
  %v3876 = vadd.f32 %v3875, %v3867
  %v3877 = vadd.f32 %v3876, %v3868
  %v3878 = vadd.f32 %v3877, %v3869
  %v3879 = vadd.f32 %v3878, %v3870
  %v3880 = vadd.f32 %v3879, %v3871
  %v3881 = vadd.f32 %v3880, %v3872
  %v3882 = vadd.f32 %v3881, %v3873
  %v3883 = vrot.slane %v3882, 4
  %v3884 = vadd.f32 %v3882, %v3883
  %v3885 = vrot.slane %v3884, 2
  %v3886 = vadd.f32 %v3884, %v3885
  %v3887 = vrot.slane %v3886, 1
  %v3888 = vadd.f32 %v3886, %v3887
  %v3889 = vmul.f32 %v3888, 0.055555556
  %v3890 = vsub.f32 %v3792, %v3889
  %v3891 = vsub.f32 %v3793, %v3889
  %v3892 = vsub.f32 %v3794, %v3889
  %v3893 = vsub.f32 %v3795, %v3889
  %v3894 = vsub.f32 %v3796, %v3889
  %v3895 = vsub.f32 %v3797, %v3889
  %v3896 = vsub.f32 %v3798, %v3889
  %v3897 = vsub.f32 %v3799, %v3889
  %v3898 = vsub.f32 %v3800, %v3889
  %v3899 = vsub.f32 %v3801, %v3889
  %v3900 = vmul.f32 %v3890, %v3817
  %v3901 = vmul.f32 %v3891, %v3822
  %v3902 = vmul.f32 %v3892, %v3827
  %v3903 = vmul.f32 %v3893, %v3832
  %v3904 = vmul.f32 %v3894, %v3837
  %v3905 = vmul.f32 %v3895, %v3842
  %v3906 = vmul.f32 %v3896, %v3847
  %v3907 = vmul.f32 %v3897, %v3852
  %v3908 = vmul.f32 %v3898, %v3857
  %v3909 = vmul.f32 %v3899, %v3862
  %v3910 = vmul.f32 %v3900, %v3900
  %v3911 = vmul.f32 %v3901, %v3901
  %v3912 = vmul.f32 %v3902, %v3902
  %v3913 = vmul.f32 %v3903, %v3903
  %v3914 = vmul.f32 %v3904, %v3904
  %v3915 = vmul.f32 %v3905, %v3905
  %v3916 = vmul.f32 %v3906, %v3906
  %v3917 = vmul.f32 %v3907, %v3907
  %v3918 = vmul.f32 %v3908, %v3908
  %v3919 = vmul.f32 %v3909, %v3909
  %v3920 = vadd.f32 %v3910, %v3911
  %v3921 = vadd.f32 %v3920, %v3912
  %v3922 = vadd.f32 %v3921, %v3913
  %v3923 = vadd.f32 %v3922, %v3914
  %v3924 = vadd.f32 %v3923, %v3915
  %v3925 = vadd.f32 %v3924, %v3916
  %v3926 = vadd.f32 %v3925, %v3917
  %v3927 = vadd.f32 %v3926, %v3918
  %v3928 = vadd.f32 %v3927, %v3919
  %v3929 = vrot.slane %v3928, 4
  %v3930 = vadd.f32 %v3928, %v3929
  %v3931 = vrot.slane %v3930, 2
  %v3932 = vadd.f32 %v3930, %v3931
  %v3933 = vrot.slane %v3932, 1
  %v3934 = vadd.f32 %v3932, %v3933
  %v3935 = vmul.f32 %v3934, 0.055555556
  %v3936 = vadd.f32 %v3935, 1e-05
  %v3937 = vrsqrt.pop %v3936
  %v3938 = vmul.f32 %v3937, %v3936
  %v3939 = vmul.f32 %v3938, %v3937
  %v3940 = vmul.f32 0.5, %v3939
  %v3941 = vsub.f32 1.5, %v3940
  %v3942 = vmul.f32 %v3937, %v3941
  %vm3943 = vweird.f32 %v3936
  %vm3944 = vweird.f32 %v3937
  %vm3945 = vmor %vm3943, %vm3944
  %v3946 = vsel %vm3945, %v3937, %v3942
  %v3947 = vmul.f32 %v3946, %v3802
  %v3948 = vmul.f32 %v3889, %v3947
  %v3949 = vsub.f32 %v3803, %v3948
  %v3950 = vperm.slane %v3947, 0
  %v3951 = vmul.f32 %v3792, %v3950
  %v3952 = vmul.f32 %v3793, %v3950
  %v3953 = vmul.f32 %v3794, %v3950
  %v3954 = vmul.f32 %v3798, %v3950
  %v3955 = vmul.f32 %v3799, %v3950
  %v3956 = vmul.f32 %v3800, %v3950
  %v3957 = vmul.f32 %v3801, %v3950
  %v3959 = vperm.slane %v3949, 0
  %v3961 = vadd.f32 %v3951, %v3959
  %v3962 = vadd.f32 %v3952, %v3959
  %v3963 = vadd.f32 %v3953, %v3959
  %v3964 = vadd.f32 %v3954, %v3959
  %v3965 = vadd.f32 %v3955, %v3959
  %v3966 = vadd.f32 %v3956, %v3959
  %v3967 = vadd.f32 %v3957, %v3959
  %v3968 = vmax.f32 %v3961, 0.0
  %v3969 = vmax.f32 %v3962, 0.0
  %v3970 = vmax.f32 %v3963, 0.0
  %v3971 = vmax.f32 %v3964, 0.0
  %v3972 = vmax.f32 %v3965, 0.0
  %v3973 = vmax.f32 %v3966, 0.0
  %v3974 = vmax.f32 %v3967, 0.0
  %3975 = vst [vmem:[#allocation3] sm:$0xff] 0.0
  %3976 = vst [vmem:[#allocation3 + $0x8] sm:$0xff] 0.0
  %3977 = vst [vmem:[#allocation3 + $0x10] sm:$0xff] 0.0
  %3978 = vst [vmem:[#allocation3 + $0x18] sm:$0xff] 0.0
  %3979 = vst [vmem:[#allocation3 + $0x20] sm:$0xff] 0.0
  %3980 = vst [vmem:[#allocation3 + $0x28] sm:$0xff] 0.0
  %3981 = vst [vmem:[#allocation3 + $0x30] sm:$0xff] 0.0
  %3982 = vst [vmem:[#allocation3 + $0x38] sm:$0xff] 0.0
  %3983 = vst [vmem:[#allocation3 + $0x40] sm:$0xff] 0.0
  %3984 = vst [vmem:[#allocation3 + $0x6] sm:$0x7] %v3968
  %3985 = vst [vmem:[#allocation3 + $0x9] sm:$0x1c] %v3969
  %3986 = vst [vmem:[#allocation3 + $0xc] sm:$0x70] %v3970
  %3987 = vst [vmem:[#allocation3 + $0x1d] sm:$0x1c] %v3971
  %3988 = vst [vmem:[#allocation3 + $0x20] sm:$0x70] %v3972
  %3989 = vst [vmem:[#allocation3 + $0x23] sm:$0xc0] %v3973
  %3990 = vst [vmem:[#allocation3 + $0x2b] sm:$0x1] %v3974
  %v3991 = vld [vmem:[#allocation3] sm:$0xff]
  %v3992 = vld [vmem:[#allocation3 + $0x8] sm:$0xff]
  %v3993 = vld [vmem:[#allocation3 + $0x10] sm:$0xff]
  %v3994 = vld [vmem:[#allocation3 + $0x18] sm:$0xff]
  %v3995 = vld [vmem:[#allocation3 + $0x20] sm:$0xff]
  %v3996 = vld [vmem:[#allocation3 + $0x28] sm:$0xff]
  %v3997 = vld [vmem:[#allocation3 + $0x30] sm:$0xff]
  %v3998 = vpack.c.bf16 %v3992, %v3991
  %v3999 = vpack.c.bf16 %v3994, %v3993
  %v4000 = vpack.c.bf16 %v3996, %v3995
  %v4001 = vpack.c.bf16 %v3997, %v3997
  %v4002 = vld [vmem:[%s7] sm:$0xf]
  %v4003 = vld [vmem:[%s7 + $0x4] sm:$0xf]
  %v4004 = vld [vmem:[%s7 + $0x8] sm:$0xf]
  %v4005 = vld [vmem:[%s7 + $0xc] sm:$0xf]
  %v4006 = vld [vmem:[%s7 + $0x10] sm:$0xf]
  %v4007 = vld [vmem:[%s7 + $0x14] sm:$0xf]
  %v4008 = vld [vmem:[%s7 + $0x18] sm:$0xf]
  %v4009 = vld [vmem:[%s7 + $0x1c] sm:$0xf]
  %v4010 = vld [vmem:[%s7 + $0x20] sm:$0xf]
  %v4011 = vld [vmem:[%s7 + $0x24] sm:$0xf]
  %v4012 = vld [vmem:[%s7 + $0x28] sm:$0xf]
  %v4013 = vld [vmem:[%s7 + $0x2c] sm:$0xf]
  %v4014 = vld [vmem:[%s7 + $0x30] sm:$0xf]
  %v4015 = vld [vmem:[%s7 + $0x34] sm:$0xf]
  %v4016 = vld [vmem:[%s7 + $0x38] sm:$0xf]
  %v4017 = vld [vmem:[%s7 + $0x3c] sm:$0xf]
  %v4018 = vld [vmem:[#allocation3 + $0x1] sm:$0xff]
  %v4019 = vld [vmem:[#allocation3 + $0x9] sm:$0xff]
  %v4020 = vld [vmem:[#allocation3 + $0x11] sm:$0xff]
  %v4021 = vld [vmem:[#allocation3 + $0x19] sm:$0xff]
  %v4022 = vld [vmem:[#allocation3 + $0x21] sm:$0xff]
  %v4023 = vld [vmem:[#allocation3 + $0x29] sm:$0xff]
  %v4024 = vld [vmem:[#allocation3 + $0x31] sm:$0xff]
  %v4025 = vpack.c.bf16 %v4019, %v4018
  %v4026 = vpack.c.bf16 %v4021, %v4020
  %v4027 = vpack.c.bf16 %v4023, %v4022
  %v4028 = vpack.c.bf16 %v4024, %v4024
  %s4029 = scalar_lea.vmem %s7, 64
  %v4030 = vld [vmem:[%s4029] sm:$0xf]
  %v4031 = vld [vmem:[%s4029 + $0x4] sm:$0xf]
  %v4032 = vld [vmem:[%s4029 + $0x8] sm:$0xf]
  %v4033 = vld [vmem:[%s4029 + $0xc] sm:$0xf]
  %v4034 = vld [vmem:[%s4029 + $0x10] sm:$0xf]
  %v4035 = vld [vmem:[%s4029 + $0x14] sm:$0xf]
  %v4036 = vld [vmem:[%s4029 + $0x18] sm:$0xf]
  %v4037 = vld [vmem:[%s4029 + $0x1c] sm:$0xf]
  %v4038 = vld [vmem:[%s4029 + $0x20] sm:$0xf]
  %v4039 = vld [vmem:[%s4029 + $0x24] sm:$0xf]
  %v4040 = vld [vmem:[%s4029 + $0x28] sm:$0xf]
  %v4041 = vld [vmem:[%s4029 + $0x2c] sm:$0xf]
  %v4042 = vld [vmem:[%s4029 + $0x30] sm:$0xf]
  %v4043 = vld [vmem:[%s4029 + $0x34] sm:$0xf]
  %v4044 = vld [vmem:[%s4029 + $0x38] sm:$0xf]
  %v4045 = vld [vmem:[%s4029 + $0x3c] sm:$0xf]
  %v4062 = vunpack.c.l.b16 %v4030
  %v4063 = vunpack.c.l.b16 %v4031
  %v4064 = vunpack.c.l.b16 %v4032
  %v4065 = vunpack.c.l.b16 %v4033
  %v4066 = vunpack.c.l.b16 %v4034
  %v4067 = vunpack.c.l.b16 %v4035
  %v4068 = vunpack.c.l.b16 %v4036
  %v4069 = vunpack.c.l.b16 %v4037
  %v4070 = vunpack.c.l.b16 %v4038
  %v4071 = vunpack.c.l.b16 %v4039
  %v4072 = vunpack.c.l.b16 %v4040
  %v4073 = vunpack.c.l.b16 %v4041
  %v4074 = vunpack.c.l.b16 %v4042
  %v4075 = vunpack.c.l.b16 %v4043
  %v4076 = vunpack.c.l.b16 %v4044
  %v4077 = vunpack.c.l.b16 %v4045
  %v4078 = vpack.c.b16 %v4063, %v4062
  %v4079 = vpack.c.b16 %v4065, %v4064
  %v4080 = vpack.c.b16 %v4067, %v4066
  %v4081 = vpack.c.b16 %v4069, %v4068
  %v4082 = vpack.c.b16 %v4071, %v4070
  %v4083 = vpack.c.b16 %v4073, %v4072
  %v4084 = vpack.c.b16 %v4075, %v4074
  %v4085 = vpack.c.b16 %v4077, %v4076
  %4094 = vmatpush.bf16.msra.mxu0 %v4085
  %4095 = vmatpush.bf16.msra.mxu0 %v4084
  %4096 = vmatpush.bf16.msra.mxu0 %v4083
  %4097 = vmatpush.bf16.msra.mxu0 %v4082
  %4098 = vmatpush.bf16.msra.mxu0 %v4081
  %4099 = vmatpush.bf16.msra.mxu0 %v4080
  %4100 = vmatpush.bf16.msra.mxu0 %v4079
  %4101 = vmatpush.bf16.msra.mxu0 %v4078
  %4102 = vmatmul.bf16.gmra.mxu0 %v4025
  %v4103 = vpop.f32.mrf.mxu0
  %v4104 = vadd.f32 0.0, %v4103
  %v4105 = vpop.f32.mrf.mxu0
  %v4106 = vadd.f32 0.0, %v4105
  %4107 = vmatmul.bf16.gmra.mxu0 %v4026
  %v4108 = vpop.f32.mrf.mxu0
  %v4109 = vadd.f32 0.0, %v4108
  %v4110 = vpop.f32.mrf.mxu0
  %v4111 = vadd.f32 0.0, %v4110
  %4112 = vmatmul.bf16.gmra.mxu0 %v4027
  %v4113 = vpop.f32.mrf.mxu0
  %v4114 = vadd.f32 0.0, %v4113
  %v4115 = vpop.f32.mrf.mxu0
  %v4116 = vadd.f32 0.0, %v4115
  %4117 = vmatmul.bf16.gmra.mxu0 %v4028
  %v4118 = vpop.f32.mrf.mxu0
  %v4119 = vadd.f32 0.0, %v4118
  %v4120 = vpop.f32.mrf.mxu0
  %4121 = vdwg.mxu0
  %v4138 = vunpack.c.l.b16 %v4002
  %v4139 = vunpack.c.l.b16 %v4003
  %v4140 = vunpack.c.l.b16 %v4004
  %v4141 = vunpack.c.l.b16 %v4005
  %v4142 = vunpack.c.l.b16 %v4006
  %v4143 = vunpack.c.l.b16 %v4007
  %v4144 = vunpack.c.l.b16 %v4008
  %v4145 = vunpack.c.l.b16 %v4009
  %v4146 = vunpack.c.l.b16 %v4010
  %v4147 = vunpack.c.l.b16 %v4011
  %v4148 = vunpack.c.l.b16 %v4012
  %v4149 = vunpack.c.l.b16 %v4013
  %v4150 = vunpack.c.l.b16 %v4014
  %v4151 = vunpack.c.l.b16 %v4015
  %v4152 = vunpack.c.l.b16 %v4016
  %v4153 = vunpack.c.l.b16 %v4017
  %v4154 = vpack.c.b16 %v4139, %v4138
  %v4155 = vpack.c.b16 %v4141, %v4140
  %v4156 = vpack.c.b16 %v4143, %v4142
  %v4157 = vpack.c.b16 %v4145, %v4144
  %v4158 = vpack.c.b16 %v4147, %v4146
  %v4159 = vpack.c.b16 %v4149, %v4148
  %v4160 = vpack.c.b16 %v4151, %v4150
  %v4161 = vpack.c.b16 %v4153, %v4152
  %4170 = vmatpush.bf16.msra.mxu0 %v4161
  %4171 = vmatpush.bf16.msra.mxu0 %v4160
  %4172 = vmatpush.bf16.msra.mxu0 %v4159
  %4173 = vmatpush.bf16.msra.mxu0 %v4158
  %4174 = vmatpush.bf16.msra.mxu0 %v4157
  %4175 = vmatpush.bf16.msra.mxu0 %v4156
  %4176 = vmatpush.bf16.msra.mxu0 %v4155
  %4177 = vmatpush.bf16.msra.mxu0 %v4154
  %4178 = vmatmul.bf16.gmra.mxu0 %v3998
  %v4179 = vpop.f32.mrf.mxu0
  %v4180 = vadd.f32 %v4104, %v4179
  %v4181 = vpop.f32.mrf.mxu0
  %v4182 = vadd.f32 %v4106, %v4181
  %4183 = vmatmul.bf16.gmra.mxu0 %v3999
  %v4184 = vpop.f32.mrf.mxu0
  %v4185 = vadd.f32 %v4109, %v4184
  %v4186 = vpop.f32.mrf.mxu0
  %v4187 = vadd.f32 %v4111, %v4186
  %4188 = vmatmul.bf16.gmra.mxu0 %v4000
  %v4189 = vpop.f32.mrf.mxu0
  %v4190 = vadd.f32 %v4114, %v4189
  %v4191 = vpop.f32.mrf.mxu0
  %v4192 = vadd.f32 %v4116, %v4191
  %4193 = vmatmul.bf16.gmra.mxu0 %v4001
  %v4194 = vpop.f32.mrf.mxu0
  %v4195 = vadd.f32 %v4119, %v4194
  %v4196 = vpop.f32.mrf.mxu0
  %4197 = vdwg.mxu0
  %v4198 = vld [vmem:[#allocation3 + $0x2] sm:$0xff]
  %v4199 = vld [vmem:[#allocation3 + $0xa] sm:$0xff]
  %v4200 = vld [vmem:[#allocation3 + $0x12] sm:$0xff]
  %v4201 = vld [vmem:[#allocation3 + $0x1a] sm:$0xff]
  %v4202 = vld [vmem:[#allocation3 + $0x22] sm:$0xff]
  %v4203 = vld [vmem:[#allocation3 + $0x2a] sm:$0xff]
  %v4204 = vld [vmem:[#allocation3 + $0x32] sm:$0xff]
  %v4205 = vpack.c.bf16 %v4199, %v4198
  %v4206 = vpack.c.bf16 %v4201, %v4200
  %v4207 = vpack.c.bf16 %v4203, %v4202
  %v4208 = vpack.c.bf16 %v4204, %v4204
  %s4209 = scalar_lea.vmem %s7, 128
  %v4210 = vld [vmem:[%s4209] sm:$0xf]
  %v4211 = vld [vmem:[%s4209 + $0x4] sm:$0xf]
  %v4212 = vld [vmem:[%s4209 + $0x8] sm:$0xf]
  %v4213 = vld [vmem:[%s4209 + $0xc] sm:$0xf]
  %v4214 = vld [vmem:[%s4209 + $0x10] sm:$0xf]
  %v4215 = vld [vmem:[%s4209 + $0x14] sm:$0xf]
  %v4216 = vld [vmem:[%s4209 + $0x18] sm:$0xf]
  %v4217 = vld [vmem:[%s4209 + $0x1c] sm:$0xf]
  %v4218 = vld [vmem:[%s4209 + $0x20] sm:$0xf]
  %v4219 = vld [vmem:[%s4209 + $0x24] sm:$0xf]
  %v4220 = vld [vmem:[%s4209 + $0x28] sm:$0xf]
  %v4221 = vld [vmem:[%s4209 + $0x2c] sm:$0xf]
  %v4222 = vld [vmem:[%s4209 + $0x30] sm:$0xf]
  %v4223 = vld [vmem:[%s4209 + $0x34] sm:$0xf]
  %v4224 = vld [vmem:[%s4209 + $0x38] sm:$0xf]
  %v4225 = vld [vmem:[%s4209 + $0x3c] sm:$0xf]
  %v4242 = vunpack.c.l.b16 %v4210
  %v4243 = vunpack.c.l.b16 %v4211
  %v4244 = vunpack.c.l.b16 %v4212
  %v4245 = vunpack.c.l.b16 %v4213
  %v4246 = vunpack.c.l.b16 %v4214
  %v4247 = vunpack.c.l.b16 %v4215
  %v4248 = vunpack.c.l.b16 %v4216
  %v4249 = vunpack.c.l.b16 %v4217
  %v4250 = vunpack.c.l.b16 %v4218
  %v4251 = vunpack.c.l.b16 %v4219
  %v4252 = vunpack.c.l.b16 %v4220
  %v4253 = vunpack.c.l.b16 %v4221
  %v4254 = vunpack.c.l.b16 %v4222
  %v4255 = vunpack.c.l.b16 %v4223
  %v4256 = vunpack.c.l.b16 %v4224
  %v4257 = vunpack.c.l.b16 %v4225
  %v4258 = vpack.c.b16 %v4243, %v4242
  %v4259 = vpack.c.b16 %v4245, %v4244
  %v4260 = vpack.c.b16 %v4247, %v4246
  %v4261 = vpack.c.b16 %v4249, %v4248
  %v4262 = vpack.c.b16 %v4251, %v4250
  %v4263 = vpack.c.b16 %v4253, %v4252
  %v4264 = vpack.c.b16 %v4255, %v4254
  %v4265 = vpack.c.b16 %v4257, %v4256
  %4274 = vmatpush.bf16.msra.mxu0 %v4265
  %4275 = vmatpush.bf16.msra.mxu0 %v4264
  %4276 = vmatpush.bf16.msra.mxu0 %v4263
  %4277 = vmatpush.bf16.msra.mxu0 %v4262
  %4278 = vmatpush.bf16.msra.mxu0 %v4261
  %4279 = vmatpush.bf16.msra.mxu0 %v4260
  %4280 = vmatpush.bf16.msra.mxu0 %v4259
  %4281 = vmatpush.bf16.msra.mxu0 %v4258
  %4282 = vmatmul.bf16.gmra.mxu0 %v4205
  %v4283 = vpop.f32.mrf.mxu0
  %v4284 = vadd.f32 0.0, %v4283
  %v4285 = vpop.f32.mrf.mxu0
  %v4286 = vadd.f32 0.0, %v4285
  %4287 = vmatmul.bf16.gmra.mxu0 %v4206
  %v4288 = vpop.f32.mrf.mxu0
  %v4289 = vadd.f32 0.0, %v4288
  %v4290 = vpop.f32.mrf.mxu0
  %v4291 = vadd.f32 0.0, %v4290
  %4292 = vmatmul.bf16.gmra.mxu0 %v4207
  %v4293 = vpop.f32.mrf.mxu0
  %v4294 = vadd.f32 0.0, %v4293
  %v4295 = vpop.f32.mrf.mxu0
  %v4296 = vadd.f32 0.0, %v4295
  %4297 = vmatmul.bf16.gmra.mxu0 %v4208
  %v4298 = vpop.f32.mrf.mxu0
  %v4299 = vadd.f32 0.0, %v4298
  %v4300 = vpop.f32.mrf.mxu0
  %4301 = vdwg.mxu0
  %v4302 = vadd.f32 %v4180, %v4284
  %v4303 = vadd.f32 %v4182, %v4286
  %v4304 = vadd.f32 %v4185, %v4289
  %v4305 = vadd.f32 %v4187, %v4291
  %v4306 = vadd.f32 %v4190, %v4294
  %v4307 = vadd.f32 %v4192, %v4296
  %v4308 = vadd.f32 %v4195, %v4299
  %v4309 = vld [vmem:[#allocation3 + $0x5] sm:$0xff]
  %v4310 = vld [vmem:[#allocation3 + $0xd] sm:$0xff]
  %v4311 = vld [vmem:[#allocation3 + $0x15] sm:$0xff]
  %v4312 = vld [vmem:[#allocation3 + $0x1d] sm:$0xff]
  %v4313 = vld [vmem:[#allocation3 + $0x25] sm:$0xff]
  %v4314 = vld [vmem:[#allocation3 + $0x2d] sm:$0xff]
  %v4315 = vld [vmem:[#allocation3 + $0x35] sm:$0xff]
  %v4316 = vpack.c.bf16 %v4310, %v4309
  %v4317 = vpack.c.bf16 %v4312, %v4311
  %v4318 = vpack.c.bf16 %v4314, %v4313
  %v4319 = vpack.c.bf16 %v4315, %v4315
  %s4320 = scalar_lea.vmem %s7, 192
  %v4321 = vld [vmem:[%s4320] sm:$0xf]
  %v4322 = vld [vmem:[%s4320 + $0x4] sm:$0xf]
  %v4323 = vld [vmem:[%s4320 + $0x8] sm:$0xf]
  %v4324 = vld [vmem:[%s4320 + $0xc] sm:$0xf]
  %v4325 = vld [vmem:[%s4320 + $0x10] sm:$0xf]
  %v4326 = vld [vmem:[%s4320 + $0x14] sm:$0xf]
  %v4327 = vld [vmem:[%s4320 + $0x18] sm:$0xf]
  %v4328 = vld [vmem:[%s4320 + $0x1c] sm:$0xf]
  %v4329 = vld [vmem:[%s4320 + $0x20] sm:$0xf]
  %v4330 = vld [vmem:[%s4320 + $0x24] sm:$0xf]
  %v4331 = vld [vmem:[%s4320 + $0x28] sm:$0xf]
  %v4332 = vld [vmem:[%s4320 + $0x2c] sm:$0xf]
  %v4333 = vld [vmem:[%s4320 + $0x30] sm:$0xf]
  %v4334 = vld [vmem:[%s4320 + $0x34] sm:$0xf]
  %v4335 = vld [vmem:[%s4320 + $0x38] sm:$0xf]
  %v4336 = vld [vmem:[%s4320 + $0x3c] sm:$0xf]
  %v4353 = vunpack.c.l.b16 %v4321
  %v4354 = vunpack.c.l.b16 %v4322
  %v4355 = vunpack.c.l.b16 %v4323
  %v4356 = vunpack.c.l.b16 %v4324
  %v4357 = vunpack.c.l.b16 %v4325
  %v4358 = vunpack.c.l.b16 %v4326
  %v4359 = vunpack.c.l.b16 %v4327
  %v4360 = vunpack.c.l.b16 %v4328
  %v4361 = vunpack.c.l.b16 %v4329
  %v4362 = vunpack.c.l.b16 %v4330
  %v4363 = vunpack.c.l.b16 %v4331
  %v4364 = vunpack.c.l.b16 %v4332
  %v4365 = vunpack.c.l.b16 %v4333
  %v4366 = vunpack.c.l.b16 %v4334
  %v4367 = vunpack.c.l.b16 %v4335
  %v4368 = vunpack.c.l.b16 %v4336
  %v4369 = vpack.c.b16 %v4354, %v4353
  %v4370 = vpack.c.b16 %v4356, %v4355
  %v4371 = vpack.c.b16 %v4358, %v4357
  %v4372 = vpack.c.b16 %v4360, %v4359
  %v4373 = vpack.c.b16 %v4362, %v4361
  %v4374 = vpack.c.b16 %v4364, %v4363
  %v4375 = vpack.c.b16 %v4366, %v4365
  %v4376 = vpack.c.b16 %v4368, %v4367
  %4385 = vmatpush.bf16.msra.mxu0 %v4376
  %4386 = vmatpush.bf16.msra.mxu0 %v4375
  %4387 = vmatpush.bf16.msra.mxu0 %v4374
  %4388 = vmatpush.bf16.msra.mxu0 %v4373
  %4389 = vmatpush.bf16.msra.mxu0 %v4372
  %4390 = vmatpush.bf16.msra.mxu0 %v4371
  %4391 = vmatpush.bf16.msra.mxu0 %v4370
  %4392 = vmatpush.bf16.msra.mxu0 %v4369
  %4393 = vmatmul.bf16.gmra.mxu0 %v4316
  %v4394 = vpop.f32.mrf.mxu0
  %v4395 = vadd.f32 0.0, %v4394
  %v4396 = vpop.f32.mrf.mxu0
  %v4397 = vadd.f32 0.0, %v4396
  %4398 = vmatmul.bf16.gmra.mxu0 %v4317
  %v4399 = vpop.f32.mrf.mxu0
  %v4400 = vadd.f32 0.0, %v4399
  %v4401 = vpop.f32.mrf.mxu0
  %v4402 = vadd.f32 0.0, %v4401
  %4403 = vmatmul.bf16.gmra.mxu0 %v4318
  %v4404 = vpop.f32.mrf.mxu0
  %v4405 = vadd.f32 0.0, %v4404
  %v4406 = vpop.f32.mrf.mxu0
  %v4407 = vadd.f32 0.0, %v4406
  %4408 = vmatmul.bf16.gmra.mxu0 %v4319
  %v4409 = vpop.f32.mrf.mxu0
  %v4410 = vadd.f32 0.0, %v4409
  %v4411 = vpop.f32.mrf.mxu0
  %4412 = vdwg.mxu0
  %v4413 = vadd.f32 %v4302, %v4395
  %v4414 = vadd.f32 %v4303, %v4397
  %v4415 = vadd.f32 %v4304, %v4400
  %v4416 = vadd.f32 %v4305, %v4402
  %v4417 = vadd.f32 %v4306, %v4405
  %v4418 = vadd.f32 %v4307, %v4407
  %v4419 = vadd.f32 %v4308, %v4410
  %v4420 = vld [vmem:[#allocation3 + $0x6] sm:$0xff]
  %v4421 = vld [vmem:[#allocation3 + $0xe] sm:$0xff]
  %v4422 = vld [vmem:[#allocation3 + $0x16] sm:$0xff]
  %v4423 = vld [vmem:[#allocation3 + $0x1e] sm:$0xff]
  %v4424 = vld [vmem:[#allocation3 + $0x26] sm:$0xff]
  %v4425 = vld [vmem:[#allocation3 + $0x2e] sm:$0xff]
  %v4426 = vld [vmem:[#allocation3 + $0x36] sm:$0xff]
  %v4427 = vpack.c.bf16 %v4421, %v4420
  %v4428 = vpack.c.bf16 %v4423, %v4422
  %v4429 = vpack.c.bf16 %v4425, %v4424
  %v4430 = vpack.c.bf16 %v4426, %v4426
  %s4431 = scalar_lea.vmem %s7, 256
  %v4432 = vld [vmem:[%s4431] sm:$0xf]
  %v4433 = vld [vmem:[%s4431 + $0x4] sm:$0xf]
  %v4434 = vld [vmem:[%s4431 + $0x8] sm:$0xf]
  %v4435 = vld [vmem:[%s4431 + $0xc] sm:$0xf]
  %v4436 = vld [vmem:[%s4431 + $0x10] sm:$0xf]
  %v4437 = vld [vmem:[%s4431 + $0x14] sm:$0xf]
  %v4438 = vld [vmem:[%s4431 + $0x18] sm:$0xf]
  %v4439 = vld [vmem:[%s4431 + $0x1c] sm:$0xf]
  %v4440 = vld [vmem:[%s4431 + $0x20] sm:$0xf]
  %v4441 = vld [vmem:[%s4431 + $0x24] sm:$0xf]
  %v4442 = vld [vmem:[%s4431 + $0x28] sm:$0xf]
  %v4443 = vld [vmem:[%s4431 + $0x2c] sm:$0xf]
  %v4444 = vld [vmem:[%s4431 + $0x30] sm:$0xf]
  %v4445 = vld [vmem:[%s4431 + $0x34] sm:$0xf]
  %v4446 = vld [vmem:[%s4431 + $0x38] sm:$0xf]
  %v4447 = vld [vmem:[%s4431 + $0x3c] sm:$0xf]
  %v4464 = vunpack.c.l.b16 %v4432
  %v4465 = vunpack.c.l.b16 %v4433
  %v4466 = vunpack.c.l.b16 %v4434
  %v4467 = vunpack.c.l.b16 %v4435
  %v4468 = vunpack.c.l.b16 %v4436
  %v4469 = vunpack.c.l.b16 %v4437
  %v4470 = vunpack.c.l.b16 %v4438
  %v4471 = vunpack.c.l.b16 %v4439
  %v4472 = vunpack.c.l.b16 %v4440
  %v4473 = vunpack.c.l.b16 %v4441
  %v4474 = vunpack.c.l.b16 %v4442
  %v4475 = vunpack.c.l.b16 %v4443
  %v4476 = vunpack.c.l.b16 %v4444
  %v4477 = vunpack.c.l.b16 %v4445
  %v4478 = vunpack.c.l.b16 %v4446
  %v4479 = vunpack.c.l.b16 %v4447
  %v4480 = vpack.c.b16 %v4465, %v4464
  %v4481 = vpack.c.b16 %v4467, %v4466
  %v4482 = vpack.c.b16 %v4469, %v4468
  %v4483 = vpack.c.b16 %v4471, %v4470
  %v4484 = vpack.c.b16 %v4473, %v4472
  %v4485 = vpack.c.b16 %v4475, %v4474
  %v4486 = vpack.c.b16 %v4477, %v4476
  %v4487 = vpack.c.b16 %v4479, %v4478
  %4496 = vmatpush.bf16.msra.mxu0 %v4487
  %4497 = vmatpush.bf16.msra.mxu0 %v4486
  %4498 = vmatpush.bf16.msra.mxu0 %v4485
  %4499 = vmatpush.bf16.msra.mxu0 %v4484
  %4500 = vmatpush.bf16.msra.mxu0 %v4483
  %4501 = vmatpush.bf16.msra.mxu0 %v4482
  %4502 = vmatpush.bf16.msra.mxu0 %v4481
  %4503 = vmatpush.bf16.msra.mxu0 %v4480
  %4504 = vmatmul.bf16.gmra.mxu0 %v4427
  %v4505 = vpop.f32.mrf.mxu0
  %v4506 = vadd.f32 0.0, %v4505
  %v4507 = vpop.f32.mrf.mxu0
  %v4508 = vadd.f32 0.0, %v4507
  %4509 = vmatmul.bf16.gmra.mxu0 %v4428
  %v4510 = vpop.f32.mrf.mxu0
  %v4511 = vadd.f32 0.0, %v4510
  %v4512 = vpop.f32.mrf.mxu0
  %v4513 = vadd.f32 0.0, %v4512
  %4514 = vmatmul.bf16.gmra.mxu0 %v4429
  %v4515 = vpop.f32.mrf.mxu0
  %v4516 = vadd.f32 0.0, %v4515
  %v4517 = vpop.f32.mrf.mxu0
  %v4518 = vadd.f32 0.0, %v4517
  %4519 = vmatmul.bf16.gmra.mxu0 %v4430
  %v4520 = vpop.f32.mrf.mxu0
  %v4521 = vadd.f32 0.0, %v4520
  %v4522 = vpop.f32.mrf.mxu0
  %4523 = vdwg.mxu0
  %v4524 = vadd.f32 %v4413, %v4506
  %v4525 = vadd.f32 %v4414, %v4508
  %v4526 = vadd.f32 %v4415, %v4511
  %v4527 = vadd.f32 %v4416, %v4513
  %v4528 = vadd.f32 %v4417, %v4516
  %v4529 = vadd.f32 %v4418, %v4518
  %v4530 = vadd.f32 %v4419, %v4521
  %v4531 = vld [vmem:[#allocation3 + $0x7] sm:$0xff]
  %v4532 = vld [vmem:[#allocation3 + $0xf] sm:$0xff]
  %v4533 = vld [vmem:[#allocation3 + $0x17] sm:$0xff]
  %v4534 = vld [vmem:[#allocation3 + $0x1f] sm:$0xff]
  %v4535 = vld [vmem:[#allocation3 + $0x27] sm:$0xff]
  %v4536 = vld [vmem:[#allocation3 + $0x2f] sm:$0xff]
  %v4537 = vld [vmem:[#allocation3 + $0x37] sm:$0xff]
  %v4538 = vpack.c.bf16 %v4532, %v4531
  %v4539 = vpack.c.bf16 %v4534, %v4533
  %v4540 = vpack.c.bf16 %v4536, %v4535
  %v4541 = vpack.c.bf16 %v4537, %v4537
  %s4542 = scalar_lea.vmem %s7, 320
  %v4543 = vld [vmem:[%s4542] sm:$0xf]
  %v4544 = vld [vmem:[%s4542 + $0x4] sm:$0xf]
  %v4545 = vld [vmem:[%s4542 + $0x8] sm:$0xf]
  %v4546 = vld [vmem:[%s4542 + $0xc] sm:$0xf]
  %v4547 = vld [vmem:[%s4542 + $0x10] sm:$0xf]
  %v4548 = vld [vmem:[%s4542 + $0x14] sm:$0xf]
  %v4549 = vld [vmem:[%s4542 + $0x18] sm:$0xf]
  %v4550 = vld [vmem:[%s4542 + $0x1c] sm:$0xf]
  %v4551 = vld [vmem:[%s4542 + $0x20] sm:$0xf]
  %v4552 = vld [vmem:[%s4542 + $0x24] sm:$0xf]
  %v4553 = vld [vmem:[%s4542 + $0x28] sm:$0xf]
  %v4554 = vld [vmem:[%s4542 + $0x2c] sm:$0xf]
  %v4555 = vld [vmem:[%s4542 + $0x30] sm:$0xf]
  %v4556 = vld [vmem:[%s4542 + $0x34] sm:$0xf]
  %v4557 = vld [vmem:[%s4542 + $0x38] sm:$0xf]
  %v4558 = vld [vmem:[%s4542 + $0x3c] sm:$0xf]
  %v4575 = vunpack.c.l.b16 %v4543
  %v4576 = vunpack.c.l.b16 %v4544
  %v4577 = vunpack.c.l.b16 %v4545
  %v4578 = vunpack.c.l.b16 %v4546
  %v4579 = vunpack.c.l.b16 %v4547
  %v4580 = vunpack.c.l.b16 %v4548
  %v4581 = vunpack.c.l.b16 %v4549
  %v4582 = vunpack.c.l.b16 %v4550
  %v4583 = vunpack.c.l.b16 %v4551
  %v4584 = vunpack.c.l.b16 %v4552
  %v4585 = vunpack.c.l.b16 %v4553
  %v4586 = vunpack.c.l.b16 %v4554
  %v4587 = vunpack.c.l.b16 %v4555
  %v4588 = vunpack.c.l.b16 %v4556
  %v4589 = vunpack.c.l.b16 %v4557
  %v4590 = vunpack.c.l.b16 %v4558
  %v4591 = vpack.c.b16 %v4576, %v4575
  %v4592 = vpack.c.b16 %v4578, %v4577
  %v4593 = vpack.c.b16 %v4580, %v4579
  %v4594 = vpack.c.b16 %v4582, %v4581
  %v4595 = vpack.c.b16 %v4584, %v4583
  %v4596 = vpack.c.b16 %v4586, %v4585
  %v4597 = vpack.c.b16 %v4588, %v4587
  %v4598 = vpack.c.b16 %v4590, %v4589
  %4607 = vmatpush.bf16.msra.mxu0 %v4598
  %4608 = vmatpush.bf16.msra.mxu0 %v4597
  %4609 = vmatpush.bf16.msra.mxu0 %v4596
  %4610 = vmatpush.bf16.msra.mxu0 %v4595
  %4611 = vmatpush.bf16.msra.mxu0 %v4594
  %4612 = vmatpush.bf16.msra.mxu0 %v4593
  %4613 = vmatpush.bf16.msra.mxu0 %v4592
  %4614 = vmatpush.bf16.msra.mxu0 %v4591
  %4615 = vmatmul.bf16.gmra.mxu0 %v4538
  %v4616 = vpop.f32.mrf.mxu0
  %v4617 = vadd.f32 0.0, %v4616
  %v4618 = vpop.f32.mrf.mxu0
  %v4619 = vadd.f32 0.0, %v4618
  %4620 = vmatmul.bf16.gmra.mxu0 %v4539
  %v4621 = vpop.f32.mrf.mxu0
  %v4622 = vadd.f32 0.0, %v4621
  %v4623 = vpop.f32.mrf.mxu0
  %v4624 = vadd.f32 0.0, %v4623
  %4625 = vmatmul.bf16.gmra.mxu0 %v4540
  %v4626 = vpop.f32.mrf.mxu0
  %v4627 = vadd.f32 0.0, %v4626
  %v4628 = vpop.f32.mrf.mxu0
  %v4629 = vadd.f32 0.0, %v4628
  %4630 = vmatmul.bf16.gmra.mxu0 %v4541
  %v4631 = vpop.f32.mrf.mxu0
  %v4632 = vadd.f32 0.0, %v4631
  %v4633 = vpop.f32.mrf.mxu0
  %4634 = vdwg.mxu0
  %v4635 = vadd.f32 %v4524, %v4617
  %v4636 = vadd.f32 %v4525, %v4619
  %v4637 = vadd.f32 %v4526, %v4622
  %v4638 = vadd.f32 %v4527, %v4624
  %v4639 = vadd.f32 %v4528, %v4627
  %v4640 = vadd.f32 %v4529, %v4629
  %v4641 = vadd.f32 %v4530, %v4632
  %v4642 = vld [vmem:[#allocation3 + $0xa] sm:$0xff]
  %v4643 = vld [vmem:[#allocation3 + $0x12] sm:$0xff]
  %v4644 = vld [vmem:[#allocation3 + $0x1a] sm:$0xff]
  %v4645 = vld [vmem:[#allocation3 + $0x22] sm:$0xff]
  %v4646 = vld [vmem:[#allocation3 + $0x2a] sm:$0xff]
  %v4647 = vld [vmem:[#allocation3 + $0x32] sm:$0xff]
  %v4648 = vld [vmem:[#allocation3 + $0x3a] sm:$0xff]
  %v4649 = vpack.c.bf16 %v4643, %v4642
  %v4650 = vpack.c.bf16 %v4645, %v4644
  %v4651 = vpack.c.bf16 %v4647, %v4646
  %v4652 = vpack.c.bf16 %v4648, %v4648
  %s4653 = scalar_lea.vmem %s7, 384
  %v4654 = vld [vmem:[%s4653] sm:$0xf]
  %v4655 = vld [vmem:[%s4653 + $0x4] sm:$0xf]
  %v4656 = vld [vmem:[%s4653 + $0x8] sm:$0xf]
  %v4657 = vld [vmem:[%s4653 + $0xc] sm:$0xf]
  %v4658 = vld [vmem:[%s4653 + $0x10] sm:$0xf]
  %v4659 = vld [vmem:[%s4653 + $0x14] sm:$0xf]
  %v4660 = vld [vmem:[%s4653 + $0x18] sm:$0xf]
  %v4661 = vld [vmem:[%s4653 + $0x1c] sm:$0xf]
  %v4662 = vld [vmem:[%s4653 + $0x20] sm:$0xf]
  %v4663 = vld [vmem:[%s4653 + $0x24] sm:$0xf]
  %v4664 = vld [vmem:[%s4653 + $0x28] sm:$0xf]
  %v4665 = vld [vmem:[%s4653 + $0x2c] sm:$0xf]
  %v4666 = vld [vmem:[%s4653 + $0x30] sm:$0xf]
  %v4667 = vld [vmem:[%s4653 + $0x34] sm:$0xf]
  %v4668 = vld [vmem:[%s4653 + $0x38] sm:$0xf]
  %v4669 = vld [vmem:[%s4653 + $0x3c] sm:$0xf]
  %v4686 = vunpack.c.l.b16 %v4654
  %v4687 = vunpack.c.l.b16 %v4655
  %v4688 = vunpack.c.l.b16 %v4656
  %v4689 = vunpack.c.l.b16 %v4657
  %v4690 = vunpack.c.l.b16 %v4658
  %v4691 = vunpack.c.l.b16 %v4659
  %v4692 = vunpack.c.l.b16 %v4660
  %v4693 = vunpack.c.l.b16 %v4661
  %v4694 = vunpack.c.l.b16 %v4662
  %v4695 = vunpack.c.l.b16 %v4663
  %v4696 = vunpack.c.l.b16 %v4664
  %v4697 = vunpack.c.l.b16 %v4665
  %v4698 = vunpack.c.l.b16 %v4666
  %v4699 = vunpack.c.l.b16 %v4667
  %v4700 = vunpack.c.l.b16 %v4668
  %v4701 = vunpack.c.l.b16 %v4669
  %v4702 = vpack.c.b16 %v4687, %v4686
  %v4703 = vpack.c.b16 %v4689, %v4688
  %v4704 = vpack.c.b16 %v4691, %v4690
  %v4705 = vpack.c.b16 %v4693, %v4692
  %v4706 = vpack.c.b16 %v4695, %v4694
  %v4707 = vpack.c.b16 %v4697, %v4696
  %v4708 = vpack.c.b16 %v4699, %v4698
  %v4709 = vpack.c.b16 %v4701, %v4700
  %4718 = vmatpush.bf16.msra.mxu0 %v4709
  %4719 = vmatpush.bf16.msra.mxu0 %v4708
  %4720 = vmatpush.bf16.msra.mxu0 %v4707
  %4721 = vmatpush.bf16.msra.mxu0 %v4706
  %4722 = vmatpush.bf16.msra.mxu0 %v4705
  %4723 = vmatpush.bf16.msra.mxu0 %v4704
  %4724 = vmatpush.bf16.msra.mxu0 %v4703
  %4725 = vmatpush.bf16.msra.mxu0 %v4702
  %4726 = vmatmul.bf16.gmra.mxu0 %v4649
  %v4727 = vpop.f32.mrf.mxu0
  %v4728 = vadd.f32 0.0, %v4727
  %v4729 = vpop.f32.mrf.mxu0
  %v4730 = vadd.f32 0.0, %v4729
  %4731 = vmatmul.bf16.gmra.mxu0 %v4650
  %v4732 = vpop.f32.mrf.mxu0
  %v4733 = vadd.f32 0.0, %v4732
  %v4734 = vpop.f32.mrf.mxu0
  %v4735 = vadd.f32 0.0, %v4734
  %4736 = vmatmul.bf16.gmra.mxu0 %v4651
  %v4737 = vpop.f32.mrf.mxu0
  %v4738 = vadd.f32 0.0, %v4737
  %v4739 = vpop.f32.mrf.mxu0
  %v4740 = vadd.f32 0.0, %v4739
  %4741 = vmatmul.bf16.gmra.mxu0 %v4652
  %v4742 = vpop.f32.mrf.mxu0
  %v4743 = vadd.f32 0.0, %v4742
  %v4744 = vpop.f32.mrf.mxu0
  %4745 = vdwg.mxu0
  %v4746 = vadd.f32 %v4635, %v4728
  %v4747 = vadd.f32 %v4636, %v4730
  %v4748 = vadd.f32 %v4637, %v4733
  %v4749 = vadd.f32 %v4638, %v4735
  %v4750 = vadd.f32 %v4639, %v4738
  %v4751 = vadd.f32 %v4640, %v4740
  %v4752 = vadd.f32 %v4641, %v4743
  %v4753 = vld [vmem:[#allocation3 + $0xb] sm:$0xff]
  %v4754 = vld [vmem:[#allocation3 + $0x13] sm:$0xff]
  %v4755 = vld [vmem:[#allocation3 + $0x1b] sm:$0xff]
  %v4756 = vld [vmem:[#allocation3 + $0x23] sm:$0xff]
  %v4757 = vld [vmem:[#allocation3 + $0x2b] sm:$0xff]
  %v4758 = vld [vmem:[#allocation3 + $0x33] sm:$0xff]
  %v4759 = vld [vmem:[#allocation3 + $0x3b] sm:$0xff]
  %v4760 = vpack.c.bf16 %v4754, %v4753
  %v4761 = vpack.c.bf16 %v4756, %v4755
  %v4762 = vpack.c.bf16 %v4758, %v4757
  %v4763 = vpack.c.bf16 %v4759, %v4759
  %s4764 = scalar_lea.vmem %s7, 448
  %v4765 = vld [vmem:[%s4764] sm:$0xf]
  %v4766 = vld [vmem:[%s4764 + $0x4] sm:$0xf]
  %v4767 = vld [vmem:[%s4764 + $0x8] sm:$0xf]
  %v4768 = vld [vmem:[%s4764 + $0xc] sm:$0xf]
  %v4769 = vld [vmem:[%s4764 + $0x10] sm:$0xf]
  %v4770 = vld [vmem:[%s4764 + $0x14] sm:$0xf]
  %v4771 = vld [vmem:[%s4764 + $0x18] sm:$0xf]
  %v4772 = vld [vmem:[%s4764 + $0x1c] sm:$0xf]
  %v4773 = vld [vmem:[%s4764 + $0x20] sm:$0xf]
  %v4774 = vld [vmem:[%s4764 + $0x24] sm:$0xf]
  %v4775 = vld [vmem:[%s4764 + $0x28] sm:$0xf]
  %v4776 = vld [vmem:[%s4764 + $0x2c] sm:$0xf]
  %v4777 = vld [vmem:[%s4764 + $0x30] sm:$0xf]
  %v4778 = vld [vmem:[%s4764 + $0x34] sm:$0xf]
  %v4779 = vld [vmem:[%s4764 + $0x38] sm:$0xf]
  %v4780 = vld [vmem:[%s4764 + $0x3c] sm:$0xf]
  %v4797 = vunpack.c.l.b16 %v4765
  %v4798 = vunpack.c.l.b16 %v4766
  %v4799 = vunpack.c.l.b16 %v4767
  %v4800 = vunpack.c.l.b16 %v4768
  %v4801 = vunpack.c.l.b16 %v4769
  %v4802 = vunpack.c.l.b16 %v4770
  %v4803 = vunpack.c.l.b16 %v4771
  %v4804 = vunpack.c.l.b16 %v4772
  %v4805 = vunpack.c.l.b16 %v4773
  %v4806 = vunpack.c.l.b16 %v4774
  %v4807 = vunpack.c.l.b16 %v4775
  %v4808 = vunpack.c.l.b16 %v4776
  %v4809 = vunpack.c.l.b16 %v4777
  %v4810 = vunpack.c.l.b16 %v4778
  %v4811 = vunpack.c.l.b16 %v4779
  %v4812 = vunpack.c.l.b16 %v4780
  %v4813 = vpack.c.b16 %v4798, %v4797
  %v4814 = vpack.c.b16 %v4800, %v4799
  %v4815 = vpack.c.b16 %v4802, %v4801
  %v4816 = vpack.c.b16 %v4804, %v4803
  %v4817 = vpack.c.b16 %v4806, %v4805
  %v4818 = vpack.c.b16 %v4808, %v4807
  %v4819 = vpack.c.b16 %v4810, %v4809
  %v4820 = vpack.c.b16 %v4812, %v4811
  %4829 = vmatpush.bf16.msra.mxu0 %v4820
  %4830 = vmatpush.bf16.msra.mxu0 %v4819
  %4831 = vmatpush.bf16.msra.mxu0 %v4818
  %4832 = vmatpush.bf16.msra.mxu0 %v4817
  %4833 = vmatpush.bf16.msra.mxu0 %v4816
  %4834 = vmatpush.bf16.msra.mxu0 %v4815
  %4835 = vmatpush.bf16.msra.mxu0 %v4814
  %4836 = vmatpush.bf16.msra.mxu0 %v4813
  %4837 = vmatmul.bf16.gmra.mxu0 %v4760
  %v4838 = vpop.f32.mrf.mxu0
  %v4839 = vadd.f32 0.0, %v4838
  %v4840 = vpop.f32.mrf.mxu0
  %v4841 = vadd.f32 0.0, %v4840
  %4842 = vmatmul.bf16.gmra.mxu0 %v4761
  %v4843 = vpop.f32.mrf.mxu0
  %v4844 = vadd.f32 0.0, %v4843
  %v4845 = vpop.f32.mrf.mxu0
  %v4846 = vadd.f32 0.0, %v4845
  %4847 = vmatmul.bf16.gmra.mxu0 %v4762
  %v4848 = vpop.f32.mrf.mxu0
  %v4849 = vadd.f32 0.0, %v4848
  %v4850 = vpop.f32.mrf.mxu0
  %v4851 = vadd.f32 0.0, %v4850
  %4852 = vmatmul.bf16.gmra.mxu0 %v4763
  %v4853 = vpop.f32.mrf.mxu0
  %v4854 = vadd.f32 0.0, %v4853
  %v4855 = vpop.f32.mrf.mxu0
  %4856 = vdwg.mxu0
  %v4857 = vadd.f32 %v4746, %v4839
  %v4858 = vadd.f32 %v4747, %v4841
  %v4859 = vadd.f32 %v4748, %v4844
  %v4860 = vadd.f32 %v4749, %v4846
  %v4861 = vadd.f32 %v4750, %v4849
  %v4862 = vadd.f32 %v4751, %v4851
  %v4863 = vadd.f32 %v4752, %v4854
  %v4864 = vld [vmem:[#allocation3 + $0xc] sm:$0xff]
  %v4865 = vld [vmem:[#allocation3 + $0x14] sm:$0xff]
  %v4866 = vld [vmem:[#allocation3 + $0x1c] sm:$0xff]
  %v4867 = vld [vmem:[#allocation3 + $0x24] sm:$0xff]
  %v4868 = vld [vmem:[#allocation3 + $0x2c] sm:$0xff]
  %v4869 = vld [vmem:[#allocation3 + $0x34] sm:$0xff]
  %v4870 = vld [vmem:[#allocation3 + $0x3c] sm:$0xff]
  %v4871 = vpack.c.bf16 %v4865, %v4864
  %v4872 = vpack.c.bf16 %v4867, %v4866
  %v4873 = vpack.c.bf16 %v4869, %v4868
  %v4874 = vpack.c.bf16 %v4870, %v4870
  %s4875 = scalar_lea.vmem %s7, 512
  %v4876 = vld [vmem:[%s4875] sm:$0xf]
  %v4877 = vld [vmem:[%s4875 + $0x4] sm:$0xf]
  %v4878 = vld [vmem:[%s4875 + $0x8] sm:$0xf]
  %v4879 = vld [vmem:[%s4875 + $0xc] sm:$0xf]
  %v4880 = vld [vmem:[%s4875 + $0x10] sm:$0xf]
  %v4881 = vld [vmem:[%s4875 + $0x14] sm:$0xf]
  %v4882 = vld [vmem:[%s4875 + $0x18] sm:$0xf]
  %v4883 = vld [vmem:[%s4875 + $0x1c] sm:$0xf]
  %v4884 = vld [vmem:[%s4875 + $0x20] sm:$0xf]
  %v4885 = vld [vmem:[%s4875 + $0x24] sm:$0xf]
  %v4886 = vld [vmem:[%s4875 + $0x28] sm:$0xf]
  %v4887 = vld [vmem:[%s4875 + $0x2c] sm:$0xf]
  %v4888 = vld [vmem:[%s4875 + $0x30] sm:$0xf]
  %v4889 = vld [vmem:[%s4875 + $0x34] sm:$0xf]
  %v4890 = vld [vmem:[%s4875 + $0x38] sm:$0xf]
  %v4891 = vld [vmem:[%s4875 + $0x3c] sm:$0xf]
  %v4908 = vunpack.c.l.b16 %v4876
  %v4909 = vunpack.c.l.b16 %v4877
  %v4910 = vunpack.c.l.b16 %v4878
  %v4911 = vunpack.c.l.b16 %v4879
  %v4912 = vunpack.c.l.b16 %v4880
  %v4913 = vunpack.c.l.b16 %v4881
  %v4914 = vunpack.c.l.b16 %v4882
  %v4915 = vunpack.c.l.b16 %v4883
  %v4916 = vunpack.c.l.b16 %v4884
  %v4917 = vunpack.c.l.b16 %v4885
  %v4918 = vunpack.c.l.b16 %v4886
  %v4919 = vunpack.c.l.b16 %v4887
  %v4920 = vunpack.c.l.b16 %v4888
  %v4921 = vunpack.c.l.b16 %v4889
  %v4922 = vunpack.c.l.b16 %v4890
  %v4923 = vunpack.c.l.b16 %v4891
  %v4924 = vpack.c.b16 %v4909, %v4908
  %v4925 = vpack.c.b16 %v4911, %v4910
  %v4926 = vpack.c.b16 %v4913, %v4912
  %v4927 = vpack.c.b16 %v4915, %v4914
  %v4928 = vpack.c.b16 %v4917, %v4916
  %v4929 = vpack.c.b16 %v4919, %v4918
  %v4930 = vpack.c.b16 %v4921, %v4920
  %v4931 = vpack.c.b16 %v4923, %v4922
  %4940 = vmatpush.bf16.msra.mxu0 %v4931
  %4941 = vmatpush.bf16.msra.mxu0 %v4930
  %4942 = vmatpush.bf16.msra.mxu0 %v4929
  %4943 = vmatpush.bf16.msra.mxu0 %v4928
  %4944 = vmatpush.bf16.msra.mxu0 %v4927
  %4945 = vmatpush.bf16.msra.mxu0 %v4926
  %4946 = vmatpush.bf16.msra.mxu0 %v4925
  %4947 = vmatpush.bf16.msra.mxu0 %v4924
  %4948 = vmatmul.bf16.gmra.mxu0 %v4871
  %v4949 = vpop.f32.mrf.mxu0
  %v4950 = vadd.f32 0.0, %v4949
  %v4951 = vpop.f32.mrf.mxu0
  %v4952 = vadd.f32 0.0, %v4951
  %4953 = vmatmul.bf16.gmra.mxu0 %v4872
  %v4954 = vpop.f32.mrf.mxu0
  %v4955 = vadd.f32 0.0, %v4954
  %v4956 = vpop.f32.mrf.mxu0
  %v4957 = vadd.f32 0.0, %v4956
  %4958 = vmatmul.bf16.gmra.mxu0 %v4873
  %v4959 = vpop.f32.mrf.mxu0
  %v4960 = vadd.f32 0.0, %v4959
  %v4961 = vpop.f32.mrf.mxu0
  %v4962 = vadd.f32 0.0, %v4961
  %4963 = vmatmul.bf16.gmra.mxu0 %v4874
  %v4964 = vpop.f32.mrf.mxu0
  %v4965 = vadd.f32 0.0, %v4964
  %v4966 = vpop.f32.mrf.mxu0
  %4967 = vdwg.mxu0
  %v4968 = vadd.f32 %v4857, %v4950
  %v4969 = vadd.f32 %v4858, %v4952
  %v4970 = vadd.f32 %v4859, %v4955
  %v4971 = vadd.f32 %v4860, %v4957
  %v4972 = vadd.f32 %v4861, %v4960
  %v4973 = vadd.f32 %v4862, %v4962
  %v4974 = vadd.f32 %v4863, %v4965
  %v4975 = vld [vmem:[%s8] sm:$0x1]
  %v4976 = vld [vmem:[%s9] sm:$0x1]
  %v4977 = vld [vmem:[%s11] sm:$0xff]
  %v4978 = vld [vmem:[%s11 + $0x8] sm:$0xff]
  %v4979 = vld [vmem:[%s11 + $0x10] sm:$0xff]
  %v4980 = vld [vmem:[%s11 + $0x18] sm:$0xff]
  %v4981 = vld [vmem:[%s11 + $0x20] sm:$0xff]
  %v4982 = vld [vmem:[%s11 + $0x28] sm:$0xff]
  %v4983 = vld [vmem:[%s11 + $0x30] sm:$0xff]
  %4985 = vset.pattern.permute.xlu0 0
  %4986 = vperm.xlu0 %4985, %v4977
  %v4987 = vpop.permute.xlu0 %4986
  %4990 = vset.pattern.permute.xlu0 0
  %4991 = vperm.xlu0 %4990, %v4978
  %v4992 = vpop.permute.xlu0 %4991
  %4995 = vset.pattern.permute.xlu0 0
  %4996 = vperm.xlu0 %4995, %v4979
  %v4997 = vpop.permute.xlu0 %4996
  %5000 = vset.pattern.permute.xlu0 0
  %5001 = vperm.xlu0 %5000, %v4980
  %v5002 = vpop.permute.xlu0 %5001
  %5005 = vset.pattern.permute.xlu0 0
  %5006 = vperm.xlu0 %5005, %v4981
  %v5007 = vpop.permute.xlu0 %5006
  %5010 = vset.pattern.permute.xlu0 0
  %5011 = vperm.xlu0 %5010, %v4982
  %v5012 = vpop.permute.xlu0 %5011
  %5015 = vset.pattern.permute.xlu0 0
  %5016 = vperm.xlu0 %5015, %v4983
  %v5017 = vpop.permute.xlu0 %5016
  %v5019 = vmul.f32 %v4968, %v4987
  %v5020 = vmul.f32 %v4969, %v4992
  %v5021 = vmul.f32 %v4970, %v4997
  %v5022 = vmul.f32 %v4971, %v5002
  %v5023 = vmul.f32 %v4972, %v5007
  %v5024 = vmul.f32 %v4973, %v5012
  %v5025 = vmul.f32 %v4974, %v5017
  %v5026 = vadd.f32 %v5019, %v5020
  %v5027 = vadd.f32 %v5026, %v5021
  %v5028 = vadd.f32 %v5027, %v5022
  %v5029 = vadd.f32 %v5028, %v5023
  %v5030 = vadd.f32 %v5029, %v5024
  %v5031 = vadd.f32 %v5030, %v5025
  %v5032 = vrot.slane %v5031, 4
  %v5033 = vadd.f32 %v5031, %v5032
  %v5034 = vrot.slane %v5033, 2
  %v5035 = vadd.f32 %v5033, %v5034
  %v5036 = vrot.slane %v5035, 1
  %v5037 = vadd.f32 %v5035, %v5036
  %v5038 = vmul.f32 %v5037, 0.055555556
  %v5039 = vsub.f32 %v4968, %v5038
  %v5040 = vsub.f32 %v4969, %v5038
  %v5041 = vsub.f32 %v4970, %v5038
  %v5042 = vsub.f32 %v4971, %v5038
  %v5043 = vsub.f32 %v4972, %v5038
  %v5044 = vsub.f32 %v4973, %v5038
  %v5045 = vsub.f32 %v4974, %v5038
  %v5046 = vmul.f32 %v5039, %v4987
  %v5047 = vmul.f32 %v5040, %v4992
  %v5048 = vmul.f32 %v5041, %v4997
  %v5049 = vmul.f32 %v5042, %v5002
  %v5050 = vmul.f32 %v5043, %v5007
  %v5051 = vmul.f32 %v5044, %v5012
  %v5052 = vmul.f32 %v5045, %v5017
  %v5053 = vmul.f32 %v5046, %v5046
  %v5054 = vmul.f32 %v5047, %v5047
  %v5055 = vmul.f32 %v5048, %v5048
  %v5056 = vmul.f32 %v5049, %v5049
  %v5057 = vmul.f32 %v5050, %v5050
  %v5058 = vmul.f32 %v5051, %v5051
  %v5059 = vmul.f32 %v5052, %v5052
  %v5060 = vadd.f32 %v5053, %v5054
  %v5061 = vadd.f32 %v5060, %v5055
  %v5062 = vadd.f32 %v5061, %v5056
  %v5063 = vadd.f32 %v5062, %v5057
  %v5064 = vadd.f32 %v5063, %v5058
  %v5065 = vadd.f32 %v5064, %v5059
  %v5066 = vrot.slane %v5065, 4
  %v5067 = vadd.f32 %v5065, %v5066
  %v5068 = vrot.slane %v5067, 2
  %v5069 = vadd.f32 %v5067, %v5068
  %v5070 = vrot.slane %v5069, 1
  %v5071 = vadd.f32 %v5069, %v5070
  %v5072 = vmul.f32 %v5071, 0.055555556
  %v5073 = vadd.f32 %v5072, 1e-05
  %v5074 = vrsqrt.pop %v5073
  %v5075 = vmul.f32 %v5074, %v5073
  %v5076 = vmul.f32 %v5075, %v5074
  %v5077 = vmul.f32 0.5, %v5076
  %v5078 = vsub.f32 1.5, %v5077
  %v5079 = vmul.f32 %v5074, %v5078
  %vm5080 = vweird.f32 %v5073
  %vm5081 = vweird.f32 %v5074
  %vm5082 = vmor %vm5080, %vm5081
  %v5083 = vsel %vm5082, %v5074, %v5079
  %v5084 = vmul.f32 %v5083, %v4975
  %v5085 = vmul.f32 %v5038, %v5084
  %v5086 = vsub.f32 %v4976, %v5085
  %v5087 = vperm.slane %v5084, 0
  %v5088 = vmul.f32 %v4968, %v5087
  %v5089 = vmul.f32 %v4969, %v5087
  %v5090 = vmul.f32 %v4970, %v5087
  %v5091 = vmul.f32 %v4971, %v5087
  %v5092 = vmul.f32 %v4972, %v5087
  %v5093 = vmul.f32 %v4973, %v5087
  %v5094 = vmul.f32 %v4974, %v5087
  %v5096 = vperm.slane %v5086, 0
  %v5098 = vadd.f32 %v5088, %v5096
  %v5099 = vadd.f32 %v5089, %v5096
  %v5100 = vadd.f32 %v5090, %v5096
  %v5101 = vadd.f32 %v5091, %v5096
  %v5102 = vadd.f32 %v5092, %v5096
  %v5103 = vadd.f32 %v5093, %v5096
  %v5104 = vadd.f32 %v5094, %v5096
  %v5105 = vmax.f32 %v5098, 0.0
  %v5106 = vmax.f32 %v5099, 0.0
  %v5107 = vmax.f32 %v5100, 0.0
  %v5108 = vmax.f32 %v5101, 0.0
  %v5109 = vmax.f32 %v5102, 0.0
  %v5110 = vmax.f32 %v5103, 0.0
  %v5111 = vmax.f32 %v5104, 0.0
  %5112 = vst [vmem:[%s12] sm:$0xff] %v5105
  %5113 = vst [vmem:[%s12 + $0x8] sm:$0xff] %v5106
  %5114 = vst [vmem:[%s12 + $0x10] sm:$0xff] %v5107
  %5115 = vst [vmem:[%s12 + $0x18] sm:$0xff] %v5108
  %5116 = vst [vmem:[%s12 + $0x20] sm:$0xff] %v5109
  %5117 = vst [vmem:[%s12 + $0x28] sm:$0xff] %v5110
  %5118 = vst [vmem:[%s12 + $0x30] sm:$0xff] %v5111
  // Predicated region
  $region50: #{map_encoder_forward.1} parent=0 // pred_check
    _
  $region51: #{map_encoder_forward.1} parent=0 // pred_check_branch
    %5120 = sbr.rel (0) target = $region53
  $region52: #{map_encoder_forward.1} parent=0 // pred_region
    _
  $region53: #{map_encoder_forward.1} parent=0 // pred_fallthru
    _
  // Predicated region
  $region54: #{map_encoder_forward.1} parent=0 // pred_check
    _
  $region55: #{map_encoder_forward.1} parent=0 // pred_check_branch
    %5122 = sbr.rel (0) target = $region57
  $region56: #{map_encoder_forward.1} parent=0 // pred_region
    _
  $region57: #{map_encoder_forward.1} parent=0 // pred_fallthru
    _

</llo_original>
